<compile_context>
chip_gen: v5e
topology: v5e:2x2
jax: 0.10.0
libtpu: 0.0.40
codegen_flags: <defaults>
</compile_context>

<pallas_src>
import functools
from math import sqrt, lcm

import jax
import jax.numpy as jnp
import numpy as np
from jax.experimental import pallas as pl
from jax.experimental.pallas import tpu as pltpu

LANE = 128


def _round_up(v, m):
    return (v + m - 1) // m * m


def _pad2(a, rows, cols):
    return jnp.pad(a, ((0, rows - a.shape[0]), (0, cols - a.shape[1])))


def _vmem_limit_bytes():
    """Generation-aware scoped-VMEM budget with headroom for compiler scratch."""
    cap = 64 * 1024 * 1024  # conservative fallback (v7x per-TC physical VMEM)
    try:
        cap = int(pltpu.get_tpu_info().vmem_capacity_bytes)
    except Exception:
        pass
    # leave ~16 MiB headroom; never request more than ~100 MiB even on 128 MiB chips
    return max(32 * 1024 * 1024, min(cap - 16 * 1024 * 1024, 100 * 1024 * 1024))


def _compiler_params(dim_sem, vmem_limit):
    return pltpu.CompilerParams(dimension_semantics=dim_sem,
                                vmem_limit_bytes=vmem_limit)


# ---------------------------------------------------------------------------
# Fast path: whole 3-layer forward in one kernel (adj resident in VMEM)
# ---------------------------------------------------------------------------
def _fused_forward_kernel(x_ref, adj_ref, w1_ref, w2_ref, w3_ref,
                          b1_ref, b2_ref, b3_ref, o_ref, *, nclass):
    bf = jnp.bfloat16
    adj = adj_ref[...]

    # layer 1
    s = jnp.dot(x_ref[...], w1_ref[...],
                preferred_element_type=jnp.float32).astype(bf)
    h = jnp.maximum(jnp.dot(adj, s, preferred_element_type=jnp.float32)
                    + b1_ref[...], 0.0).astype(bf)
    # layer 2
    s = jnp.dot(h, w2_ref[...], preferred_element_type=jnp.float32).astype(bf)
    h = jnp.maximum(jnp.dot(adj, s, preferred_element_type=jnp.float32)
                    + b2_ref[...], 0.0).astype(bf)
    # layer 3 + log_softmax (mask padded class columns)
    s = jnp.dot(h, w3_ref[...], preferred_element_type=jnp.float32).astype(bf)
    logits = jnp.dot(adj, s, preferred_element_type=jnp.float32) + b3_ref[...]
    col = jax.lax.broadcasted_iota(jnp.int32, logits.shape, 1)
    logits = jnp.where(col < nclass, logits, -jnp.inf)
    m = jnp.max(logits, axis=1, keepdims=True)
    z = logits - m
    lse = jnp.log(jnp.sum(jnp.exp(z), axis=1, keepdims=True))
    o_ref[...] = (z - lse).astype(o_ref.dtype)


def _fused_call(x, adj, w1, w2, w3, b1, b2, b3, *, nclass, vmem_limit):
    n_pad = adj.shape[0]
    f_cls = w3.shape[1]
    kernel = functools.partial(_fused_forward_kernel, nclass=nclass)

    def full_spec(a):
        return pl.BlockSpec(a.shape, lambda i: (0, 0))

    args = (x, adj, w1, w2, w3, b1, b2, b3)
    return pl.pallas_call(
        kernel,
        out_shape=jax.ShapeDtypeStruct((n_pad, f_cls), jnp.float32),
        grid_spec=pltpu.PrefetchScalarGridSpec(
            num_scalar_prefetch=0,
            grid=(1,),
            in_specs=[full_spec(a) for a in args],
            out_specs=pl.BlockSpec((n_pad, f_cls), lambda i: (0, 0)),
        ),
        compiler_params=_compiler_params(("arbitrary",), vmem_limit),
    )(*args)


def _fast_path_fits(n_pad, f_in, f_hid, f_cls, vmem_limit):
    # 2x on inputs/outputs for double buffering; rough allowance for f32 temporaries.
    inputs = 2 * (n_pad * n_pad * 2 + n_pad * f_in * 2
                  + (f_in * f_hid + f_hid * f_hid + f_hid * f_cls) * 2
                  + (2 * f_hid + f_cls) * 4)
    out = 2 * n_pad * f_cls * 4
    inter = 6 * n_pad * max(f_hid, f_cls) * 4
    return inputs + out + inter <= vmem_limit // 2


# ---------------------------------------------------------------------------
# Tiled path, kernel 1: support = x @ W1   (large row tile, lane-dense)
# ---------------------------------------------------------------------------
def _support_kernel(h_ref, w_ref, o_ref):
    o_ref[...] = jnp.dot(h_ref[...], w_ref[...],
                         preferred_element_type=jnp.float32).astype(o_ref.dtype)


def _linear_call(h, w, *, tm, vmem_limit):
    n_pad, f_in = h.shape
    f_out = w.shape[1]
    return pl.pallas_call(
        _support_kernel,
        out_shape=jax.ShapeDtypeStruct((n_pad, f_out), jnp.bfloat16),
        grid_spec=pltpu.PrefetchScalarGridSpec(
            num_scalar_prefetch=0,
            grid=(n_pad // tm,),
            in_specs=[pl.BlockSpec((tm, f_in), lambda i: (i, 0)),
                      pl.BlockSpec((f_in, f_out), lambda i: (0, 0))],  # resident weight
            out_specs=pl.BlockSpec((tm, f_out), lambda i: (i, 0)),
        ),
        compiler_params=_compiler_params(("parallel",), vmem_limit),
    )(h, w)


# ---------------------------------------------------------------------------
# Tiled path, kernel 2: aggregate + activation (+ fused next-layer linear)
#   out = act(adj @ support + b) [@ W_next]
# ---------------------------------------------------------------------------
def _aggregate_kernel(adj_ref, s_ref, b_ref, *rest, activation, valid_cols,
                      fuse_next, support_resident, tk):
    if fuse_next:
        wn_ref, o_ref, acc_ref = rest
    else:
        o_ref, acc_ref = rest
    k = pl.program_id(1)

    @pl.when(k == 0)
    def _():
        acc_ref[...] = jnp.zeros_like(acc_ref)

    if support_resident:
        off = pl.multiple_of(k * tk, tk)
        s_blk = s_ref[pl.ds(off, tk), :]
    else:
        s_blk = s_ref[...]

    acc_ref[...] += jnp.dot(adj_ref[...], s_blk,
                            preferred_element_type=jnp.float32)

    @pl.when(k == pl.num_programs(1) - 1)
    def _():
        h = acc_ref[...] + b_ref[...]                      # bias added once, at finalize
        if activation == "relu":
            h = jnp.maximum(h, 0.0)
        elif activation == "log_softmax":
            # mask padded class columns so they don't contribute to the softmax
            col = jax.lax.broadcasted_iota(jnp.int32, h.shape, 1)
            h = jnp.where(col < valid_cols, h, -jnp.inf)
            m = jnp.max(h, axis=1, keepdims=True)
            z = h - m
            lse = jnp.log(jnp.sum(jnp.exp(z), axis=1, keepdims=True))
            h = z - lse
        if fuse_next:
            # fused next-layer linear: tiny tm x 128 x 128 MXU epilogue, hidden under DMA
            h = jnp.dot(h.astype(jnp.bfloat16), wn_ref[...],
                        preferred_element_type=jnp.float32)
        o_ref[...] = h.astype(o_ref.dtype)


def _aggregate_call(adj, s, b, w_next=None, *, activation, valid_cols,
                    out_dtype, tm, tk, support_resident, vmem_limit):
    n_pad = adj.shape[0]
    f_in = s.shape[1]
    f_out = w_next.shape[1] if w_next is not None else f_in
    kernel = functools.partial(
        _aggregate_kernel, activation=activation, valid_cols=valid_cols,
        fuse_next=w_next is not None, support_resident=support_resident, tk=tk)

    in_specs = [pl.BlockSpec((tm, tk), lambda i, k: (i, k))]            # adj tile
    if support_resident:
        in_specs.append(pl.BlockSpec((n_pad, f_in), lambda i, k: (0, 0)))   # resident support
    else:
        in_specs.append(pl.BlockSpec((tk, f_in), lambda i, k: (k, 0)))      # streamed K slab
    in_specs.append(pl.BlockSpec((1, f_in), lambda i, k: (0, 0)))        # resident bias
    args = [adj, s, b]
    if w_next is not None:
        in_specs.append(pl.BlockSpec((f_in, f_out), lambda i, k: (0, 0)))  # resident W_next
        args.append(w_next)

    return pl.pallas_call(
        kernel,
        out_shape=jax.ShapeDtypeStruct((n_pad, f_out), out_dtype),
        grid_spec=pltpu.PrefetchScalarGridSpec(
            num_scalar_prefetch=0,
            grid=(n_pad // tm, n_pad // tk),
            in_specs=in_specs,
            out_specs=pl.BlockSpec((tm, f_out), lambda i, k: (i, 0)),
            scratch_shapes=[pltpu.VMEM((tm, f_in), jnp.float32)],
        ),
        compiler_params=_compiler_params(("parallel", "arbitrary"), vmem_limit),
    )(*args)


# ---------------------------------------------------------------------------
# Full GCNModel forward (eval mode: dropout = identity)
# ---------------------------------------------------------------------------
def gcn_forward(x, adj, params, *, tm=None, tk=None, force_tiled=False):
    w1, b1, w2, b2, w3, b3 = params
    n, nfeat = x.shape
    nhid = w1.shape[1]
    nclass = w3.shape[1]

    # lane-pad all feature axes to multiples of 128
    f_in = _round_up(nfeat, LANE)
    f_hid = _round_up(nhid, LANE)
    f_cls = _round_up(nclass, LANE)

    vmem_limit = _vmem_limit_bytes()
    n_128 = _round_up(n, LANE)
    bf = jnp.bfloat16

    use_fast = (not force_tiled) and _fast_path_fits(n_128, f_in, f_hid, f_cls,
                                                     vmem_limit)

    # ---- tile / padding selection -------------------------------------------------
    if use_fast:
        n_pad = n_128
    else:
        if tm is None:
            tm = min(512, n_128)
        assert tm % LANE == 0, "tm must be a multiple of 128"
        if tk is None:
            n_pad = _round_up(n_128, tm)
            tk = next(c for c in (4096, 2048, 1024, 512, 256, 128)
                      if c <= n_pad and n_pad % c == 0)
        else:
            assert tk % LANE == 0, "tk must be a multiple of 128"
            n_pad = _round_up(n_128, lcm(tm, tk))
        assert n_pad % tm == 0 and n_pad % tk == 0

    # ---- padded / bf16 operands ---------------------------------------------------
    x_p = _pad2(x, n_pad, f_in).astype(bf)
    adj_p = _pad2(adj, n_pad, n_pad).astype(bf)
    w1_p = _pad2(w1, f_in, f_hid).astype(bf)
    w2_p = _pad2(w2, f_hid, f_hid).astype(bf)
    w3_p = _pad2(w3, f_hid, f_cls).astype(bf)
    b1_p = _pad2(b1.reshape(1, -1), 1, f_hid).astype(jnp.float32)
    b2_p = _pad2(b2.reshape(1, -1), 1, f_hid).astype(jnp.float32)
    b3_p = _pad2(b3.reshape(1, -1), 1, f_cls).astype(jnp.float32)

    if use_fast:
        out = _fused_call(x_p, adj_p, w1_p, w2_p, w3_p, b1_p, b2_p, b3_p,
                          nclass=nclass, vmem_limit=vmem_limit)
        return out[:n, :nclass]

    # ---- tiled path ----------------------------------------------------------------
    # keep support resident (constant index_map) when its double-buffer fits VMEM
    support_resident = 2 * n_pad * f_hid * 2 <= 16 * 1024 * 1024

    # standalone layer-1 linear: pick a much larger row tile than the aggregate's tm
    tm_lin = next(c for c in (4096, 2048, 1024, 512, 256, 128)
                  if c <= n_pad and n_pad % c == 0 and c * f_in * 4 <= 16 * 1024 * 1024)

    # layer 1: s1 = x @ W1;  s2 = relu(adj @ s1 + b1) @ W2   (linear fused in finalize)
    s1 = _linear_call(x_p, w1_p, tm=tm_lin, vmem_limit=vmem_limit)
    s2 = _aggregate_call(adj_p, s1, b1_p, w2_p, activation="relu",
                         valid_cols=nhid, out_dtype=bf, tm=tm, tk=tk,
                         support_resident=support_resident, vmem_limit=vmem_limit)
    # layer 2: s3 = relu(adj @ s2 + b2) @ W3
    s3 = _aggregate_call(adj_p, s2, b2_p, w3_p, activation="relu",
                         valid_cols=nhid, out_dtype=bf, tm=tm, tk=tk,
                         support_resident=support_resident, vmem_limit=vmem_limit)
    # layer 3: out = log_softmax(adj @ s3 + b3)
    out = _aggregate_call(adj_p, s3, b3_p, None, activation="log_softmax",
                          valid_cols=nclass, out_dtype=jnp.float32, tm=tm, tk=tk,
                          support_resident=support_resident, vmem_limit=vmem_limit)
    return out[:n, :nclass]


# ---------------------------------------------------------------------------
# Parameter init (mimics GCNLayer.reset_parameters) and a numerics-matched reference
# ---------------------------------------------------------------------------
def init_params(key, nfeat, nhid, nclass):
    def layer(key, fin, fout):
        stdv = 1.0 / sqrt(fout)
        kw, kb = jax.random.split(key)
        w = jax.random.uniform(kw, (fin, fout), jnp.float32, -stdv, stdv)
        b = jax.random.uniform(kb, (fout,), jnp.float32, -stdv, stdv)
        return w, b

    k1, k2, k3 = jax.random.split(key, 3)
    w1, b1 = layer(k1, nfeat, nhid)
    w2, b2 = layer(k2, nhid, nhid)
    w3, b3 = layer(k3, nhid, nclass)
    return w1, b1, w2, b2, w3, b3


def reference_forward(x, adj, params):
    """Pure-JAX reference mirroring the kernels' bf16-in / f32-accumulate numerics."""
    w1, b1, w2, b2, w3, b3 = params
    bf = jnp.bfloat16
    adj_b = adj.astype(bf)

    def layer(h, w, b):
        s = jnp.dot(h.astype(bf), w.astype(bf),
                    preferred_element_type=jnp.float32).astype(bf)
        return jnp.dot(adj_b, s, preferred_element_type=jnp.float32) + b

    h = jnp.maximum(layer(x, w1, b1), 0.0)
    h = jnp.maximum(layer(h, w2, b2), 0.0)
    h = layer(h, w3, b3)
    return jax.nn.log_softmax(h, axis=1)


if __name__ == "__main__":
    # Small synthetic graph (N not a multiple of 128 to exercise row padding).
    N, nfeat, nhid, nclass = 300, 48, 16, 8

    key = jax.random.PRNGKey(0)
    kx, ka, kp = jax.random.split(key, 3)

    x = jax.random.normal(kx, (N, nfeat), jnp.float32)

    # Symmetric normalized adjacency with self loops: D^-1/2 (A + I) D^-1/2
    a = (jax.random.uniform(ka, (N, N)) < 0.05).astype(jnp.float32)
    a = jnp.maximum(a, a.T) + jnp.eye(N, dtype=jnp.float32)
    d_inv_sqrt = 1.0 / jnp.sqrt(jnp.sum(a, axis=1))
    adj = a * d_inv_sqrt[:, None] * d_inv_sqrt[None, :]

    params = init_params(kp, nfeat, nhid, nclass)
    ref = reference_forward(x, adj, params)

    # 1) default dispatch: small-graph fast path (single fused pallas_call)
    out_fast = jax.block_until_ready(gcn_forward(x, adj, params))
    np.testing.assert_allclose(np.asarray(out_fast), np.asarray(ref),
                               rtol=1e-2, atol=1e-2)

    # 2) forced tiled path (multi-step (3,3) grid, K-axis accumulation, fused linear
    #    epilogue, VMEM-resident support) to validate the large-graph code path too.
    out_tiled = jax.block_until_ready(
        gcn_forward(x, adj, params, force_tiled=True, tm=128, tk=128))
    np.testing.assert_allclose(np.asarray(out_tiled), np.asarray(ref),
                               rtol=1e-2, atol=1e-2)

    print("KERNEL_OK")
</pallas_src>

<mosaic_0001>
module attributes {stable_mosaic.version = 11 : i64} {
  func.func @_fused_forward_kernel(%arg0: i32, %arg1: memref<384x128xbf16, #tpu.memory_space<vmem>>, %arg2: memref<384x384xbf16, #tpu.memory_space<vmem>>, %arg3: memref<128x128xbf16, #tpu.memory_space<vmem>>, %arg4: memref<128x128xbf16, #tpu.memory_space<vmem>>, %arg5: memref<128x128xbf16, #tpu.memory_space<vmem>>, %arg6: memref<1x128xf32, #tpu.memory_space<vmem>>, %arg7: memref<1x128xf32, #tpu.memory_space<vmem>>, %arg8: memref<1x128xf32, #tpu.memory_space<vmem>>, %arg9: memref<384x128xf32, #tpu.memory_space<vmem>>) attributes {dimension_semantics = [#tpu.dimension_semantics<arbitrary>], iteration_bounds = array<i64: 1>, scalar_prefetch = 0 : i64, scratch_operands = 0 : i64, tpu.core_type = #tpu.core_type<tc>, window_params = [{pipeline_mode = #tpu.pipeline_mode<synchronous>, transform_indices = @transform_0, window_bounds = array<i64: 384, 128>}, {pipeline_mode = #tpu.pipeline_mode<synchronous>, transform_indices = @transform_1, window_bounds = array<i64: 384, 384>}, {pipeline_mode = #tpu.pipeline_mode<synchronous>, transform_indices = @transform_2, window_bounds = array<i64: 128, 128>}, {pipeline_mode = #tpu.pipeline_mode<synchronous>, transform_indices = @transform_3, window_bounds = array<i64: 128, 128>}, {pipeline_mode = #tpu.pipeline_mode<synchronous>, transform_indices = @transform_4, window_bounds = array<i64: 128, 128>}, {pipeline_mode = #tpu.pipeline_mode<synchronous>, transform_indices = @transform_5, window_bounds = array<i64: 1, 128>}, {pipeline_mode = #tpu.pipeline_mode<synchronous>, transform_indices = @transform_6, window_bounds = array<i64: 1, 128>}, {pipeline_mode = #tpu.pipeline_mode<synchronous>, transform_indices = @transform_7, window_bounds = array<i64: 1, 128>}, {pipeline_mode = #tpu.pipeline_mode<synchronous>, transform_indices = @transform_8, window_bounds = array<i64: 384, 128>}]} {
    %c0 = arith.constant 0 : index
    %c0_0 = arith.constant 0 : index
    %0 = vector.load %arg2[%c0, %c0_0] : memref<384x384xbf16, #tpu.memory_space<vmem>>, vector<384x384xbf16>
    %c0_1 = arith.constant 0 : index
    %c0_2 = arith.constant 0 : index
    %1 = vector.load %arg1[%c0_1, %c0_2] : memref<384x128xbf16, #tpu.memory_space<vmem>>, vector<384x128xbf16>
    %c0_3 = arith.constant 0 : index
    %c0_4 = arith.constant 0 : index
    %2 = vector.load %arg3[%c0_3, %c0_4] : memref<128x128xbf16, #tpu.memory_space<vmem>>, vector<128x128xbf16>
    %cst = arith.constant dense<0.000000e+00> : vector<384x128xf32>
    %3 = tpu.matmul %1, %2, %cst {dimension_numbers = #tpu.dot_dimension_numbers<[1], [0], [0], [1], [0, 0, 1, 1], [], []>} : vector<384x128xbf16>, vector<128x128xbf16>, vector<384x128xf32> -> vector<384x128xf32>
    %4 = arith.truncf %3 : vector<384x128xf32> to vector<384x128xbf16>
    %cst_5 = arith.constant dense<0.000000e+00> : vector<384x128xf32>
    %5 = tpu.matmul %0, %4, %cst_5 {dimension_numbers = #tpu.dot_dimension_numbers<[1], [0], [0], [1], [0, 0, 1, 1], [], []>} : vector<384x384xbf16>, vector<384x128xbf16>, vector<384x128xf32> -> vector<384x128xf32>
    %c0_6 = arith.constant 0 : index
    %c0_7 = arith.constant 0 : index
    %6 = vector.load %arg6[%c0_6, %c0_7] : memref<1x128xf32, #tpu.memory_space<vmem>>, vector<1x128xf32>
    %7 = vector.broadcast %6 : vector<1x128xf32> to vector<384x128xf32>
    %8 = arith.addf %5, %7 : vector<384x128xf32>
    %cst_8 = arith.constant 0.000000e+00 : f32
    %9 = vector.broadcast %cst_8 : f32 to vector<384x128xf32>
    %10 = arith.maximumf %8, %9 : vector<384x128xf32>
    %11 = arith.truncf %10 : vector<384x128xf32> to vector<384x128xbf16>
    %c0_9 = arith.constant 0 : index
    %c0_10 = arith.constant 0 : index
    %12 = vector.load %arg4[%c0_9, %c0_10] : memref<128x128xbf16, #tpu.memory_space<vmem>>, vector<128x128xbf16>
    %cst_11 = arith.constant dense<0.000000e+00> : vector<384x128xf32>
    %13 = tpu.matmul %11, %12, %cst_11 {dimension_numbers = #tpu.dot_dimension_numbers<[1], [0], [0], [1], [0, 0, 1, 1], [], []>} : vector<384x128xbf16>, vector<128x128xbf16>, vector<384x128xf32> -> vector<384x128xf32>
    %14 = arith.truncf %13 : vector<384x128xf32> to vector<384x128xbf16>
    %cst_12 = arith.constant dense<0.000000e+00> : vector<384x128xf32>
    %15 = tpu.matmul %0, %14, %cst_12 {dimension_numbers = #tpu.dot_dimension_numbers<[1], [0], [0], [1], [0, 0, 1, 1], [], []>} : vector<384x384xbf16>, vector<384x128xbf16>, vector<384x128xf32> -> vector<384x128xf32>
    %c0_13 = arith.constant 0 : index
    %c0_14 = arith.constant 0 : index
    %16 = vector.load %arg7[%c0_13, %c0_14] : memref<1x128xf32, #tpu.memory_space<vmem>>, vector<1x128xf32>
    %17 = vector.broadcast %16 : vector<1x128xf32> to vector<384x128xf32>
    %18 = arith.addf %15, %17 : vector<384x128xf32>
    %cst_15 = arith.constant 0.000000e+00 : f32
    %19 = vector.broadcast %cst_15 : f32 to vector<384x128xf32>
    %20 = arith.maximumf %18, %19 : vector<384x128xf32>
    %21 = arith.truncf %20 : vector<384x128xf32> to vector<384x128xbf16>
    %c0_16 = arith.constant 0 : index
    %c0_17 = arith.constant 0 : index
    %22 = vector.load %arg5[%c0_16, %c0_17] : memref<128x128xbf16, #tpu.memory_space<vmem>>, vector<128x128xbf16>
    %cst_18 = arith.constant dense<0.000000e+00> : vector<384x128xf32>
    %23 = tpu.matmul %21, %22, %cst_18 {dimension_numbers = #tpu.dot_dimension_numbers<[1], [0], [0], [1], [0, 0, 1, 1], [], []>} : vector<384x128xbf16>, vector<128x128xbf16>, vector<384x128xf32> -> vector<384x128xf32>
    %24 = arith.truncf %23 : vector<384x128xf32> to vector<384x128xbf16>
    %cst_19 = arith.constant dense<0.000000e+00> : vector<384x128xf32>
    %25 = tpu.matmul %0, %24, %cst_19 {dimension_numbers = #tpu.dot_dimension_numbers<[1], [0], [0], [1], [0, 0, 1, 1], [], []>} : vector<384x384xbf16>, vector<384x128xbf16>, vector<384x128xf32> -> vector<384x128xf32>
    %c0_20 = arith.constant 0 : index
    %c0_21 = arith.constant 0 : index
    %26 = vector.load %arg8[%c0_20, %c0_21] : memref<1x128xf32, #tpu.memory_space<vmem>>, vector<1x128xf32>
    %27 = vector.broadcast %26 : vector<1x128xf32> to vector<384x128xf32>
    %28 = arith.addf %25, %27 : vector<384x128xf32>
    %29 = tpu.iota {dimensions = array<i32: 1>} : vector<384x128xi32>
    %c8_i32 = arith.constant 8 : i32
    %30 = vector.broadcast %c8_i32 : i32 to vector<384x128xi32>
    %31 = arith.cmpi slt, %29, %30 : vector<384x128xi32>
    %cst_22 = arith.constant 0xFF800000 : f32
    %32 = vector.broadcast %cst_22 : f32 to vector<384x128xf32>
    %33 = arith.select %31, %28, %32 : vector<384x128xi1>, vector<384x128xf32>
    %cst_23 = arith.constant dense<0xFF800000> : vector<384xf32>
    %34 = vector.multi_reduction <maximumf>, %33, %cst_23 [1] : vector<384x128xf32> to vector<384xf32>
    %35 = vector.shape_cast %34 : vector<384xf32> to vector<384x1xf32>
    %36 = vector.broadcast %35 : vector<384x1xf32> to vector<384x128xf32>
    %37 = arith.subf %33, %36 : vector<384x128xf32>
    %38 = math.exp %37 : vector<384x128xf32>
    %cst_24 = arith.constant dense<0.000000e+00> : vector<384xf32>
    %39 = vector.multi_reduction <add>, %38, %cst_24 [1] : vector<384x128xf32> to vector<384xf32>
    %40 = vector.shape_cast %39 : vector<384xf32> to vector<384x1xf32>
    %41 = math.log %40 : vector<384x1xf32>
    %42 = vector.broadcast %41 : vector<384x1xf32> to vector<384x128xf32>
    %43 = arith.subf %37, %42 : vector<384x128xf32>
    %c0_25 = arith.constant 0 : index
    %c0_26 = arith.constant 0 : index
    %44 = vector.load %arg9[%c0_25, %c0_26] : memref<384x128xf32, #tpu.memory_space<vmem>>, vector<384x128xf32>
    tpu.vector_store %arg9[%c0_25, %c0_26], %43 {strides = array<i32>} : memref<384x128xf32, #tpu.memory_space<vmem>>, vector<384x128xf32>,
    return
  }
  func.func @transform_0(%arg0: i32) -> (i32, i32) {
    %c0_i32 = arith.constant 0 : i32
    %c0_i32_0 = arith.constant 0 : i32
    %c0_i32_1 = arith.constant 0 : i32
    return %c0_i32, %c0_i32_0 : i32, i32
  }
  func.func @transform_1(%arg0: i32) -> (i32, i32) {
    %c0_i32 = arith.constant 0 : i32
    %c0_i32_0 = arith.constant 0 : i32
    %c0_i32_1 = arith.constant 0 : i32
    return %c0_i32, %c0_i32_0 : i32, i32
  }
  func.func @transform_2(%arg0: i32) -> (i32, i32) {
    %c0_i32 = arith.constant 0 : i32
    %c0_i32_0 = arith.constant 0 : i32
    %c0_i32_1 = arith.constant 0 : i32
    return %c0_i32, %c0_i32_0 : i32, i32
  }
  func.func @transform_3(%arg0: i32) -> (i32, i32) {
    %c0_i32 = arith.constant 0 : i32
    %c0_i32_0 = arith.constant 0 : i32
    %c0_i32_1 = arith.constant 0 : i32
    return %c0_i32, %c0_i32_0 : i32, i32
  }
  func.func @transform_4(%arg0: i32) -> (i32, i32) {
    %c0_i32 = arith.constant 0 : i32
    %c0_i32_0 = arith.constant 0 : i32
    %c0_i32_1 = arith.constant 0 : i32
    return %c0_i32, %c0_i32_0 : i32, i32
  }
  func.func @transform_5(%arg0: i32) -> (i32, i32) {
    %c0_i32 = arith.constant 0 : i32
    %c0_i32_0 = arith.constant 0 : i32
    %c0_i32_1 = arith.constant 0 : i32
    return %c0_i32, %c0_i32_0 : i32, i32
  }
  func.func @transform_6(%arg0: i32) -> (i32, i32) {
    %c0_i32 = arith.constant 0 : i32
    %c0_i32_0 = arith.constant 0 : i32
    %c0_i32_1 = arith.constant 0 : i32
    return %c0_i32, %c0_i32_0 : i32, i32
  }
  func.func @transform_7(%arg0: i32) -> (i32, i32) {
    %c0_i32 = arith.constant 0 : i32
    %c0_i32_0 = arith.constant 0 : i32
    %c0_i32_1 = arith.constant 0 : i32
    return %c0_i32, %c0_i32_0 : i32, i32
  }
  func.func @transform_8(%arg0: i32) -> (i32, i32) {
    %c0_i32 = arith.constant 0 : i32
    %c0_i32_0 = arith.constant 0 : i32
    %c0_i32_1 = arith.constant 0 : i32
    return %c0_i32, %c0_i32_0 : i32, i32
  }
}

</mosaic_0001>

<llo_original>
// kernel: tpu_custom_call.1
$region0: #{tpu_custom_call.1}
  #allocation0 [shape = 'u32[]', space=smem, size = 0x4, offset = 0x4, fixed_abs, tag = 'smem constant byte address 0x4 - core index']
  #allocation1 [shape = 'u32[72,128]{1,0:T(1,128)}', space=vmem, size = 0x9000, scoped, tag = 'internal scratch']
  %s0 = inlined_call_operand.hbm [shape: bf16[384,128], index: 0, kind: input, shape index: {}]
  %s1 = inlined_call_operand.hbm [shape: bf16[384,384], index: 1, kind: input, shape index: {}]
  %s2 = inlined_call_operand.hbm [shape: bf16[128,128], index: 2, kind: input, shape index: {}]
  %s3 = inlined_call_operand.hbm [shape: bf16[128,128], index: 3, kind: input, shape index: {}]
  %s4 = inlined_call_operand.hbm [shape: bf16[128,128], index: 4, kind: input, shape index: {}]
  %s5 = inlined_call_operand.vmem [shape: f32[1,128], index: 5, kind: input, shape index: {}]
  %s6 = inlined_call_operand.vmem [shape: f32[1,128], index: 6, kind: input, shape index: {}]
  %s7 = inlined_call_operand.vmem [shape: f32[1,128], index: 7, kind: input, shape index: {}]
  %s8 = inlined_call_operand.hbm [shape: f32[384,128], index: 8, kind: output, shape index: {}]
  %s9 = sld [smem:[#allocation0]]
  $region62: #{tpu_custom_call.1} parent=0
    _
  %s11 = ssub.s32 1, %s9
  %s12 = scalar_select 0, %s11, %s9
  $region1: #{tpu_custom_call.1} parent=0
    #allocation2 [shape = 'u8[98304]{0}', space=vmem, size = 0x18000, scoped, tag = 'input window, operand 0, single buffered']
    #allocation3 [shape = 's32[1]{0}', space=sflag, size = 0x4, scoped, tag = 'scoped memory for tpu_custom_call.1']
    #allocation4 [shape = 's32[1]{0}', space=sflag, size = 0x4, scoped, tag = 'scoped memory for tpu_custom_call.1']
    #allocation5 [shape = 'u8[294912]{0}', space=vmem, size = 0x48000, scoped, tag = 'input window, operand 1, single buffered']
    #allocation6 [shape = 's32[1]{0}', space=sflag, size = 0x4, scoped, tag = 'scoped memory for tpu_custom_call.1']
    #allocation7 [shape = 'u8[32768]{0}', space=vmem, size = 0x8000, scoped, tag = 'input window, operand 2, single buffered']
    #allocation8 [shape = 'u8[32768]{0}', space=vmem, size = 0x8000, scoped, tag = 'input window, operand 3, single buffered']
    #allocation9 [shape = 's32[1]{0}', space=sflag, size = 0x4, scoped, tag = 'scoped memory for tpu_custom_call.1']
    #allocation10 [shape = 'u8[32768]{0}', space=vmem, size = 0x8000, scoped, tag = 'input window, operand 4, single buffered']
    #allocation11 [shape = 'u8[196608]{0}', space=vmem, size = 0x30000, scoped, tag = 'output window, operand 0, single buffered']
    %13 = vsyncpa [#allocation3], 0
    %14 = vsyncpa [#allocation6], 0
    %15 = vsyncpa [#allocation9], 0
    %16 = vsyncpa [#allocation4], 0
    // Predicated region
    $region2: #{tpu_custom_call.1} parent=1 // pred_check
      _
    $region3: #{tpu_custom_call.1} parent=1 // pred_check_branch
      %18 = sbr.rel (0) target = $region5
    $region4: #{tpu_custom_call.1} parent=1 // pred_region
      %20 = vsyncadd [#allocation3], 0
      %s21 = sshll.u32 %s0, 4
      %s22 = int_to_ptr.hbm [resolvable:$true] %s21
      %s23 = sshll.u32 [#allocation2], 4
      %s24 = int_to_ptr.vmem [resolvable:$true] %s23
      %29 = dma.hbm_to_vmem [thread:$0]  %s22, 3072, %s24, [#allocation3], 64, 64, 4
    $region5: #{tpu_custom_call.1} parent=1 // pred_fallthru
      _
    // Predicated region
    $region6: #{tpu_custom_call.1} parent=1 // pred_check
      _
    $region7: #{tpu_custom_call.1} parent=1 // pred_check_branch
      %31 = sbr.rel (0) target = $region9
    $region8: #{tpu_custom_call.1} parent=1 // pred_region
      %33 = vsyncadd [#allocation6], 0
      %s34 = sshll.u32 %s1, 4
      %s35 = int_to_ptr.hbm [resolvable:$true] %s34
      %s36 = sshll.u32 [#allocation5], 4
      %s37 = int_to_ptr.vmem [resolvable:$true] %s36
      %42 = dma.hbm_to_vmem [thread:$0]  %s35, 9216, %s37, [#allocation6], 192, 192, 12
    $region9: #{tpu_custom_call.1} parent=1 // pred_fallthru
      _
    // Predicated region
    $region10: #{tpu_custom_call.1} parent=1 // pred_check
      _
    $region11: #{tpu_custom_call.1} parent=1 // pred_check_branch
      %44 = sbr.rel (0) target = $region13
    $region12: #{tpu_custom_call.1} parent=1 // pred_region
      %46 = vsyncadd [#allocation6], 0
      %s47 = sshll.u32 %s2, 4
      %s48 = int_to_ptr.hbm [resolvable:$true] %s47
      %s49 = sshll.u32 [#allocation7], 4
      %s50 = int_to_ptr.vmem [resolvable:$true] %s49
      %55 = dma.hbm_to_vmem [thread:$0]  %s48, 1024, %s50, [#allocation6], 64, 64, 4
    $region13: #{tpu_custom_call.1} parent=1 // pred_fallthru
      _
    // Predicated region
    $region14: #{tpu_custom_call.1} parent=1 // pred_check
      _
    $region15: #{tpu_custom_call.1} parent=1 // pred_check_branch
      %57 = sbr.rel (0) target = $region17
    $region16: #{tpu_custom_call.1} parent=1 // pred_region
      %59 = vsyncadd [#allocation9], 0
      %s60 = sshll.u32 %s3, 4
      %s61 = int_to_ptr.hbm [resolvable:$true] %s60
      %s62 = sshll.u32 [#allocation8], 4
      %s63 = int_to_ptr.vmem [resolvable:$true] %s62
      %68 = dma.hbm_to_vmem [thread:$0]  %s61, 1024, %s63, [#allocation9], 64, 64, 4
    $region17: #{tpu_custom_call.1} parent=1 // pred_fallthru
      _
    // Predicated region
    $region18: #{tpu_custom_call.1} parent=1 // pred_check
      _
    $region19: #{tpu_custom_call.1} parent=1 // pred_check_branch
      %70 = sbr.rel (0) target = $region21
    $region20: #{tpu_custom_call.1} parent=1 // pred_region
      %72 = vsyncadd [#allocation9], 0
      %s73 = sshll.u32 %s4, 4
      %s74 = int_to_ptr.hbm [resolvable:$true] %s73
      %s75 = sshll.u32 [#allocation10], 4
      %s76 = int_to_ptr.vmem [resolvable:$true] %s75
      %81 = dma.hbm_to_vmem [thread:$0]  %s74, 1024, %s76, [#allocation9], 64, 64, 4
    $region21: #{tpu_custom_call.1} parent=1 // pred_fallthru
      _
    // Predicated region
    $region22: #{tpu_custom_call.1} parent=1 // pred_check
      _
    $region23: #{tpu_custom_call.1} parent=1 // pred_check_branch
      %83 = sbr.rel (0) target = $region25
    $region24: #{tpu_custom_call.1} parent=1 // pred_region
      _
    $region25: #{tpu_custom_call.1} parent=1 // pred_fallthru
      _
    // Predicated region
    $region26: #{tpu_custom_call.1} parent=1 // pred_check
      _
    $region27: #{tpu_custom_call.1} parent=1 // pred_check_branch
      %85 = sbr.rel (0) target = $region29
    $region28: #{tpu_custom_call.1} parent=1 // pred_region
      _
    $region29: #{tpu_custom_call.1} parent=1 // pred_fallthru
      _
    // Predicated region
    $region30: #{tpu_custom_call.1} parent=1 // pred_check
      _
    $region31: #{tpu_custom_call.1} parent=1 // pred_check_branch
      %87 = sbr.rel (0) target = $region33
    $region32: #{tpu_custom_call.1} parent=1 // pred_region
      _
    $region33: #{tpu_custom_call.1} parent=1 // pred_fallthru
      _
    // Predicated region
    $region34: #{tpu_custom_call.1} parent=1 // pred_check
      _
    $region35: #{tpu_custom_call.1} parent=1 // pred_check_branch
      %89 = sbr.rel (0) target = $region37
    $region36: #{tpu_custom_call.1} parent=1 // pred_region
      %91 = dma.done [#allocation3], 3072
    $region37: #{tpu_custom_call.1} parent=1 // pred_fallthru
      _
    // Predicated region
    $region38: #{tpu_custom_call.1} parent=1 // pred_check
      _
    $region39: #{tpu_custom_call.1} parent=1 // pred_check_branch
      %93 = sbr.rel (0) target = $region41
    $region40: #{tpu_custom_call.1} parent=1 // pred_region
      %95 = dma.done [#allocation6], 9216
    $region41: #{tpu_custom_call.1} parent=1 // pred_fallthru
      _
    // Predicated region
    $region42: #{tpu_custom_call.1} parent=1 // pred_check
      _
    $region43: #{tpu_custom_call.1} parent=1 // pred_check_branch
      %97 = sbr.rel (0) target = $region45
    $region44: #{tpu_custom_call.1} parent=1 // pred_region
      %99 = dma.done [#allocation6], 1024
    $region45: #{tpu_custom_call.1} parent=1 // pred_fallthru
      _
    // Predicated region
    $region46: #{tpu_custom_call.1} parent=1 // pred_check
      _
    $region47: #{tpu_custom_call.1} parent=1 // pred_check_branch
      %101 = sbr.rel (0) target = $region49
    $region48: #{tpu_custom_call.1} parent=1 // pred_region
      %103 = dma.done [#allocation9], 1024
    $region49: #{tpu_custom_call.1} parent=1 // pred_fallthru
      _
    // Predicated region
    $region50: #{tpu_custom_call.1} parent=1 // pred_check
      _
    $region51: #{tpu_custom_call.1} parent=1 // pred_check_branch
      %105 = sbr.rel (0) target = $region53
    $region52: #{tpu_custom_call.1} parent=1 // pred_region
      %107 = dma.done [#allocation9], 1024
    $region53: #{tpu_custom_call.1} parent=1 // pred_fallthru
      _
    %v108 = vld [vmem:[#allocation5] sm:$0xff]
    %v109 = vld [vmem:[#allocation5 + $0x8] sm:$0xf]
    %v110 = vld [vmem:[#allocation5 + $0xc] sm:$0xff]
    %v111 = vld [vmem:[#allocation5 + $0x14] sm:$0xf]
    %v112 = vld [vmem:[#allocation5 + $0x18] sm:$0xff]
    %v113 = vld [vmem:[#allocation5 + $0x20] sm:$0xf]
    %v114 = vld [vmem:[#allocation5 + $0x24] sm:$0xff]
    %v115 = vld [vmem:[#allocation5 + $0x2c] sm:$0xf]
    %v116 = vld [vmem:[#allocation5 + $0x30] sm:$0xff]
    %v117 = vld [vmem:[#allocation5 + $0x38] sm:$0xf]
    %v118 = vld [vmem:[#allocation5 + $0x3c] sm:$0xff]
    %v119 = vld [vmem:[#allocation5 + $0x44] sm:$0xf]
    %v120 = vld [vmem:[#allocation5 + $0x48] sm:$0xff]
    %v121 = vld [vmem:[#allocation5 + $0x50] sm:$0xf]
    %v122 = vld [vmem:[#allocation5 + $0x54] sm:$0xff]
    %v123 = vld [vmem:[#allocation5 + $0x5c] sm:$0xf]
    %v124 = vld [vmem:[#allocation5 + $0x60] sm:$0xff]
    %v125 = vld [vmem:[#allocation5 + $0x68] sm:$0xf]
    %v126 = vld [vmem:[#allocation5 + $0x6c] sm:$0xff]
    %v127 = vld [vmem:[#allocation5 + $0x74] sm:$0xf]
    %v128 = vld [vmem:[#allocation5 + $0x78] sm:$0xff]
    %v129 = vld [vmem:[#allocation5 + $0x80] sm:$0xf]
    %v130 = vld [vmem:[#allocation5 + $0x84] sm:$0xff]
    %v131 = vld [vmem:[#allocation5 + $0x8c] sm:$0xf]
    %v132 = vld [vmem:[#allocation5 + $0x90] sm:$0xff]
    %v133 = vld [vmem:[#allocation5 + $0x98] sm:$0xf]
    %v134 = vld [vmem:[#allocation5 + $0x9c] sm:$0xff]
    %v135 = vld [vmem:[#allocation5 + $0xa4] sm:$0xf]
    %v136 = vld [vmem:[#allocation5 + $0xa8] sm:$0xff]
    %v137 = vld [vmem:[#allocation5 + $0xb0] sm:$0xf]
    %v138 = vld [vmem:[#allocation5 + $0xb4] sm:$0xff]
    %v139 = vld [vmem:[#allocation5 + $0xbc] sm:$0xf]
    %v140 = vld [vmem:[#allocation5 + $0xc0] sm:$0xff]
    %v141 = vld [vmem:[#allocation5 + $0xc8] sm:$0xf]
    %v142 = vld [vmem:[#allocation5 + $0xcc] sm:$0xff]
    %v143 = vld [vmem:[#allocation5 + $0xd4] sm:$0xf]
    %v144 = vld [vmem:[#allocation5 + $0xd8] sm:$0xff]
    %v145 = vld [vmem:[#allocation5 + $0xe0] sm:$0xf]
    %v146 = vld [vmem:[#allocation5 + $0xe4] sm:$0xff]
    %v147 = vld [vmem:[#allocation5 + $0xec] sm:$0xf]
    %v148 = vld [vmem:[#allocation5 + $0xf0] sm:$0xff]
    %v149 = vld [vmem:[#allocation5 + $0xf8] sm:$0xf]
    %v150 = vld [vmem:[#allocation5 + $0xfc] sm:$0xff]
    %v151 = vld [vmem:[#allocation5 + $0x104] sm:$0xf]
    %v152 = vld [vmem:[#allocation5 + $0x108] sm:$0xff]
    %v153 = vld [vmem:[#allocation5 + $0x110] sm:$0xf]
    %v154 = vld [vmem:[#allocation5 + $0x114] sm:$0xff]
    %v155 = vld [vmem:[#allocation5 + $0x11c] sm:$0xf]
    %v156 = vld [vmem:[#allocation5 + $0x120] sm:$0xff]
    %v157 = vld [vmem:[#allocation5 + $0x128] sm:$0xf]
    %v158 = vld [vmem:[#allocation5 + $0x12c] sm:$0xff]
    %v159 = vld [vmem:[#allocation5 + $0x134] sm:$0xf]
    %v160 = vld [vmem:[#allocation5 + $0x138] sm:$0xff]
    %v161 = vld [vmem:[#allocation5 + $0x140] sm:$0xf]
    %v162 = vld [vmem:[#allocation5 + $0x144] sm:$0xff]
    %v163 = vld [vmem:[#allocation5 + $0x14c] sm:$0xf]
    %v164 = vld [vmem:[#allocation5 + $0x150] sm:$0xff]
    %v165 = vld [vmem:[#allocation5 + $0x158] sm:$0xf]
    %v166 = vld [vmem:[#allocation5 + $0x15c] sm:$0xff]
    %v167 = vld [vmem:[#allocation5 + $0x164] sm:$0xf]
    %v168 = vld [vmem:[#allocation5 + $0x168] sm:$0xff]
    %v169 = vld [vmem:[#allocation5 + $0x170] sm:$0xf]
    %v170 = vld [vmem:[#allocation5 + $0x174] sm:$0xff]
    %v171 = vld [vmem:[#allocation5 + $0x17c] sm:$0xf]
    %v172 = vld [vmem:[#allocation5 + $0x180] sm:$0xff]
    %v173 = vld [vmem:[#allocation5 + $0x188] sm:$0xf]
    %v174 = vld [vmem:[#allocation5 + $0x18c] sm:$0xff]
    %v175 = vld [vmem:[#allocation5 + $0x194] sm:$0xf]
    %v176 = vld [vmem:[#allocation5 + $0x198] sm:$0xff]
    %v177 = vld [vmem:[#allocation5 + $0x1a0] sm:$0xf]
    %v178 = vld [vmem:[#allocation5 + $0x1a4] sm:$0xff]
    %v179 = vld [vmem:[#allocation5 + $0x1ac] sm:$0xf]
    %v180 = vld [vmem:[#allocation5 + $0x1b0] sm:$0xff]
    %v181 = vld [vmem:[#allocation5 + $0x1b8] sm:$0xf]
    %v182 = vld [vmem:[#allocation5 + $0x1bc] sm:$0xff]
    %v183 = vld [vmem:[#allocation5 + $0x1c4] sm:$0xf]
    %v184 = vld [vmem:[#allocation5 + $0x1c8] sm:$0xff]
    %v185 = vld [vmem:[#allocation5 + $0x1d0] sm:$0xf]
    %v186 = vld [vmem:[#allocation5 + $0x1d4] sm:$0xff]
    %v187 = vld [vmem:[#allocation5 + $0x1dc] sm:$0xf]
    %v188 = vld [vmem:[#allocation5 + $0x1e0] sm:$0xff]
    %v189 = vld [vmem:[#allocation5 + $0x1e8] sm:$0xf]
    %v190 = vld [vmem:[#allocation5 + $0x1ec] sm:$0xff]
    %v191 = vld [vmem:[#allocation5 + $0x1f4] sm:$0xf]
    %v192 = vld [vmem:[#allocation5 + $0x1f8] sm:$0xff]
    %v193 = vld [vmem:[#allocation5 + $0x200] sm:$0xf]
    %v194 = vld [vmem:[#allocation5 + $0x204] sm:$0xff]
    %v195 = vld [vmem:[#allocation5 + $0x20c] sm:$0xf]
    %v196 = vld [vmem:[#allocation5 + $0x210] sm:$0xff]
    %v197 = vld [vmem:[#allocation5 + $0x218] sm:$0xf]
    %v198 = vld [vmem:[#allocation5 + $0x21c] sm:$0xff]
    %v199 = vld [vmem:[#allocation5 + $0x224] sm:$0xf]
    %v200 = vld [vmem:[#allocation5 + $0x228] sm:$0xff]
    %v201 = vld [vmem:[#allocation5 + $0x230] sm:$0xf]
    %v202 = vld [vmem:[#allocation5 + $0x234] sm:$0xff]
    %v203 = vld [vmem:[#allocation5 + $0x23c] sm:$0xf]
    %v204 = vld [vmem:[#allocation2] sm:$0xf]
    %v205 = vld [vmem:[#allocation2 + $0x4] sm:$0xf]
    %v206 = vld [vmem:[#allocation2 + $0x8] sm:$0xf]
    %v207 = vld [vmem:[#allocation2 + $0xc] sm:$0xf]
    %v208 = vld [vmem:[#allocation2 + $0x10] sm:$0xf]
    %v209 = vld [vmem:[#allocation2 + $0x14] sm:$0xf]
    %v210 = vld [vmem:[#allocation2 + $0x18] sm:$0xf]
    %v211 = vld [vmem:[#allocation2 + $0x1c] sm:$0xf]
    %v212 = vld [vmem:[#allocation2 + $0x20] sm:$0xf]
    %v213 = vld [vmem:[#allocation2 + $0x24] sm:$0xf]
    %v214 = vld [vmem:[#allocation2 + $0x28] sm:$0xf]
    %v215 = vld [vmem:[#allocation2 + $0x2c] sm:$0xf]
    %v216 = vld [vmem:[#allocation2 + $0x30] sm:$0xf]
    %v217 = vld [vmem:[#allocation2 + $0x34] sm:$0xf]
    %v218 = vld [vmem:[#allocation2 + $0x38] sm:$0xf]
    %v219 = vld [vmem:[#allocation2 + $0x3c] sm:$0xf]
    %v220 = vld [vmem:[#allocation2 + $0x40] sm:$0xf]
    %v221 = vld [vmem:[#allocation2 + $0x44] sm:$0xf]
    %v222 = vld [vmem:[#allocation2 + $0x48] sm:$0xf]
    %v223 = vld [vmem:[#allocation2 + $0x4c] sm:$0xf]
    %v224 = vld [vmem:[#allocation2 + $0x50] sm:$0xf]
    %v225 = vld [vmem:[#allocation2 + $0x54] sm:$0xf]
    %v226 = vld [vmem:[#allocation2 + $0x58] sm:$0xf]
    %v227 = vld [vmem:[#allocation2 + $0x5c] sm:$0xf]
    %v228 = vld [vmem:[#allocation2 + $0x60] sm:$0xf]
    %v229 = vld [vmem:[#allocation2 + $0x64] sm:$0xf]
    %v230 = vld [vmem:[#allocation2 + $0x68] sm:$0xf]
    %v231 = vld [vmem:[#allocation2 + $0x6c] sm:$0xf]
    %v232 = vld [vmem:[#allocation2 + $0x70] sm:$0xf]
    %v233 = vld [vmem:[#allocation2 + $0x74] sm:$0xf]
    %v234 = vld [vmem:[#allocation2 + $0x78] sm:$0xf]
    %v235 = vld [vmem:[#allocation2 + $0x7c] sm:$0xf]
    %v236 = vld [vmem:[#allocation2 + $0x80] sm:$0xf]
    %v237 = vld [vmem:[#allocation2 + $0x84] sm:$0xf]
    %v238 = vld [vmem:[#allocation2 + $0x88] sm:$0xf]
    %v239 = vld [vmem:[#allocation2 + $0x8c] sm:$0xf]
    %v240 = vld [vmem:[#allocation2 + $0x90] sm:$0xf]
    %v241 = vld [vmem:[#allocation2 + $0x94] sm:$0xf]
    %v242 = vld [vmem:[#allocation2 + $0x98] sm:$0xf]
    %v243 = vld [vmem:[#allocation2 + $0x9c] sm:$0xf]
    %v244 = vld [vmem:[#allocation2 + $0xa0] sm:$0xf]
    %v245 = vld [vmem:[#allocation2 + $0xa4] sm:$0xf]
    %v246 = vld [vmem:[#allocation2 + $0xa8] sm:$0xf]
    %v247 = vld [vmem:[#allocation2 + $0xac] sm:$0xf]
    %v248 = vld [vmem:[#allocation2 + $0xb0] sm:$0xf]
    %v249 = vld [vmem:[#allocation2 + $0xb4] sm:$0xf]
    %v250 = vld [vmem:[#allocation2 + $0xb8] sm:$0xf]
    %v251 = vld [vmem:[#allocation2 + $0xbc] sm:$0xf]
    %v252 = vld [vmem:[#allocation7] sm:$0xf]
    %v253 = vld [vmem:[#allocation7 + $0x4] sm:$0xf]
    %v254 = vld [vmem:[#allocation7 + $0x8] sm:$0xf]
    %v255 = vld [vmem:[#allocation7 + $0xc] sm:$0xf]
    %v256 = vld [vmem:[#allocation7 + $0x10] sm:$0xf]
    %v257 = vld [vmem:[#allocation7 + $0x14] sm:$0xf]
    %v258 = vld [vmem:[#allocation7 + $0x18] sm:$0xf]
    %v259 = vld [vmem:[#allocation7 + $0x1c] sm:$0xf]
    %v260 = vld [vmem:[#allocation7 + $0x20] sm:$0xf]
    %v261 = vld [vmem:[#allocation7 + $0x24] sm:$0xf]
    %v262 = vld [vmem:[#allocation7 + $0x28] sm:$0xf]
    %v263 = vld [vmem:[#allocation7 + $0x2c] sm:$0xf]
    %v264 = vld [vmem:[#allocation7 + $0x30] sm:$0xf]
    %v265 = vld [vmem:[#allocation7 + $0x34] sm:$0xf]
    %v266 = vld [vmem:[#allocation7 + $0x38] sm:$0xf]
    %v267 = vld [vmem:[#allocation7 + $0x3c] sm:$0xf]
    %v316 = vunpack.c.l.b16 %v204
    %v317 = vunpack.c.l.b16 %v205
    %v318 = vunpack.c.l.b16 %v206
    %v319 = vunpack.c.l.b16 %v207
    %v320 = vunpack.c.l.b16 %v208
    %v321 = vunpack.c.l.b16 %v209
    %v322 = vunpack.c.l.b16 %v210
    %v323 = vunpack.c.l.b16 %v211
    %v324 = vunpack.c.l.b16 %v212
    %v325 = vunpack.c.l.b16 %v213
    %v326 = vunpack.c.l.b16 %v214
    %v327 = vunpack.c.l.b16 %v215
    %v328 = vunpack.c.l.b16 %v216
    %v329 = vunpack.c.l.b16 %v217
    %v330 = vunpack.c.l.b16 %v218
    %v331 = vunpack.c.l.b16 %v219
    %v332 = vunpack.c.l.b16 %v220
    %v333 = vunpack.c.l.b16 %v221
    %v334 = vunpack.c.l.b16 %v222
    %v335 = vunpack.c.l.b16 %v223
    %v336 = vunpack.c.l.b16 %v224
    %v337 = vunpack.c.l.b16 %v225
    %v338 = vunpack.c.l.b16 %v226
    %v339 = vunpack.c.l.b16 %v227
    %v340 = vunpack.c.l.b16 %v228
    %v341 = vunpack.c.l.b16 %v229
    %v342 = vunpack.c.l.b16 %v230
    %v343 = vunpack.c.l.b16 %v231
    %v344 = vunpack.c.l.b16 %v232
    %v345 = vunpack.c.l.b16 %v233
    %v346 = vunpack.c.l.b16 %v234
    %v347 = vunpack.c.l.b16 %v235
    %v348 = vunpack.c.l.b16 %v236
    %v349 = vunpack.c.l.b16 %v237
    %v350 = vunpack.c.l.b16 %v238
    %v351 = vunpack.c.l.b16 %v239
    %v352 = vunpack.c.l.b16 %v240
    %v353 = vunpack.c.l.b16 %v241
    %v354 = vunpack.c.l.b16 %v242
    %v355 = vunpack.c.l.b16 %v243
    %v356 = vunpack.c.l.b16 %v244
    %v357 = vunpack.c.l.b16 %v245
    %v358 = vunpack.c.l.b16 %v246
    %v359 = vunpack.c.l.b16 %v247
    %v360 = vunpack.c.l.b16 %v248
    %v361 = vunpack.c.l.b16 %v249
    %v362 = vunpack.c.l.b16 %v250
    %v363 = vunpack.c.l.b16 %v251
    %v364 = vpack.c.b16 %v317, %v316
    %v365 = vpack.c.b16 %v319, %v318
    %v366 = vpack.c.b16 %v321, %v320
    %v367 = vpack.c.b16 %v323, %v322
    %v368 = vpack.c.b16 %v325, %v324
    %v369 = vpack.c.b16 %v327, %v326
    %v370 = vpack.c.b16 %v329, %v328
    %v371 = vpack.c.b16 %v331, %v330
    %v372 = vpack.c.b16 %v333, %v332
    %v373 = vpack.c.b16 %v335, %v334
    %v374 = vpack.c.b16 %v337, %v336
    %v375 = vpack.c.b16 %v339, %v338
    %v376 = vpack.c.b16 %v341, %v340
    %v377 = vpack.c.b16 %v343, %v342
    %v378 = vpack.c.b16 %v345, %v344
    %v379 = vpack.c.b16 %v347, %v346
    %v380 = vpack.c.b16 %v349, %v348
    %v381 = vpack.c.b16 %v351, %v350
    %v382 = vpack.c.b16 %v353, %v352
    %v383 = vpack.c.b16 %v355, %v354
    %v384 = vpack.c.b16 %v357, %v356
    %v385 = vpack.c.b16 %v359, %v358
    %v386 = vpack.c.b16 %v361, %v360
    %v387 = vpack.c.b16 %v363, %v362
    %v428 = vunpack.c.l.b16 %v252
    %v429 = vunpack.c.l.b16 %v253
    %v430 = vunpack.c.l.b16 %v254
    %v431 = vunpack.c.l.b16 %v255
    %v432 = vunpack.c.l.b16 %v256
    %v433 = vunpack.c.l.b16 %v257
    %v434 = vunpack.c.l.b16 %v258
    %v435 = vunpack.c.l.b16 %v259
    %v436 = vunpack.c.l.b16 %v260
    %v437 = vunpack.c.l.b16 %v261
    %v438 = vunpack.c.l.b16 %v262
    %v439 = vunpack.c.l.b16 %v263
    %v440 = vunpack.c.l.b16 %v264
    %v441 = vunpack.c.l.b16 %v265
    %v442 = vunpack.c.l.b16 %v266
    %v443 = vunpack.c.l.b16 %v267
    %v444 = vpack.c.b16 %v429, %v428
    %v445 = vpack.c.b16 %v431, %v430
    %v446 = vpack.c.b16 %v433, %v432
    %v447 = vpack.c.b16 %v435, %v434
    %v448 = vpack.c.b16 %v437, %v436
    %v449 = vpack.c.b16 %v439, %v438
    %v450 = vpack.c.b16 %v441, %v440
    %v451 = vpack.c.b16 %v443, %v442
    %460 = vmatpush.bf16.msra.mxu0 %v451
    %461 = vmatpush.bf16.msra.mxu0 %v450
    %462 = vmatpush.bf16.msra.mxu0 %v449
    %463 = vmatpush.bf16.msra.mxu0 %v448
    %464 = vmatpush.bf16.msra.mxu0 %v447
    %465 = vmatpush.bf16.msra.mxu0 %v446
    %466 = vmatpush.bf16.msra.mxu0 %v445
    %467 = vmatpush.bf16.msra.mxu0 %v444
    %468 = vmatmul.bf16.gmra.mxu0 %v364
    %v469 = vpop.f32.mrf.mxu0
    %v470 = vadd.f32 0.0, %v469
    %v471 = vpop.f32.mrf.mxu0
    %v472 = vadd.f32 0.0, %v471
    %473 = vmatmul.bf16.gmra.mxu0 %v365
    %v474 = vpop.f32.mrf.mxu0
    %v475 = vadd.f32 0.0, %v474
    %v476 = vpop.f32.mrf.mxu0
    %v477 = vadd.f32 0.0, %v476
    %478 = vmatmul.bf16.gmra.mxu0 %v366
    %v479 = vpop.f32.mrf.mxu0
    %v480 = vadd.f32 0.0, %v479
    %v481 = vpop.f32.mrf.mxu0
    %v482 = vadd.f32 0.0, %v481
    %483 = vmatmul.bf16.gmra.mxu0 %v367
    %v484 = vpop.f32.mrf.mxu0
    %v485 = vadd.f32 0.0, %v484
    %v486 = vpop.f32.mrf.mxu0
    %v487 = vadd.f32 0.0, %v486
    %488 = vmatmul.bf16.gmra.mxu0 %v368
    %v489 = vpop.f32.mrf.mxu0
    %v490 = vadd.f32 0.0, %v489
    %v491 = vpop.f32.mrf.mxu0
    %v492 = vadd.f32 0.0, %v491
    %493 = vmatmul.bf16.gmra.mxu0 %v369
    %v494 = vpop.f32.mrf.mxu0
    %v495 = vadd.f32 0.0, %v494
    %v496 = vpop.f32.mrf.mxu0
    %v497 = vadd.f32 0.0, %v496
    %498 = vmatmul.bf16.gmra.mxu0 %v370
    %v499 = vpop.f32.mrf.mxu0
    %v500 = vadd.f32 0.0, %v499
    %v501 = vpop.f32.mrf.mxu0
    %v502 = vadd.f32 0.0, %v501
    %503 = vmatmul.bf16.gmra.mxu0 %v371
    %v504 = vpop.f32.mrf.mxu0
    %v505 = vadd.f32 0.0, %v504
    %v506 = vpop.f32.mrf.mxu0
    %v507 = vadd.f32 0.0, %v506
    %508 = vmatmul.bf16.gmra.mxu0 %v372
    %v509 = vpop.f32.mrf.mxu0
    %v510 = vadd.f32 0.0, %v509
    %v511 = vpop.f32.mrf.mxu0
    %v512 = vadd.f32 0.0, %v511
    %513 = vmatmul.bf16.gmra.mxu0 %v373
    %v514 = vpop.f32.mrf.mxu0
    %v515 = vadd.f32 0.0, %v514
    %v516 = vpop.f32.mrf.mxu0
    %v517 = vadd.f32 0.0, %v516
    %518 = vmatmul.bf16.gmra.mxu0 %v374
    %v519 = vpop.f32.mrf.mxu0
    %v520 = vadd.f32 0.0, %v519
    %v521 = vpop.f32.mrf.mxu0
    %v522 = vadd.f32 0.0, %v521
    %523 = vmatmul.bf16.gmra.mxu0 %v375
    %v524 = vpop.f32.mrf.mxu0
    %v525 = vadd.f32 0.0, %v524
    %v526 = vpop.f32.mrf.mxu0
    %v527 = vadd.f32 0.0, %v526
    %528 = vmatmul.bf16.gmra.mxu0 %v376
    %v529 = vpop.f32.mrf.mxu0
    %v530 = vadd.f32 0.0, %v529
    %v531 = vpop.f32.mrf.mxu0
    %v532 = vadd.f32 0.0, %v531
    %533 = vmatmul.bf16.gmra.mxu0 %v377
    %v534 = vpop.f32.mrf.mxu0
    %v535 = vadd.f32 0.0, %v534
    %v536 = vpop.f32.mrf.mxu0
    %v537 = vadd.f32 0.0, %v536
    %538 = vmatmul.bf16.gmra.mxu0 %v378
    %v539 = vpop.f32.mrf.mxu0
    %v540 = vadd.f32 0.0, %v539
    %v541 = vpop.f32.mrf.mxu0
    %v542 = vadd.f32 0.0, %v541
    %543 = vmatmul.bf16.gmra.mxu0 %v379
    %v544 = vpop.f32.mrf.mxu0
    %v545 = vadd.f32 0.0, %v544
    %v546 = vpop.f32.mrf.mxu0
    %v547 = vadd.f32 0.0, %v546
    %548 = vmatmul.bf16.gmra.mxu0 %v380
    %v549 = vpop.f32.mrf.mxu0
    %v550 = vadd.f32 0.0, %v549
    %v551 = vpop.f32.mrf.mxu0
    %v552 = vadd.f32 0.0, %v551
    %553 = vmatmul.bf16.gmra.mxu0 %v381
    %v554 = vpop.f32.mrf.mxu0
    %v555 = vadd.f32 0.0, %v554
    %v556 = vpop.f32.mrf.mxu0
    %v557 = vadd.f32 0.0, %v556
    %558 = vmatmul.bf16.gmra.mxu0 %v382
    %v559 = vpop.f32.mrf.mxu0
    %v560 = vadd.f32 0.0, %v559
    %v561 = vpop.f32.mrf.mxu0
    %v562 = vadd.f32 0.0, %v561
    %563 = vmatmul.bf16.gmra.mxu0 %v383
    %v564 = vpop.f32.mrf.mxu0
    %v565 = vadd.f32 0.0, %v564
    %v566 = vpop.f32.mrf.mxu0
    %v567 = vadd.f32 0.0, %v566
    %568 = vmatmul.bf16.gmra.mxu0 %v384
    %v569 = vpop.f32.mrf.mxu0
    %v570 = vadd.f32 0.0, %v569
    %v571 = vpop.f32.mrf.mxu0
    %v572 = vadd.f32 0.0, %v571
    %573 = vmatmul.bf16.gmra.mxu0 %v385
    %v574 = vpop.f32.mrf.mxu0
    %v575 = vadd.f32 0.0, %v574
    %v576 = vpop.f32.mrf.mxu0
    %v577 = vadd.f32 0.0, %v576
    %578 = vmatmul.bf16.gmra.mxu0 %v386
    %v579 = vpop.f32.mrf.mxu0
    %v580 = vadd.f32 0.0, %v579
    %v581 = vpop.f32.mrf.mxu0
    %v582 = vadd.f32 0.0, %v581
    %583 = vmatmul.bf16.gmra.mxu0 %v387
    %v584 = vpop.f32.mrf.mxu0
    %v585 = vadd.f32 0.0, %v584
    %v586 = vpop.f32.mrf.mxu0
    %v587 = vadd.f32 0.0, %v586
    %588 = vdwg.mxu0
    %v589 = vpack.c.bf16 %v472, %v470
    %v590 = vpack.c.bf16 %v477, %v475
    %v591 = vpack.c.bf16 %v482, %v480
    %v592 = vpack.c.bf16 %v487, %v485
    %v593 = vpack.c.bf16 %v492, %v490
    %v594 = vpack.c.bf16 %v497, %v495
    %v595 = vpack.c.bf16 %v502, %v500
    %v596 = vpack.c.bf16 %v507, %v505
    %v597 = vpack.c.bf16 %v512, %v510
    %v598 = vpack.c.bf16 %v517, %v515
    %v599 = vpack.c.bf16 %v522, %v520
    %v600 = vpack.c.bf16 %v527, %v525
    %v601 = vpack.c.bf16 %v532, %v530
    %v602 = vpack.c.bf16 %v537, %v535
    %v603 = vpack.c.bf16 %v542, %v540
    %v604 = vpack.c.bf16 %v547, %v545
    %v605 = vpack.c.bf16 %v552, %v550
    %v606 = vpack.c.bf16 %v557, %v555
    %v607 = vpack.c.bf16 %v562, %v560
    %v608 = vpack.c.bf16 %v567, %v565
    %v609 = vpack.c.bf16 %v572, %v570
    %v610 = vpack.c.bf16 %v577, %v575
    %v611 = vpack.c.bf16 %v582, %v580
    %v612 = vpack.c.bf16 %v587, %v585
    %v613 = vld [vmem:[%s5] sm:$0x1]
    %v615 = vperm.slane %v613, 0
    %v713 = vunpack.c.l.b16 %v108
    %v714 = vunpack.c.h.b16 %v108
    %v715 = vunpack.c.l.b16 %v109
    %v716 = vunpack.c.l.b16 %v110
    %v717 = vunpack.c.h.b16 %v110
    %v718 = vunpack.c.l.b16 %v111
    %v719 = vunpack.c.l.b16 %v112
    %v720 = vunpack.c.h.b16 %v112
    %v721 = vunpack.c.l.b16 %v113
    %v722 = vunpack.c.l.b16 %v114
    %v723 = vunpack.c.h.b16 %v114
    %v724 = vunpack.c.l.b16 %v115
    %v725 = vunpack.c.l.b16 %v116
    %v726 = vunpack.c.h.b16 %v116
    %v727 = vunpack.c.l.b16 %v117
    %v728 = vunpack.c.l.b16 %v118
    %v729 = vunpack.c.h.b16 %v118
    %v730 = vunpack.c.l.b16 %v119
    %v731 = vunpack.c.l.b16 %v120
    %v732 = vunpack.c.h.b16 %v120
    %v733 = vunpack.c.l.b16 %v121
    %v734 = vunpack.c.l.b16 %v122
    %v735 = vunpack.c.h.b16 %v122
    %v736 = vunpack.c.l.b16 %v123
    %v737 = vunpack.c.l.b16 %v124
    %v738 = vunpack.c.h.b16 %v124
    %v739 = vunpack.c.l.b16 %v125
    %v740 = vunpack.c.l.b16 %v126
    %v741 = vunpack.c.h.b16 %v126
    %v742 = vunpack.c.l.b16 %v127
    %v743 = vunpack.c.l.b16 %v128
    %v744 = vunpack.c.h.b16 %v128
    %v745 = vunpack.c.l.b16 %v129
    %v746 = vunpack.c.l.b16 %v130
    %v747 = vunpack.c.h.b16 %v130
    %v748 = vunpack.c.l.b16 %v131
    %v749 = vunpack.c.l.b16 %v132
    %v750 = vunpack.c.h.b16 %v132
    %v751 = vunpack.c.l.b16 %v133
    %v752 = vunpack.c.l.b16 %v134
    %v753 = vunpack.c.h.b16 %v134
    %v754 = vunpack.c.l.b16 %v135
    %v755 = vunpack.c.l.b16 %v136
    %v756 = vunpack.c.h.b16 %v136
    %v757 = vunpack.c.l.b16 %v137
    %v758 = vunpack.c.l.b16 %v138
    %v759 = vunpack.c.h.b16 %v138
    %v760 = vunpack.c.l.b16 %v139
    %v761 = vunpack.c.l.b16 %v140
    %v762 = vunpack.c.h.b16 %v140
    %v763 = vunpack.c.l.b16 %v141
    %v764 = vunpack.c.l.b16 %v142
    %v765 = vunpack.c.h.b16 %v142
    %v766 = vunpack.c.l.b16 %v143
    %v767 = vunpack.c.l.b16 %v144
    %v768 = vunpack.c.h.b16 %v144
    %v769 = vunpack.c.l.b16 %v145
    %v770 = vunpack.c.l.b16 %v146
    %v771 = vunpack.c.h.b16 %v146
    %v772 = vunpack.c.l.b16 %v147
    %v773 = vunpack.c.l.b16 %v148
    %v774 = vunpack.c.h.b16 %v148
    %v775 = vunpack.c.l.b16 %v149
    %v776 = vunpack.c.l.b16 %v150
    %v777 = vunpack.c.h.b16 %v150
    %v778 = vunpack.c.l.b16 %v151
    %v779 = vunpack.c.l.b16 %v152
    %v780 = vunpack.c.h.b16 %v152
    %v781 = vunpack.c.l.b16 %v153
    %v782 = vunpack.c.l.b16 %v154
    %v783 = vunpack.c.h.b16 %v154
    %v784 = vunpack.c.l.b16 %v155
    %v785 = vunpack.c.l.b16 %v156
    %v786 = vunpack.c.h.b16 %v156
    %v787 = vunpack.c.l.b16 %v157
    %v788 = vunpack.c.l.b16 %v158
    %v789 = vunpack.c.h.b16 %v158
    %v790 = vunpack.c.l.b16 %v159
    %v791 = vunpack.c.l.b16 %v160
    %v792 = vunpack.c.h.b16 %v160
    %v793 = vunpack.c.l.b16 %v161
    %v794 = vunpack.c.l.b16 %v162
    %v795 = vunpack.c.h.b16 %v162
    %v796 = vunpack.c.l.b16 %v163
    %v797 = vunpack.c.l.b16 %v164
    %v798 = vunpack.c.h.b16 %v164
    %v799 = vunpack.c.l.b16 %v165
    %v800 = vunpack.c.l.b16 %v166
    %v801 = vunpack.c.h.b16 %v166
    %v802 = vunpack.c.l.b16 %v167
    %v803 = vunpack.c.l.b16 %v168
    %v804 = vunpack.c.h.b16 %v168
    %v805 = vunpack.c.l.b16 %v169
    %v806 = vunpack.c.l.b16 %v170
    %v807 = vunpack.c.h.b16 %v170
    %v808 = vunpack.c.l.b16 %v171
    %v809 = vunpack.c.l.b16 %v172
    %v810 = vunpack.c.h.b16 %v172
    %v811 = vunpack.c.l.b16 %v173
    %v812 = vunpack.c.l.b16 %v174
    %v813 = vunpack.c.h.b16 %v174
    %v814 = vunpack.c.l.b16 %v175
    %v815 = vunpack.c.l.b16 %v176
    %v816 = vunpack.c.h.b16 %v176
    %v817 = vunpack.c.l.b16 %v177
    %v818 = vunpack.c.l.b16 %v178
    %v819 = vunpack.c.h.b16 %v178
    %v820 = vunpack.c.l.b16 %v179
    %v821 = vunpack.c.l.b16 %v180
    %v822 = vunpack.c.h.b16 %v180
    %v823 = vunpack.c.l.b16 %v181
    %v824 = vunpack.c.l.b16 %v182
    %v825 = vunpack.c.h.b16 %v182
    %v826 = vunpack.c.l.b16 %v183
    %v827 = vunpack.c.l.b16 %v184
    %v828 = vunpack.c.h.b16 %v184
    %v829 = vunpack.c.l.b16 %v185
    %v830 = vunpack.c.l.b16 %v186
    %v831 = vunpack.c.h.b16 %v186
    %v832 = vunpack.c.l.b16 %v187
    %v833 = vunpack.c.l.b16 %v188
    %v834 = vunpack.c.h.b16 %v188
    %v835 = vunpack.c.l.b16 %v189
    %v836 = vunpack.c.l.b16 %v190
    %v837 = vunpack.c.h.b16 %v190
    %v838 = vunpack.c.l.b16 %v191
    %v839 = vunpack.c.l.b16 %v192
    %v840 = vunpack.c.h.b16 %v192
    %v841 = vunpack.c.l.b16 %v193
    %v842 = vunpack.c.l.b16 %v194
    %v843 = vunpack.c.h.b16 %v194
    %v844 = vunpack.c.l.b16 %v195
    %v845 = vunpack.c.l.b16 %v196
    %v846 = vunpack.c.h.b16 %v196
    %v847 = vunpack.c.l.b16 %v197
    %v848 = vunpack.c.l.b16 %v198
    %v849 = vunpack.c.h.b16 %v198
    %v850 = vunpack.c.l.b16 %v199
    %v851 = vunpack.c.l.b16 %v200
    %v852 = vunpack.c.h.b16 %v200
    %v853 = vunpack.c.l.b16 %v201
    %v854 = vunpack.c.l.b16 %v202
    %v855 = vunpack.c.h.b16 %v202
    %v856 = vunpack.c.l.b16 %v203
    %v857 = vpack.c.b16 %v716, %v713
    %v858 = vpack.c.b16 %v717, %v714
    %v859 = vpack.c.b16 %v718, %v715
    %v860 = vpack.c.b16 %v722, %v719
    %v861 = vpack.c.b16 %v723, %v720
    %v862 = vpack.c.b16 %v724, %v721
    %v863 = vpack.c.b16 %v728, %v725
    %v864 = vpack.c.b16 %v729, %v726
    %v865 = vpack.c.b16 %v730, %v727
    %v866 = vpack.c.b16 %v734, %v731
    %v867 = vpack.c.b16 %v735, %v732
    %v868 = vpack.c.b16 %v736, %v733
    %v869 = vpack.c.b16 %v740, %v737
    %v870 = vpack.c.b16 %v741, %v738
    %v871 = vpack.c.b16 %v742, %v739
    %v872 = vpack.c.b16 %v746, %v743
    %v873 = vpack.c.b16 %v747, %v744
    %v874 = vpack.c.b16 %v748, %v745
    %v875 = vpack.c.b16 %v752, %v749
    %v876 = vpack.c.b16 %v753, %v750
    %v877 = vpack.c.b16 %v754, %v751
    %v878 = vpack.c.b16 %v758, %v755
    %v879 = vpack.c.b16 %v759, %v756
    %v880 = vpack.c.b16 %v760, %v757
    %v881 = vpack.c.b16 %v764, %v761
    %v882 = vpack.c.b16 %v765, %v762
    %v883 = vpack.c.b16 %v766, %v763
    %v884 = vpack.c.b16 %v770, %v767
    %v885 = vpack.c.b16 %v771, %v768
    %v886 = vpack.c.b16 %v772, %v769
    %v887 = vpack.c.b16 %v776, %v773
    %v888 = vpack.c.b16 %v777, %v774
    %v889 = vpack.c.b16 %v778, %v775
    %v890 = vpack.c.b16 %v782, %v779
    %v891 = vpack.c.b16 %v783, %v780
    %v892 = vpack.c.b16 %v784, %v781
    %v893 = vpack.c.b16 %v788, %v785
    %v894 = vpack.c.b16 %v789, %v786
    %v895 = vpack.c.b16 %v790, %v787
    %v896 = vpack.c.b16 %v794, %v791
    %v897 = vpack.c.b16 %v795, %v792
    %v898 = vpack.c.b16 %v796, %v793
    %v899 = vpack.c.b16 %v800, %v797
    %v900 = vpack.c.b16 %v801, %v798
    %v901 = vpack.c.b16 %v802, %v799
    %v902 = vpack.c.b16 %v806, %v803
    %v903 = vpack.c.b16 %v807, %v804
    %v904 = vpack.c.b16 %v808, %v805
    %v905 = vpack.c.b16 %v812, %v809
    %v906 = vpack.c.b16 %v813, %v810
    %v907 = vpack.c.b16 %v814, %v811
    %v908 = vpack.c.b16 %v818, %v815
    %v909 = vpack.c.b16 %v819, %v816
    %v910 = vpack.c.b16 %v820, %v817
    %v911 = vpack.c.b16 %v824, %v821
    %v912 = vpack.c.b16 %v825, %v822
    %v913 = vpack.c.b16 %v826, %v823
    %v914 = vpack.c.b16 %v830, %v827
    %v915 = vpack.c.b16 %v831, %v828
    %v916 = vpack.c.b16 %v832, %v829
    %v917 = vpack.c.b16 %v836, %v833
    %v918 = vpack.c.b16 %v837, %v834
    %v919 = vpack.c.b16 %v838, %v835
    %v920 = vpack.c.b16 %v842, %v839
    %v921 = vpack.c.b16 %v843, %v840
    %v922 = vpack.c.b16 %v844, %v841
    %v923 = vpack.c.b16 %v848, %v845
    %v924 = vpack.c.b16 %v849, %v846
    %v925 = vpack.c.b16 %v850, %v847
    %v926 = vpack.c.b16 %v854, %v851
    %v927 = vpack.c.b16 %v855, %v852
    %v928 = vpack.c.b16 %v856, %v853
    %1001 = vmatpush.bf16.msra.mxu0 %v596
    %1002 = vmatpush.bf16.msra.mxu0 %v595
    %1003 = vmatpush.bf16.msra.mxu0 %v594
    %1004 = vmatpush.bf16.msra.mxu0 %v593
    %1005 = vmatpush.bf16.msra.mxu0 %v592
    %1006 = vmatpush.bf16.msra.mxu0 %v591
    %1007 = vmatpush.bf16.msra.mxu0 %v590
    %1008 = vmatpush.bf16.msra.mxu0 %v589
    %1009 = vmatmul.bf16.gmra.mxu0 %v857
    %v1010 = vpop.f32.mrf.mxu0
    %v1011 = vadd.f32 %v615, %v1010
    %v1012 = vpop.f32.mrf.mxu0
    %v1013 = vadd.f32 %v615, %v1012
    %1014 = vmatmul.bf16.gmra.mxu0 %v860
    %v1015 = vpop.f32.mrf.mxu0
    %v1016 = vadd.f32 %v615, %v1015
    %v1017 = vpop.f32.mrf.mxu0
    %v1018 = vadd.f32 %v615, %v1017
    %1019 = vmatmul.bf16.gmra.mxu0 %v863
    %v1020 = vpop.f32.mrf.mxu0
    %v1021 = vadd.f32 %v615, %v1020
    %v1022 = vpop.f32.mrf.mxu0
    %v1023 = vadd.f32 %v615, %v1022
    %1024 = vmatmul.bf16.gmra.mxu0 %v866
    %v1025 = vpop.f32.mrf.mxu0
    %v1026 = vadd.f32 %v615, %v1025
    %v1027 = vpop.f32.mrf.mxu0
    %v1028 = vadd.f32 %v615, %v1027
    %1029 = vmatmul.bf16.gmra.mxu0 %v869
    %v1030 = vpop.f32.mrf.mxu0
    %v1031 = vadd.f32 %v615, %v1030
    %v1032 = vpop.f32.mrf.mxu0
    %v1033 = vadd.f32 %v615, %v1032
    %1034 = vmatmul.bf16.gmra.mxu0 %v872
    %v1035 = vpop.f32.mrf.mxu0
    %v1036 = vadd.f32 %v615, %v1035
    %v1037 = vpop.f32.mrf.mxu0
    %v1038 = vadd.f32 %v615, %v1037
    %1039 = vmatmul.bf16.gmra.mxu0 %v875
    %v1040 = vpop.f32.mrf.mxu0
    %v1041 = vadd.f32 %v615, %v1040
    %v1042 = vpop.f32.mrf.mxu0
    %v1043 = vadd.f32 %v615, %v1042
    %1044 = vmatmul.bf16.gmra.mxu0 %v878
    %v1045 = vpop.f32.mrf.mxu0
    %v1046 = vadd.f32 %v615, %v1045
    %v1047 = vpop.f32.mrf.mxu0
    %v1048 = vadd.f32 %v615, %v1047
    %1049 = vmatmul.bf16.gmra.mxu0 %v881
    %v1050 = vpop.f32.mrf.mxu0
    %v1051 = vadd.f32 %v615, %v1050
    %v1052 = vpop.f32.mrf.mxu0
    %v1053 = vadd.f32 %v615, %v1052
    %1054 = vmatmul.bf16.gmra.mxu0 %v884
    %v1055 = vpop.f32.mrf.mxu0
    %v1056 = vadd.f32 %v615, %v1055
    %v1057 = vpop.f32.mrf.mxu0
    %v1058 = vadd.f32 %v615, %v1057
    %1059 = vmatmul.bf16.gmra.mxu0 %v887
    %v1060 = vpop.f32.mrf.mxu0
    %v1061 = vadd.f32 %v615, %v1060
    %v1062 = vpop.f32.mrf.mxu0
    %v1063 = vadd.f32 %v615, %v1062
    %1064 = vmatmul.bf16.gmra.mxu0 %v890
    %v1065 = vpop.f32.mrf.mxu0
    %v1066 = vadd.f32 %v615, %v1065
    %v1067 = vpop.f32.mrf.mxu0
    %v1068 = vadd.f32 %v615, %v1067
    %1069 = vmatmul.bf16.gmra.mxu0 %v893
    %v1070 = vpop.f32.mrf.mxu0
    %v1071 = vadd.f32 %v615, %v1070
    %v1072 = vpop.f32.mrf.mxu0
    %v1073 = vadd.f32 %v615, %v1072
    %1074 = vmatmul.bf16.gmra.mxu0 %v896
    %v1075 = vpop.f32.mrf.mxu0
    %v1076 = vadd.f32 %v615, %v1075
    %v1077 = vpop.f32.mrf.mxu0
    %v1078 = vadd.f32 %v615, %v1077
    %1079 = vmatmul.bf16.gmra.mxu0 %v899
    %v1080 = vpop.f32.mrf.mxu0
    %v1081 = vadd.f32 %v615, %v1080
    %v1082 = vpop.f32.mrf.mxu0
    %v1083 = vadd.f32 %v615, %v1082
    %1084 = vmatmul.bf16.gmra.mxu0 %v902
    %v1085 = vpop.f32.mrf.mxu0
    %v1086 = vadd.f32 %v615, %v1085
    %v1087 = vpop.f32.mrf.mxu0
    %v1088 = vadd.f32 %v615, %v1087
    %1089 = vmatmul.bf16.gmra.mxu0 %v905
    %v1090 = vpop.f32.mrf.mxu0
    %v1091 = vadd.f32 %v615, %v1090
    %v1092 = vpop.f32.mrf.mxu0
    %v1093 = vadd.f32 %v615, %v1092
    %1094 = vmatmul.bf16.gmra.mxu0 %v908
    %v1095 = vpop.f32.mrf.mxu0
    %v1096 = vadd.f32 %v615, %v1095
    %v1097 = vpop.f32.mrf.mxu0
    %v1098 = vadd.f32 %v615, %v1097
    %1099 = vmatmul.bf16.gmra.mxu0 %v911
    %v1100 = vpop.f32.mrf.mxu0
    %v1101 = vadd.f32 %v615, %v1100
    %v1102 = vpop.f32.mrf.mxu0
    %v1103 = vadd.f32 %v615, %v1102
    %1104 = vmatmul.bf16.gmra.mxu0 %v914
    %v1105 = vpop.f32.mrf.mxu0
    %v1106 = vadd.f32 %v615, %v1105
    %v1107 = vpop.f32.mrf.mxu0
    %v1108 = vadd.f32 %v615, %v1107
    %1109 = vmatmul.bf16.gmra.mxu0 %v917
    %v1110 = vpop.f32.mrf.mxu0
    %v1111 = vadd.f32 %v615, %v1110
    %v1112 = vpop.f32.mrf.mxu0
    %v1113 = vadd.f32 %v615, %v1112
    %1114 = vmatmul.bf16.gmra.mxu0 %v920
    %v1115 = vpop.f32.mrf.mxu0
    %v1116 = vadd.f32 %v615, %v1115
    %v1117 = vpop.f32.mrf.mxu0
    %v1118 = vadd.f32 %v615, %v1117
    %1119 = vmatmul.bf16.gmra.mxu0 %v923
    %v1120 = vpop.f32.mrf.mxu0
    %v1121 = vadd.f32 %v615, %v1120
    %v1122 = vpop.f32.mrf.mxu0
    %v1123 = vadd.f32 %v615, %v1122
    %1124 = vmatmul.bf16.gmra.mxu0 %v926
    %v1125 = vpop.f32.mrf.mxu0
    %v1126 = vadd.f32 %v615, %v1125
    %v1127 = vpop.f32.mrf.mxu0
    %v1128 = vadd.f32 %v615, %v1127
    %1129 = vdwg.mxu0
    %1130 = vmatpush.bf16.msra.mxu0 %v604
    %1131 = vmatpush.bf16.msra.mxu0 %v603
    %1132 = vmatpush.bf16.msra.mxu0 %v602
    %1133 = vmatpush.bf16.msra.mxu0 %v601
    %1134 = vmatpush.bf16.msra.mxu0 %v600
    %1135 = vmatpush.bf16.msra.mxu0 %v599
    %1136 = vmatpush.bf16.msra.mxu0 %v598
    %1137 = vmatpush.bf16.msra.mxu0 %v597
    %1138 = vmatmul.bf16.gmra.mxu0 %v858
    %v1139 = vpop.f32.mrf.mxu0
    %v1140 = vadd.f32 %v1011, %v1139
    %v1141 = vpop.f32.mrf.mxu0
    %v1142 = vadd.f32 %v1013, %v1141
    %1143 = vmatmul.bf16.gmra.mxu0 %v861
    %v1144 = vpop.f32.mrf.mxu0
    %v1145 = vadd.f32 %v1016, %v1144
    %v1146 = vpop.f32.mrf.mxu0
    %v1147 = vadd.f32 %v1018, %v1146
    %1148 = vmatmul.bf16.gmra.mxu0 %v864
    %v1149 = vpop.f32.mrf.mxu0
    %v1150 = vadd.f32 %v1021, %v1149
    %v1151 = vpop.f32.mrf.mxu0
    %v1152 = vadd.f32 %v1023, %v1151
    %1153 = vmatmul.bf16.gmra.mxu0 %v867
    %v1154 = vpop.f32.mrf.mxu0
    %v1155 = vadd.f32 %v1026, %v1154
    %v1156 = vpop.f32.mrf.mxu0
    %v1157 = vadd.f32 %v1028, %v1156
    %1158 = vmatmul.bf16.gmra.mxu0 %v870
    %v1159 = vpop.f32.mrf.mxu0
    %v1160 = vadd.f32 %v1031, %v1159
    %v1161 = vpop.f32.mrf.mxu0
    %v1162 = vadd.f32 %v1033, %v1161
    %1163 = vmatmul.bf16.gmra.mxu0 %v873
    %v1164 = vpop.f32.mrf.mxu0
    %v1165 = vadd.f32 %v1036, %v1164
    %v1166 = vpop.f32.mrf.mxu0
    %v1167 = vadd.f32 %v1038, %v1166
    %1168 = vmatmul.bf16.gmra.mxu0 %v876
    %v1169 = vpop.f32.mrf.mxu0
    %v1170 = vadd.f32 %v1041, %v1169
    %v1171 = vpop.f32.mrf.mxu0
    %v1172 = vadd.f32 %v1043, %v1171
    %1173 = vmatmul.bf16.gmra.mxu0 %v879
    %v1174 = vpop.f32.mrf.mxu0
    %v1175 = vadd.f32 %v1046, %v1174
    %v1176 = vpop.f32.mrf.mxu0
    %v1177 = vadd.f32 %v1048, %v1176
    %1178 = vmatmul.bf16.gmra.mxu0 %v882
    %v1179 = vpop.f32.mrf.mxu0
    %v1180 = vadd.f32 %v1051, %v1179
    %v1181 = vpop.f32.mrf.mxu0
    %v1182 = vadd.f32 %v1053, %v1181
    %1183 = vmatmul.bf16.gmra.mxu0 %v885
    %v1184 = vpop.f32.mrf.mxu0
    %v1185 = vadd.f32 %v1056, %v1184
    %v1186 = vpop.f32.mrf.mxu0
    %v1187 = vadd.f32 %v1058, %v1186
    %1188 = vmatmul.bf16.gmra.mxu0 %v888
    %v1189 = vpop.f32.mrf.mxu0
    %v1190 = vadd.f32 %v1061, %v1189
    %v1191 = vpop.f32.mrf.mxu0
    %v1192 = vadd.f32 %v1063, %v1191
    %1193 = vmatmul.bf16.gmra.mxu0 %v891
    %v1194 = vpop.f32.mrf.mxu0
    %v1195 = vadd.f32 %v1066, %v1194
    %v1196 = vpop.f32.mrf.mxu0
    %v1197 = vadd.f32 %v1068, %v1196
    %1198 = vmatmul.bf16.gmra.mxu0 %v894
    %v1199 = vpop.f32.mrf.mxu0
    %v1200 = vadd.f32 %v1071, %v1199
    %v1201 = vpop.f32.mrf.mxu0
    %v1202 = vadd.f32 %v1073, %v1201
    %1203 = vmatmul.bf16.gmra.mxu0 %v897
    %v1204 = vpop.f32.mrf.mxu0
    %v1205 = vadd.f32 %v1076, %v1204
    %v1206 = vpop.f32.mrf.mxu0
    %v1207 = vadd.f32 %v1078, %v1206
    %1208 = vmatmul.bf16.gmra.mxu0 %v900
    %v1209 = vpop.f32.mrf.mxu0
    %v1210 = vadd.f32 %v1081, %v1209
    %v1211 = vpop.f32.mrf.mxu0
    %v1212 = vadd.f32 %v1083, %v1211
    %1213 = vmatmul.bf16.gmra.mxu0 %v903
    %v1214 = vpop.f32.mrf.mxu0
    %v1215 = vadd.f32 %v1086, %v1214
    %v1216 = vpop.f32.mrf.mxu0
    %v1217 = vadd.f32 %v1088, %v1216
    %1218 = vmatmul.bf16.gmra.mxu0 %v906
    %v1219 = vpop.f32.mrf.mxu0
    %v1220 = vadd.f32 %v1091, %v1219
    %v1221 = vpop.f32.mrf.mxu0
    %v1222 = vadd.f32 %v1093, %v1221
    %1223 = vmatmul.bf16.gmra.mxu0 %v909
    %v1224 = vpop.f32.mrf.mxu0
    %v1225 = vadd.f32 %v1096, %v1224
    %v1226 = vpop.f32.mrf.mxu0
    %v1227 = vadd.f32 %v1098, %v1226
    %1228 = vmatmul.bf16.gmra.mxu0 %v912
    %v1229 = vpop.f32.mrf.mxu0
    %v1230 = vadd.f32 %v1101, %v1229
    %v1231 = vpop.f32.mrf.mxu0
    %v1232 = vadd.f32 %v1103, %v1231
    %1233 = vmatmul.bf16.gmra.mxu0 %v915
    %v1234 = vpop.f32.mrf.mxu0
    %v1235 = vadd.f32 %v1106, %v1234
    %v1236 = vpop.f32.mrf.mxu0
    %v1237 = vadd.f32 %v1108, %v1236
    %1238 = vmatmul.bf16.gmra.mxu0 %v918
    %v1239 = vpop.f32.mrf.mxu0
    %v1240 = vadd.f32 %v1111, %v1239
    %v1241 = vpop.f32.mrf.mxu0
    %v1242 = vadd.f32 %v1113, %v1241
    %1243 = vmatmul.bf16.gmra.mxu0 %v921
    %v1244 = vpop.f32.mrf.mxu0
    %v1245 = vadd.f32 %v1116, %v1244
    %v1246 = vpop.f32.mrf.mxu0
    %v1247 = vadd.f32 %v1118, %v1246
    %1248 = vmatmul.bf16.gmra.mxu0 %v924
    %v1249 = vpop.f32.mrf.mxu0
    %v1250 = vadd.f32 %v1121, %v1249
    %v1251 = vpop.f32.mrf.mxu0
    %v1252 = vadd.f32 %v1123, %v1251
    %1253 = vmatmul.bf16.gmra.mxu0 %v927
    %v1254 = vpop.f32.mrf.mxu0
    %v1255 = vadd.f32 %v1126, %v1254
    %v1256 = vpop.f32.mrf.mxu0
    %v1257 = vadd.f32 %v1128, %v1256
    %1258 = vdwg.mxu0
    %1259 = vmatpush.bf16.msra.mxu0 %v612
    %1260 = vmatpush.bf16.msra.mxu0 %v611
    %1261 = vmatpush.bf16.msra.mxu0 %v610
    %1262 = vmatpush.bf16.msra.mxu0 %v609
    %1263 = vmatpush.bf16.msra.mxu0 %v608
    %1264 = vmatpush.bf16.msra.mxu0 %v607
    %1265 = vmatpush.bf16.msra.mxu0 %v606
    %1266 = vmatpush.bf16.msra.mxu0 %v605
    %1267 = vmatmul.bf16.gmra.mxu0 %v859
    %v1268 = vpop.f32.mrf.mxu0
    %v1269 = vadd.f32 %v1140, %v1268
    %v1270 = vpop.f32.mrf.mxu0
    %v1271 = vadd.f32 %v1142, %v1270
    %1272 = vmatmul.bf16.gmra.mxu0 %v862
    %v1273 = vpop.f32.mrf.mxu0
    %v1274 = vadd.f32 %v1145, %v1273
    %v1275 = vpop.f32.mrf.mxu0
    %v1276 = vadd.f32 %v1147, %v1275
    %1277 = vmatmul.bf16.gmra.mxu0 %v865
    %v1278 = vpop.f32.mrf.mxu0
    %v1279 = vadd.f32 %v1150, %v1278
    %v1280 = vpop.f32.mrf.mxu0
    %v1281 = vadd.f32 %v1152, %v1280
    %1282 = vmatmul.bf16.gmra.mxu0 %v868
    %v1283 = vpop.f32.mrf.mxu0
    %v1284 = vadd.f32 %v1155, %v1283
    %v1285 = vpop.f32.mrf.mxu0
    %v1286 = vadd.f32 %v1157, %v1285
    %1287 = vmatmul.bf16.gmra.mxu0 %v871
    %v1288 = vpop.f32.mrf.mxu0
    %v1289 = vadd.f32 %v1160, %v1288
    %v1290 = vpop.f32.mrf.mxu0
    %v1291 = vadd.f32 %v1162, %v1290
    %1292 = vmatmul.bf16.gmra.mxu0 %v874
    %v1293 = vpop.f32.mrf.mxu0
    %v1294 = vadd.f32 %v1165, %v1293
    %v1295 = vpop.f32.mrf.mxu0
    %v1296 = vadd.f32 %v1167, %v1295
    %1297 = vmatmul.bf16.gmra.mxu0 %v877
    %v1298 = vpop.f32.mrf.mxu0
    %v1299 = vadd.f32 %v1170, %v1298
    %v1300 = vpop.f32.mrf.mxu0
    %v1301 = vadd.f32 %v1172, %v1300
    %1302 = vmatmul.bf16.gmra.mxu0 %v880
    %v1303 = vpop.f32.mrf.mxu0
    %v1304 = vadd.f32 %v1175, %v1303
    %v1305 = vpop.f32.mrf.mxu0
    %v1306 = vadd.f32 %v1177, %v1305
    %1307 = vmatmul.bf16.gmra.mxu0 %v883
    %v1308 = vpop.f32.mrf.mxu0
    %v1309 = vadd.f32 %v1180, %v1308
    %v1310 = vpop.f32.mrf.mxu0
    %v1311 = vadd.f32 %v1182, %v1310
    %1312 = vmatmul.bf16.gmra.mxu0 %v886
    %v1313 = vpop.f32.mrf.mxu0
    %v1314 = vadd.f32 %v1185, %v1313
    %v1315 = vpop.f32.mrf.mxu0
    %v1316 = vadd.f32 %v1187, %v1315
    %1317 = vmatmul.bf16.gmra.mxu0 %v889
    %v1318 = vpop.f32.mrf.mxu0
    %v1319 = vadd.f32 %v1190, %v1318
    %v1320 = vpop.f32.mrf.mxu0
    %v1321 = vadd.f32 %v1192, %v1320
    %1322 = vmatmul.bf16.gmra.mxu0 %v892
    %v1323 = vpop.f32.mrf.mxu0
    %v1324 = vadd.f32 %v1195, %v1323
    %v1325 = vpop.f32.mrf.mxu0
    %v1326 = vadd.f32 %v1197, %v1325
    %1327 = vmatmul.bf16.gmra.mxu0 %v895
    %v1328 = vpop.f32.mrf.mxu0
    %v1329 = vadd.f32 %v1200, %v1328
    %v1330 = vpop.f32.mrf.mxu0
    %v1331 = vadd.f32 %v1202, %v1330
    %1332 = vmatmul.bf16.gmra.mxu0 %v898
    %v1333 = vpop.f32.mrf.mxu0
    %v1334 = vadd.f32 %v1205, %v1333
    %v1335 = vpop.f32.mrf.mxu0
    %v1336 = vadd.f32 %v1207, %v1335
    %1337 = vmatmul.bf16.gmra.mxu0 %v901
    %v1338 = vpop.f32.mrf.mxu0
    %v1339 = vadd.f32 %v1210, %v1338
    %v1340 = vpop.f32.mrf.mxu0
    %v1341 = vadd.f32 %v1212, %v1340
    %1342 = vmatmul.bf16.gmra.mxu0 %v904
    %v1343 = vpop.f32.mrf.mxu0
    %v1344 = vadd.f32 %v1215, %v1343
    %v1345 = vpop.f32.mrf.mxu0
    %v1346 = vadd.f32 %v1217, %v1345
    %1347 = vmatmul.bf16.gmra.mxu0 %v907
    %v1348 = vpop.f32.mrf.mxu0
    %v1349 = vadd.f32 %v1220, %v1348
    %v1350 = vpop.f32.mrf.mxu0
    %v1351 = vadd.f32 %v1222, %v1350
    %1352 = vmatmul.bf16.gmra.mxu0 %v910
    %v1353 = vpop.f32.mrf.mxu0
    %v1354 = vadd.f32 %v1225, %v1353
    %v1355 = vpop.f32.mrf.mxu0
    %v1356 = vadd.f32 %v1227, %v1355
    %1357 = vmatmul.bf16.gmra.mxu0 %v913
    %v1358 = vpop.f32.mrf.mxu0
    %v1359 = vadd.f32 %v1230, %v1358
    %v1360 = vpop.f32.mrf.mxu0
    %v1361 = vadd.f32 %v1232, %v1360
    %1362 = vmatmul.bf16.gmra.mxu0 %v916
    %v1363 = vpop.f32.mrf.mxu0
    %v1364 = vadd.f32 %v1235, %v1363
    %v1365 = vpop.f32.mrf.mxu0
    %v1366 = vadd.f32 %v1237, %v1365
    %1367 = vmatmul.bf16.gmra.mxu0 %v919
    %v1368 = vpop.f32.mrf.mxu0
    %v1369 = vadd.f32 %v1240, %v1368
    %v1370 = vpop.f32.mrf.mxu0
    %v1371 = vadd.f32 %v1242, %v1370
    %1372 = vmatmul.bf16.gmra.mxu0 %v922
    %v1373 = vpop.f32.mrf.mxu0
    %v1374 = vadd.f32 %v1245, %v1373
    %v1375 = vpop.f32.mrf.mxu0
    %v1376 = vadd.f32 %v1247, %v1375
    %1377 = vmatmul.bf16.gmra.mxu0 %v925
    %v1378 = vpop.f32.mrf.mxu0
    %v1379 = vadd.f32 %v1250, %v1378
    %v1380 = vpop.f32.mrf.mxu0
    %v1381 = vadd.f32 %v1252, %v1380
    %1382 = vmatmul.bf16.gmra.mxu0 %v928
    %v1383 = vpop.f32.mrf.mxu0
    %v1384 = vadd.f32 %v1255, %v1383
    %v1385 = vpop.f32.mrf.mxu0
    %v1386 = vadd.f32 %v1257, %v1385
    %1387 = vdwg.mxu0
    %v1388 = vmax.f32 %v1269, 0.0
    %v1389 = vmax.f32 %v1271, 0.0
    %v1390 = vmax.f32 %v1274, 0.0
    %v1391 = vmax.f32 %v1276, 0.0
    %v1392 = vmax.f32 %v1279, 0.0
    %v1393 = vmax.f32 %v1281, 0.0
    %v1394 = vmax.f32 %v1284, 0.0
    %v1395 = vmax.f32 %v1286, 0.0
    %v1396 = vmax.f32 %v1289, 0.0
    %v1397 = vmax.f32 %v1291, 0.0
    %v1398 = vmax.f32 %v1294, 0.0
    %v1399 = vmax.f32 %v1296, 0.0
    %v1400 = vmax.f32 %v1299, 0.0
    %v1401 = vmax.f32 %v1301, 0.0
    %v1402 = vmax.f32 %v1304, 0.0
    %v1403 = vmax.f32 %v1306, 0.0
    %v1404 = vmax.f32 %v1309, 0.0
    %v1405 = vmax.f32 %v1311, 0.0
    %v1406 = vmax.f32 %v1314, 0.0
    %v1407 = vmax.f32 %v1316, 0.0
    %v1408 = vmax.f32 %v1319, 0.0
    %v1409 = vmax.f32 %v1321, 0.0
    %v1410 = vmax.f32 %v1324, 0.0
    %v1411 = vmax.f32 %v1326, 0.0
    %v1412 = vmax.f32 %v1329, 0.0
    %v1413 = vmax.f32 %v1331, 0.0
    %v1414 = vmax.f32 %v1334, 0.0
    %v1415 = vmax.f32 %v1336, 0.0
    %v1416 = vmax.f32 %v1339, 0.0
    %v1417 = vmax.f32 %v1341, 0.0
    %v1418 = vmax.f32 %v1344, 0.0
    %v1419 = vmax.f32 %v1346, 0.0
    %v1420 = vmax.f32 %v1349, 0.0
    %v1421 = vmax.f32 %v1351, 0.0
    %v1422 = vmax.f32 %v1354, 0.0
    %v1423 = vmax.f32 %v1356, 0.0
    %v1424 = vmax.f32 %v1359, 0.0
    %v1425 = vmax.f32 %v1361, 0.0
    %v1426 = vmax.f32 %v1364, 0.0
    %v1427 = vmax.f32 %v1366, 0.0
    %v1428 = vmax.f32 %v1369, 0.0
    %v1429 = vmax.f32 %v1371, 0.0
    %v1430 = vmax.f32 %v1374, 0.0
    %v1431 = vmax.f32 %v1376, 0.0
    %v1432 = vmax.f32 %v1379, 0.0
    %v1433 = vmax.f32 %v1381, 0.0
    %v1434 = vmax.f32 %v1384, 0.0
    %v1435 = vmax.f32 %v1386, 0.0
    %v1436 = vpack.c.bf16 %v1389, %v1388
    %v1437 = vpack.c.bf16 %v1391, %v1390
    %v1438 = vpack.c.bf16 %v1393, %v1392
    %v1439 = vpack.c.bf16 %v1395, %v1394
    %v1440 = vpack.c.bf16 %v1397, %v1396
    %v1441 = vpack.c.bf16 %v1399, %v1398
    %v1442 = vpack.c.bf16 %v1401, %v1400
    %v1443 = vpack.c.bf16 %v1403, %v1402
    %v1444 = vpack.c.bf16 %v1405, %v1404
    %v1445 = vpack.c.bf16 %v1407, %v1406
    %v1446 = vpack.c.bf16 %v1409, %v1408
    %v1447 = vpack.c.bf16 %v1411, %v1410
    %v1448 = vpack.c.bf16 %v1413, %v1412
    %v1449 = vpack.c.bf16 %v1415, %v1414
    %v1450 = vpack.c.bf16 %v1417, %v1416
    %v1451 = vpack.c.bf16 %v1419, %v1418
    %v1452 = vpack.c.bf16 %v1421, %v1420
    %v1453 = vpack.c.bf16 %v1423, %v1422
    %v1454 = vpack.c.bf16 %v1425, %v1424
    %v1455 = vpack.c.bf16 %v1427, %v1426
    %v1456 = vpack.c.bf16 %v1429, %v1428
    %v1457 = vpack.c.bf16 %v1431, %v1430
    %v1458 = vpack.c.bf16 %v1433, %v1432
    %v1459 = vpack.c.bf16 %v1435, %v1434
    %v1460 = vld [vmem:[#allocation8] sm:$0xf]
    %v1461 = vld [vmem:[#allocation8 + $0x4] sm:$0xf]
    %v1462 = vld [vmem:[#allocation8 + $0x8] sm:$0xf]
    %v1463 = vld [vmem:[#allocation8 + $0xc] sm:$0xf]
    %v1464 = vld [vmem:[#allocation8 + $0x10] sm:$0xf]
    %v1465 = vld [vmem:[#allocation8 + $0x14] sm:$0xf]
    %v1466 = vld [vmem:[#allocation8 + $0x18] sm:$0xf]
    %v1467 = vld [vmem:[#allocation8 + $0x1c] sm:$0xf]
    %v1468 = vld [vmem:[#allocation8 + $0x20] sm:$0xf]
    %v1469 = vld [vmem:[#allocation8 + $0x24] sm:$0xf]
    %v1470 = vld [vmem:[#allocation8 + $0x28] sm:$0xf]
    %v1471 = vld [vmem:[#allocation8 + $0x2c] sm:$0xf]
    %v1472 = vld [vmem:[#allocation8 + $0x30] sm:$0xf]
    %v1473 = vld [vmem:[#allocation8 + $0x34] sm:$0xf]
    %v1474 = vld [vmem:[#allocation8 + $0x38] sm:$0xf]
    %v1475 = vld [vmem:[#allocation8 + $0x3c] sm:$0xf]
    %v1492 = vunpack.c.l.b16 %v1460
    %v1493 = vunpack.c.l.b16 %v1461
    %v1494 = vunpack.c.l.b16 %v1462
    %v1495 = vunpack.c.l.b16 %v1463
    %v1496 = vunpack.c.l.b16 %v1464
    %v1497 = vunpack.c.l.b16 %v1465
    %v1498 = vunpack.c.l.b16 %v1466
    %v1499 = vunpack.c.l.b16 %v1467
    %v1500 = vunpack.c.l.b16 %v1468
    %v1501 = vunpack.c.l.b16 %v1469
    %v1502 = vunpack.c.l.b16 %v1470
    %v1503 = vunpack.c.l.b16 %v1471
    %v1504 = vunpack.c.l.b16 %v1472
    %v1505 = vunpack.c.l.b16 %v1473
    %v1506 = vunpack.c.l.b16 %v1474
    %v1507 = vunpack.c.l.b16 %v1475
    %v1508 = vpack.c.b16 %v1493, %v1492
    %v1509 = vpack.c.b16 %v1495, %v1494
    %v1510 = vpack.c.b16 %v1497, %v1496
    %v1511 = vpack.c.b16 %v1499, %v1498
    %v1512 = vpack.c.b16 %v1501, %v1500
    %v1513 = vpack.c.b16 %v1503, %v1502
    %v1514 = vpack.c.b16 %v1505, %v1504
    %v1515 = vpack.c.b16 %v1507, %v1506
    %1524 = vmatpush.bf16.msra.mxu0 %v1515
    %1525 = vmatpush.bf16.msra.mxu0 %v1514
    %1526 = vmatpush.bf16.msra.mxu0 %v1513
    %1527 = vmatpush.bf16.msra.mxu0 %v1512
    %1528 = vmatpush.bf16.msra.mxu0 %v1511
    %1529 = vmatpush.bf16.msra.mxu0 %v1510
    %1530 = vmatpush.bf16.msra.mxu0 %v1509
    %1531 = vmatpush.bf16.msra.mxu0 %v1508
    %1532 = vmatmul.bf16.gmra.mxu0 %v1436
    %v1533 = vpop.f32.mrf.mxu0
    %v1534 = vadd.f32 0.0, %v1533
    %v1535 = vpop.f32.mrf.mxu0
    %v1536 = vadd.f32 0.0, %v1535
    %1537 = vmatmul.bf16.gmra.mxu0 %v1437
    %v1538 = vpop.f32.mrf.mxu0
    %v1539 = vadd.f32 0.0, %v1538
    %v1540 = vpop.f32.mrf.mxu0
    %v1541 = vadd.f32 0.0, %v1540
    %1542 = vmatmul.bf16.gmra.mxu0 %v1438
    %v1543 = vpop.f32.mrf.mxu0
    %v1544 = vadd.f32 0.0, %v1543
    %v1545 = vpop.f32.mrf.mxu0
    %v1546 = vadd.f32 0.0, %v1545
    %1547 = vmatmul.bf16.gmra.mxu0 %v1439
    %v1548 = vpop.f32.mrf.mxu0
    %v1549 = vadd.f32 0.0, %v1548
    %v1550 = vpop.f32.mrf.mxu0
    %v1551 = vadd.f32 0.0, %v1550
    %1552 = vmatmul.bf16.gmra.mxu0 %v1440
    %v1553 = vpop.f32.mrf.mxu0
    %v1554 = vadd.f32 0.0, %v1553
    %v1555 = vpop.f32.mrf.mxu0
    %v1556 = vadd.f32 0.0, %v1555
    %1557 = vmatmul.bf16.gmra.mxu0 %v1441
    %v1558 = vpop.f32.mrf.mxu0
    %v1559 = vadd.f32 0.0, %v1558
    %v1560 = vpop.f32.mrf.mxu0
    %v1561 = vadd.f32 0.0, %v1560
    %1562 = vmatmul.bf16.gmra.mxu0 %v1442
    %v1563 = vpop.f32.mrf.mxu0
    %v1564 = vadd.f32 0.0, %v1563
    %v1565 = vpop.f32.mrf.mxu0
    %v1566 = vadd.f32 0.0, %v1565
    %1567 = vmatmul.bf16.gmra.mxu0 %v1443
    %v1568 = vpop.f32.mrf.mxu0
    %v1569 = vadd.f32 0.0, %v1568
    %v1570 = vpop.f32.mrf.mxu0
    %v1571 = vadd.f32 0.0, %v1570
    %1572 = vmatmul.bf16.gmra.mxu0 %v1444
    %v1573 = vpop.f32.mrf.mxu0
    %v1574 = vadd.f32 0.0, %v1573
    %v1575 = vpop.f32.mrf.mxu0
    %v1576 = vadd.f32 0.0, %v1575
    %1577 = vmatmul.bf16.gmra.mxu0 %v1445
    %v1578 = vpop.f32.mrf.mxu0
    %v1579 = vadd.f32 0.0, %v1578
    %v1580 = vpop.f32.mrf.mxu0
    %v1581 = vadd.f32 0.0, %v1580
    %1582 = vmatmul.bf16.gmra.mxu0 %v1446
    %v1583 = vpop.f32.mrf.mxu0
    %v1584 = vadd.f32 0.0, %v1583
    %v1585 = vpop.f32.mrf.mxu0
    %v1586 = vadd.f32 0.0, %v1585
    %1587 = vmatmul.bf16.gmra.mxu0 %v1447
    %v1588 = vpop.f32.mrf.mxu0
    %v1589 = vadd.f32 0.0, %v1588
    %v1590 = vpop.f32.mrf.mxu0
    %v1591 = vadd.f32 0.0, %v1590
    %1592 = vmatmul.bf16.gmra.mxu0 %v1448
    %v1593 = vpop.f32.mrf.mxu0
    %v1594 = vadd.f32 0.0, %v1593
    %v1595 = vpop.f32.mrf.mxu0
    %v1596 = vadd.f32 0.0, %v1595
    %1597 = vmatmul.bf16.gmra.mxu0 %v1449
    %v1598 = vpop.f32.mrf.mxu0
    %v1599 = vadd.f32 0.0, %v1598
    %v1600 = vpop.f32.mrf.mxu0
    %v1601 = vadd.f32 0.0, %v1600
    %1602 = vmatmul.bf16.gmra.mxu0 %v1450
    %v1603 = vpop.f32.mrf.mxu0
    %v1604 = vadd.f32 0.0, %v1603
    %v1605 = vpop.f32.mrf.mxu0
    %v1606 = vadd.f32 0.0, %v1605
    %1607 = vmatmul.bf16.gmra.mxu0 %v1451
    %v1608 = vpop.f32.mrf.mxu0
    %v1609 = vadd.f32 0.0, %v1608
    %v1610 = vpop.f32.mrf.mxu0
    %v1611 = vadd.f32 0.0, %v1610
    %1612 = vmatmul.bf16.gmra.mxu0 %v1452
    %v1613 = vpop.f32.mrf.mxu0
    %v1614 = vadd.f32 0.0, %v1613
    %v1615 = vpop.f32.mrf.mxu0
    %v1616 = vadd.f32 0.0, %v1615
    %1617 = vmatmul.bf16.gmra.mxu0 %v1453
    %v1618 = vpop.f32.mrf.mxu0
    %v1619 = vadd.f32 0.0, %v1618
    %v1620 = vpop.f32.mrf.mxu0
    %v1621 = vadd.f32 0.0, %v1620
    %1622 = vmatmul.bf16.gmra.mxu0 %v1454
    %v1623 = vpop.f32.mrf.mxu0
    %v1624 = vadd.f32 0.0, %v1623
    %v1625 = vpop.f32.mrf.mxu0
    %v1626 = vadd.f32 0.0, %v1625
    %1627 = vmatmul.bf16.gmra.mxu0 %v1455
    %v1628 = vpop.f32.mrf.mxu0
    %v1629 = vadd.f32 0.0, %v1628
    %v1630 = vpop.f32.mrf.mxu0
    %v1631 = vadd.f32 0.0, %v1630
    %1632 = vmatmul.bf16.gmra.mxu0 %v1456
    %v1633 = vpop.f32.mrf.mxu0
    %v1634 = vadd.f32 0.0, %v1633
    %v1635 = vpop.f32.mrf.mxu0
    %v1636 = vadd.f32 0.0, %v1635
    %1637 = vmatmul.bf16.gmra.mxu0 %v1457
    %v1638 = vpop.f32.mrf.mxu0
    %v1639 = vadd.f32 0.0, %v1638
    %v1640 = vpop.f32.mrf.mxu0
    %v1641 = vadd.f32 0.0, %v1640
    %1642 = vmatmul.bf16.gmra.mxu0 %v1458
    %v1643 = vpop.f32.mrf.mxu0
    %v1644 = vadd.f32 0.0, %v1643
    %v1645 = vpop.f32.mrf.mxu0
    %v1646 = vadd.f32 0.0, %v1645
    %1647 = vmatmul.bf16.gmra.mxu0 %v1459
    %v1648 = vpop.f32.mrf.mxu0
    %v1649 = vadd.f32 0.0, %v1648
    %v1650 = vpop.f32.mrf.mxu0
    %v1651 = vadd.f32 0.0, %v1650
    %1652 = vdwg.mxu0
    %v1653 = vpack.c.bf16 %v1536, %v1534
    %v1654 = vpack.c.bf16 %v1541, %v1539
    %v1655 = vpack.c.bf16 %v1546, %v1544
    %v1656 = vpack.c.bf16 %v1551, %v1549
    %v1657 = vpack.c.bf16 %v1556, %v1554
    %v1658 = vpack.c.bf16 %v1561, %v1559
    %v1659 = vpack.c.bf16 %v1566, %v1564
    %v1660 = vpack.c.bf16 %v1571, %v1569
    %v1661 = vpack.c.bf16 %v1576, %v1574
    %v1662 = vpack.c.bf16 %v1581, %v1579
    %v1663 = vpack.c.bf16 %v1586, %v1584
    %v1664 = vpack.c.bf16 %v1591, %v1589
    %v1665 = vpack.c.bf16 %v1596, %v1594
    %v1666 = vpack.c.bf16 %v1601, %v1599
    %v1667 = vpack.c.bf16 %v1606, %v1604
    %v1668 = vpack.c.bf16 %v1611, %v1609
    %v1669 = vpack.c.bf16 %v1616, %v1614
    %v1670 = vpack.c.bf16 %v1621, %v1619
    %v1671 = vpack.c.bf16 %v1626, %v1624
    %v1672 = vpack.c.bf16 %v1631, %v1629
    %v1673 = vpack.c.bf16 %v1636, %v1634
    %v1674 = vpack.c.bf16 %v1641, %v1639
    %v1675 = vpack.c.bf16 %v1646, %v1644
    %v1676 = vpack.c.bf16 %v1651, %v1649
    %v1677 = vld [vmem:[%s6] sm:$0x1]
    %v1679 = vperm.slane %v1677, 0
    %1681 = vmatpush.bf16.msra.mxu0 %v1660
    %1682 = vmatpush.bf16.msra.mxu0 %v1659
    %1683 = vmatpush.bf16.msra.mxu0 %v1658
    %1684 = vmatpush.bf16.msra.mxu0 %v1657
    %1685 = vmatpush.bf16.msra.mxu0 %v1656
    %1686 = vmatpush.bf16.msra.mxu0 %v1655
    %1687 = vmatpush.bf16.msra.mxu0 %v1654
    %1688 = vmatpush.bf16.msra.mxu0 %v1653
    %1689 = vmatmul.bf16.gmra.mxu0 %v857
    %v1690 = vpop.f32.mrf.mxu0
    %v1691 = vadd.f32 %v1679, %v1690
    %v1692 = vpop.f32.mrf.mxu0
    %v1693 = vadd.f32 %v1679, %v1692
    %1694 = vmatmul.bf16.gmra.mxu0 %v860
    %v1695 = vpop.f32.mrf.mxu0
    %v1696 = vadd.f32 %v1679, %v1695
    %v1697 = vpop.f32.mrf.mxu0
    %v1698 = vadd.f32 %v1679, %v1697
    %1699 = vmatmul.bf16.gmra.mxu0 %v863
    %v1700 = vpop.f32.mrf.mxu0
    %v1701 = vadd.f32 %v1679, %v1700
    %v1702 = vpop.f32.mrf.mxu0
    %v1703 = vadd.f32 %v1679, %v1702
    %1704 = vmatmul.bf16.gmra.mxu0 %v866
    %v1705 = vpop.f32.mrf.mxu0
    %v1706 = vadd.f32 %v1679, %v1705
    %v1707 = vpop.f32.mrf.mxu0
    %v1708 = vadd.f32 %v1679, %v1707
    %1709 = vmatmul.bf16.gmra.mxu0 %v869
    %v1710 = vpop.f32.mrf.mxu0
    %v1711 = vadd.f32 %v1679, %v1710
    %v1712 = vpop.f32.mrf.mxu0
    %v1713 = vadd.f32 %v1679, %v1712
    %1714 = vmatmul.bf16.gmra.mxu0 %v872
    %v1715 = vpop.f32.mrf.mxu0
    %v1716 = vadd.f32 %v1679, %v1715
    %v1717 = vpop.f32.mrf.mxu0
    %v1718 = vadd.f32 %v1679, %v1717
    %1719 = vmatmul.bf16.gmra.mxu0 %v875
    %v1720 = vpop.f32.mrf.mxu0
    %v1721 = vadd.f32 %v1679, %v1720
    %v1722 = vpop.f32.mrf.mxu0
    %v1723 = vadd.f32 %v1679, %v1722
    %1724 = vmatmul.bf16.gmra.mxu0 %v878
    %v1725 = vpop.f32.mrf.mxu0
    %v1726 = vadd.f32 %v1679, %v1725
    %v1727 = vpop.f32.mrf.mxu0
    %v1728 = vadd.f32 %v1679, %v1727
    %1729 = vmatmul.bf16.gmra.mxu0 %v881
    %v1730 = vpop.f32.mrf.mxu0
    %v1731 = vadd.f32 %v1679, %v1730
    %v1732 = vpop.f32.mrf.mxu0
    %v1733 = vadd.f32 %v1679, %v1732
    %1734 = vmatmul.bf16.gmra.mxu0 %v884
    %v1735 = vpop.f32.mrf.mxu0
    %v1736 = vadd.f32 %v1679, %v1735
    %v1737 = vpop.f32.mrf.mxu0
    %v1738 = vadd.f32 %v1679, %v1737
    %1739 = vmatmul.bf16.gmra.mxu0 %v887
    %v1740 = vpop.f32.mrf.mxu0
    %v1741 = vadd.f32 %v1679, %v1740
    %v1742 = vpop.f32.mrf.mxu0
    %v1743 = vadd.f32 %v1679, %v1742
    %1744 = vmatmul.bf16.gmra.mxu0 %v890
    %v1745 = vpop.f32.mrf.mxu0
    %v1746 = vadd.f32 %v1679, %v1745
    %v1747 = vpop.f32.mrf.mxu0
    %v1748 = vadd.f32 %v1679, %v1747
    %1749 = vmatmul.bf16.gmra.mxu0 %v893
    %v1750 = vpop.f32.mrf.mxu0
    %v1751 = vadd.f32 %v1679, %v1750
    %v1752 = vpop.f32.mrf.mxu0
    %v1753 = vadd.f32 %v1679, %v1752
    %1754 = vmatmul.bf16.gmra.mxu0 %v896
    %v1755 = vpop.f32.mrf.mxu0
    %v1756 = vadd.f32 %v1679, %v1755
    %v1757 = vpop.f32.mrf.mxu0
    %v1758 = vadd.f32 %v1679, %v1757
    %1759 = vmatmul.bf16.gmra.mxu0 %v899
    %v1760 = vpop.f32.mrf.mxu0
    %v1761 = vadd.f32 %v1679, %v1760
    %v1762 = vpop.f32.mrf.mxu0
    %v1763 = vadd.f32 %v1679, %v1762
    %1764 = vmatmul.bf16.gmra.mxu0 %v902
    %v1765 = vpop.f32.mrf.mxu0
    %v1766 = vadd.f32 %v1679, %v1765
    %v1767 = vpop.f32.mrf.mxu0
    %v1768 = vadd.f32 %v1679, %v1767
    %1769 = vmatmul.bf16.gmra.mxu0 %v905
    %v1770 = vpop.f32.mrf.mxu0
    %v1771 = vadd.f32 %v1679, %v1770
    %v1772 = vpop.f32.mrf.mxu0
    %v1773 = vadd.f32 %v1679, %v1772
    %1774 = vmatmul.bf16.gmra.mxu0 %v908
    %v1775 = vpop.f32.mrf.mxu0
    %v1776 = vadd.f32 %v1679, %v1775
    %v1777 = vpop.f32.mrf.mxu0
    %v1778 = vadd.f32 %v1679, %v1777
    %1779 = vmatmul.bf16.gmra.mxu0 %v911
    %v1780 = vpop.f32.mrf.mxu0
    %v1781 = vadd.f32 %v1679, %v1780
    %v1782 = vpop.f32.mrf.mxu0
    %v1783 = vadd.f32 %v1679, %v1782
    %1784 = vmatmul.bf16.gmra.mxu0 %v914
    %v1785 = vpop.f32.mrf.mxu0
    %v1786 = vadd.f32 %v1679, %v1785
    %v1787 = vpop.f32.mrf.mxu0
    %v1788 = vadd.f32 %v1679, %v1787
    %1789 = vmatmul.bf16.gmra.mxu0 %v917
    %v1790 = vpop.f32.mrf.mxu0
    %v1791 = vadd.f32 %v1679, %v1790
    %v1792 = vpop.f32.mrf.mxu0
    %v1793 = vadd.f32 %v1679, %v1792
    %1794 = vmatmul.bf16.gmra.mxu0 %v920
    %v1795 = vpop.f32.mrf.mxu0
    %v1796 = vadd.f32 %v1679, %v1795
    %v1797 = vpop.f32.mrf.mxu0
    %v1798 = vadd.f32 %v1679, %v1797
    %1799 = vmatmul.bf16.gmra.mxu0 %v923
    %v1800 = vpop.f32.mrf.mxu0
    %v1801 = vadd.f32 %v1679, %v1800
    %v1802 = vpop.f32.mrf.mxu0
    %v1803 = vadd.f32 %v1679, %v1802
    %1804 = vmatmul.bf16.gmra.mxu0 %v926
    %v1805 = vpop.f32.mrf.mxu0
    %v1806 = vadd.f32 %v1679, %v1805
    %v1807 = vpop.f32.mrf.mxu0
    %v1808 = vadd.f32 %v1679, %v1807
    %1809 = vdwg.mxu0
    %1810 = vmatpush.bf16.msra.mxu0 %v1668
    %1811 = vmatpush.bf16.msra.mxu0 %v1667
    %1812 = vmatpush.bf16.msra.mxu0 %v1666
    %1813 = vmatpush.bf16.msra.mxu0 %v1665
    %1814 = vmatpush.bf16.msra.mxu0 %v1664
    %1815 = vmatpush.bf16.msra.mxu0 %v1663
    %1816 = vmatpush.bf16.msra.mxu0 %v1662
    %1817 = vmatpush.bf16.msra.mxu0 %v1661
    %1818 = vmatmul.bf16.gmra.mxu0 %v858
    %v1819 = vpop.f32.mrf.mxu0
    %v1820 = vadd.f32 %v1691, %v1819
    %v1821 = vpop.f32.mrf.mxu0
    %v1822 = vadd.f32 %v1693, %v1821
    %1823 = vmatmul.bf16.gmra.mxu0 %v861
    %v1824 = vpop.f32.mrf.mxu0
    %v1825 = vadd.f32 %v1696, %v1824
    %v1826 = vpop.f32.mrf.mxu0
    %v1827 = vadd.f32 %v1698, %v1826
    %1828 = vmatmul.bf16.gmra.mxu0 %v864
    %v1829 = vpop.f32.mrf.mxu0
    %v1830 = vadd.f32 %v1701, %v1829
    %v1831 = vpop.f32.mrf.mxu0
    %v1832 = vadd.f32 %v1703, %v1831
    %1833 = vmatmul.bf16.gmra.mxu0 %v867
    %v1834 = vpop.f32.mrf.mxu0
    %v1835 = vadd.f32 %v1706, %v1834
    %v1836 = vpop.f32.mrf.mxu0
    %v1837 = vadd.f32 %v1708, %v1836
    %1838 = vmatmul.bf16.gmra.mxu0 %v870
    %v1839 = vpop.f32.mrf.mxu0
    %v1840 = vadd.f32 %v1711, %v1839
    %v1841 = vpop.f32.mrf.mxu0
    %v1842 = vadd.f32 %v1713, %v1841
    %1843 = vmatmul.bf16.gmra.mxu0 %v873
    %v1844 = vpop.f32.mrf.mxu0
    %v1845 = vadd.f32 %v1716, %v1844
    %v1846 = vpop.f32.mrf.mxu0
    %v1847 = vadd.f32 %v1718, %v1846
    %1848 = vmatmul.bf16.gmra.mxu0 %v876
    %v1849 = vpop.f32.mrf.mxu0
    %v1850 = vadd.f32 %v1721, %v1849
    %v1851 = vpop.f32.mrf.mxu0
    %v1852 = vadd.f32 %v1723, %v1851
    %1853 = vmatmul.bf16.gmra.mxu0 %v879
    %v1854 = vpop.f32.mrf.mxu0
    %v1855 = vadd.f32 %v1726, %v1854
    %v1856 = vpop.f32.mrf.mxu0
    %v1857 = vadd.f32 %v1728, %v1856
    %1858 = vmatmul.bf16.gmra.mxu0 %v882
    %v1859 = vpop.f32.mrf.mxu0
    %v1860 = vadd.f32 %v1731, %v1859
    %v1861 = vpop.f32.mrf.mxu0
    %v1862 = vadd.f32 %v1733, %v1861
    %1863 = vmatmul.bf16.gmra.mxu0 %v885
    %v1864 = vpop.f32.mrf.mxu0
    %v1865 = vadd.f32 %v1736, %v1864
    %v1866 = vpop.f32.mrf.mxu0
    %v1867 = vadd.f32 %v1738, %v1866
    %1868 = vmatmul.bf16.gmra.mxu0 %v888
    %v1869 = vpop.f32.mrf.mxu0
    %v1870 = vadd.f32 %v1741, %v1869
    %v1871 = vpop.f32.mrf.mxu0
    %v1872 = vadd.f32 %v1743, %v1871
    %1873 = vmatmul.bf16.gmra.mxu0 %v891
    %v1874 = vpop.f32.mrf.mxu0
    %v1875 = vadd.f32 %v1746, %v1874
    %v1876 = vpop.f32.mrf.mxu0
    %v1877 = vadd.f32 %v1748, %v1876
    %1878 = vmatmul.bf16.gmra.mxu0 %v894
    %v1879 = vpop.f32.mrf.mxu0
    %v1880 = vadd.f32 %v1751, %v1879
    %v1881 = vpop.f32.mrf.mxu0
    %v1882 = vadd.f32 %v1753, %v1881
    %1883 = vmatmul.bf16.gmra.mxu0 %v897
    %v1884 = vpop.f32.mrf.mxu0
    %v1885 = vadd.f32 %v1756, %v1884
    %v1886 = vpop.f32.mrf.mxu0
    %v1887 = vadd.f32 %v1758, %v1886
    %1888 = vmatmul.bf16.gmra.mxu0 %v900
    %v1889 = vpop.f32.mrf.mxu0
    %v1890 = vadd.f32 %v1761, %v1889
    %v1891 = vpop.f32.mrf.mxu0
    %v1892 = vadd.f32 %v1763, %v1891
    %1893 = vmatmul.bf16.gmra.mxu0 %v903
    %v1894 = vpop.f32.mrf.mxu0
    %v1895 = vadd.f32 %v1766, %v1894
    %v1896 = vpop.f32.mrf.mxu0
    %v1897 = vadd.f32 %v1768, %v1896
    %1898 = vmatmul.bf16.gmra.mxu0 %v906
    %v1899 = vpop.f32.mrf.mxu0
    %v1900 = vadd.f32 %v1771, %v1899
    %v1901 = vpop.f32.mrf.mxu0
    %v1902 = vadd.f32 %v1773, %v1901
    %1903 = vmatmul.bf16.gmra.mxu0 %v909
    %v1904 = vpop.f32.mrf.mxu0
    %v1905 = vadd.f32 %v1776, %v1904
    %v1906 = vpop.f32.mrf.mxu0
    %v1907 = vadd.f32 %v1778, %v1906
    %1908 = vmatmul.bf16.gmra.mxu0 %v912
    %v1909 = vpop.f32.mrf.mxu0
    %v1910 = vadd.f32 %v1781, %v1909
    %v1911 = vpop.f32.mrf.mxu0
    %v1912 = vadd.f32 %v1783, %v1911
    %1913 = vmatmul.bf16.gmra.mxu0 %v915
    %v1914 = vpop.f32.mrf.mxu0
    %v1915 = vadd.f32 %v1786, %v1914
    %v1916 = vpop.f32.mrf.mxu0
    %v1917 = vadd.f32 %v1788, %v1916
    %1918 = vmatmul.bf16.gmra.mxu0 %v918
    %v1919 = vpop.f32.mrf.mxu0
    %v1920 = vadd.f32 %v1791, %v1919
    %v1921 = vpop.f32.mrf.mxu0
    %v1922 = vadd.f32 %v1793, %v1921
    %1923 = vmatmul.bf16.gmra.mxu0 %v921
    %v1924 = vpop.f32.mrf.mxu0
    %v1925 = vadd.f32 %v1796, %v1924
    %v1926 = vpop.f32.mrf.mxu0
    %v1927 = vadd.f32 %v1798, %v1926
    %1928 = vmatmul.bf16.gmra.mxu0 %v924
    %v1929 = vpop.f32.mrf.mxu0
    %v1930 = vadd.f32 %v1801, %v1929
    %v1931 = vpop.f32.mrf.mxu0
    %v1932 = vadd.f32 %v1803, %v1931
    %1933 = vmatmul.bf16.gmra.mxu0 %v927
    %v1934 = vpop.f32.mrf.mxu0
    %v1935 = vadd.f32 %v1806, %v1934
    %v1936 = vpop.f32.mrf.mxu0
    %v1937 = vadd.f32 %v1808, %v1936
    %1938 = vdwg.mxu0
    %1939 = vmatpush.bf16.msra.mxu0 %v1676
    %1940 = vmatpush.bf16.msra.mxu0 %v1675
    %1941 = vmatpush.bf16.msra.mxu0 %v1674
    %1942 = vmatpush.bf16.msra.mxu0 %v1673
    %1943 = vmatpush.bf16.msra.mxu0 %v1672
    %1944 = vmatpush.bf16.msra.mxu0 %v1671
    %1945 = vmatpush.bf16.msra.mxu0 %v1670
    %1946 = vmatpush.bf16.msra.mxu0 %v1669
    %1947 = vmatmul.bf16.gmra.mxu0 %v859
    %v1948 = vpop.f32.mrf.mxu0
    %v1949 = vadd.f32 %v1820, %v1948
    %v1950 = vpop.f32.mrf.mxu0
    %v1951 = vadd.f32 %v1822, %v1950
    %1952 = vmatmul.bf16.gmra.mxu0 %v862
    %v1953 = vpop.f32.mrf.mxu0
    %v1954 = vadd.f32 %v1825, %v1953
    %v1955 = vpop.f32.mrf.mxu0
    %v1956 = vadd.f32 %v1827, %v1955
    %1957 = vmatmul.bf16.gmra.mxu0 %v865
    %v1958 = vpop.f32.mrf.mxu0
    %v1959 = vadd.f32 %v1830, %v1958
    %v1960 = vpop.f32.mrf.mxu0
    %v1961 = vadd.f32 %v1832, %v1960
    %1962 = vmatmul.bf16.gmra.mxu0 %v868
    %v1963 = vpop.f32.mrf.mxu0
    %v1964 = vadd.f32 %v1835, %v1963
    %v1965 = vpop.f32.mrf.mxu0
    %v1966 = vadd.f32 %v1837, %v1965
    %1967 = vmatmul.bf16.gmra.mxu0 %v871
    %v1968 = vpop.f32.mrf.mxu0
    %v1969 = vadd.f32 %v1840, %v1968
    %v1970 = vpop.f32.mrf.mxu0
    %v1971 = vadd.f32 %v1842, %v1970
    %1972 = vmatmul.bf16.gmra.mxu0 %v874
    %v1973 = vpop.f32.mrf.mxu0
    %v1974 = vadd.f32 %v1845, %v1973
    %v1975 = vpop.f32.mrf.mxu0
    %v1976 = vadd.f32 %v1847, %v1975
    %1977 = vmatmul.bf16.gmra.mxu0 %v877
    %v1978 = vpop.f32.mrf.mxu0
    %v1979 = vadd.f32 %v1850, %v1978
    %v1980 = vpop.f32.mrf.mxu0
    %v1981 = vadd.f32 %v1852, %v1980
    %1982 = vmatmul.bf16.gmra.mxu0 %v880
    %v1983 = vpop.f32.mrf.mxu0
    %v1984 = vadd.f32 %v1855, %v1983
    %v1985 = vpop.f32.mrf.mxu0
    %v1986 = vadd.f32 %v1857, %v1985
    %1987 = vmatmul.bf16.gmra.mxu0 %v883
    %v1988 = vpop.f32.mrf.mxu0
    %v1989 = vadd.f32 %v1860, %v1988
    %v1990 = vpop.f32.mrf.mxu0
    %v1991 = vadd.f32 %v1862, %v1990
    %1992 = vmatmul.bf16.gmra.mxu0 %v886
    %v1993 = vpop.f32.mrf.mxu0
    %v1994 = vadd.f32 %v1865, %v1993
    %v1995 = vpop.f32.mrf.mxu0
    %v1996 = vadd.f32 %v1867, %v1995
    %1997 = vmatmul.bf16.gmra.mxu0 %v889
    %v1998 = vpop.f32.mrf.mxu0
    %v1999 = vadd.f32 %v1870, %v1998
    %v2000 = vpop.f32.mrf.mxu0
    %v2001 = vadd.f32 %v1872, %v2000
    %2002 = vmatmul.bf16.gmra.mxu0 %v892
    %v2003 = vpop.f32.mrf.mxu0
    %v2004 = vadd.f32 %v1875, %v2003
    %v2005 = vpop.f32.mrf.mxu0
    %v2006 = vadd.f32 %v1877, %v2005
    %2007 = vmatmul.bf16.gmra.mxu0 %v895
    %v2008 = vpop.f32.mrf.mxu0
    %v2009 = vadd.f32 %v1880, %v2008
    %v2010 = vpop.f32.mrf.mxu0
    %v2011 = vadd.f32 %v1882, %v2010
    %2012 = vmatmul.bf16.gmra.mxu0 %v898
    %v2013 = vpop.f32.mrf.mxu0
    %v2014 = vadd.f32 %v1885, %v2013
    %v2015 = vpop.f32.mrf.mxu0
    %v2016 = vadd.f32 %v1887, %v2015
    %2017 = vmatmul.bf16.gmra.mxu0 %v901
    %v2018 = vpop.f32.mrf.mxu0
    %v2019 = vadd.f32 %v1890, %v2018
    %v2020 = vpop.f32.mrf.mxu0
    %v2021 = vadd.f32 %v1892, %v2020
    %2022 = vmatmul.bf16.gmra.mxu0 %v904
    %v2023 = vpop.f32.mrf.mxu0
    %v2024 = vadd.f32 %v1895, %v2023
    %v2025 = vpop.f32.mrf.mxu0
    %v2026 = vadd.f32 %v1897, %v2025
    %2027 = vmatmul.bf16.gmra.mxu0 %v907
    %v2028 = vpop.f32.mrf.mxu0
    %v2029 = vadd.f32 %v1900, %v2028
    %v2030 = vpop.f32.mrf.mxu0
    %v2031 = vadd.f32 %v1902, %v2030
    %2032 = vmatmul.bf16.gmra.mxu0 %v910
    %v2033 = vpop.f32.mrf.mxu0
    %v2034 = vadd.f32 %v1905, %v2033
    %v2035 = vpop.f32.mrf.mxu0
    %v2036 = vadd.f32 %v1907, %v2035
    %2037 = vmatmul.bf16.gmra.mxu0 %v913
    %v2038 = vpop.f32.mrf.mxu0
    %v2039 = vadd.f32 %v1910, %v2038
    %v2040 = vpop.f32.mrf.mxu0
    %v2041 = vadd.f32 %v1912, %v2040
    %2042 = vmatmul.bf16.gmra.mxu0 %v916
    %v2043 = vpop.f32.mrf.mxu0
    %v2044 = vadd.f32 %v1915, %v2043
    %v2045 = vpop.f32.mrf.mxu0
    %v2046 = vadd.f32 %v1917, %v2045
    %2047 = vmatmul.bf16.gmra.mxu0 %v919
    %v2048 = vpop.f32.mrf.mxu0
    %v2049 = vadd.f32 %v1920, %v2048
    %v2050 = vpop.f32.mrf.mxu0
    %v2051 = vadd.f32 %v1922, %v2050
    %2052 = vmatmul.bf16.gmra.mxu0 %v922
    %v2053 = vpop.f32.mrf.mxu0
    %v2054 = vadd.f32 %v1925, %v2053
    %v2055 = vpop.f32.mrf.mxu0
    %v2056 = vadd.f32 %v1927, %v2055
    %2057 = vmatmul.bf16.gmra.mxu0 %v925
    %v2058 = vpop.f32.mrf.mxu0
    %v2059 = vadd.f32 %v1930, %v2058
    %v2060 = vpop.f32.mrf.mxu0
    %v2061 = vadd.f32 %v1932, %v2060
    %2062 = vmatmul.bf16.gmra.mxu0 %v928
    %v2063 = vpop.f32.mrf.mxu0
    %v2064 = vadd.f32 %v1935, %v2063
    %v2065 = vpop.f32.mrf.mxu0
    %v2066 = vadd.f32 %v1937, %v2065
    %2067 = vdwg.mxu0
    %v2068 = vmax.f32 %v1949, 0.0
    %v2069 = vmax.f32 %v1951, 0.0
    %v2070 = vmax.f32 %v1954, 0.0
    %v2071 = vmax.f32 %v1956, 0.0
    %v2072 = vmax.f32 %v1959, 0.0
    %v2073 = vmax.f32 %v1961, 0.0
    %v2074 = vmax.f32 %v1964, 0.0
    %v2075 = vmax.f32 %v1966, 0.0
    %v2076 = vmax.f32 %v1969, 0.0
    %v2077 = vmax.f32 %v1971, 0.0
    %v2078 = vmax.f32 %v1974, 0.0
    %v2079 = vmax.f32 %v1976, 0.0
    %v2080 = vmax.f32 %v1979, 0.0
    %v2081 = vmax.f32 %v1981, 0.0
    %v2082 = vmax.f32 %v1984, 0.0
    %v2083 = vmax.f32 %v1986, 0.0
    %v2084 = vmax.f32 %v1989, 0.0
    %v2085 = vmax.f32 %v1991, 0.0
    %v2086 = vmax.f32 %v1994, 0.0
    %v2087 = vmax.f32 %v1996, 0.0
    %v2088 = vmax.f32 %v1999, 0.0
    %v2089 = vmax.f32 %v2001, 0.0
    %v2090 = vmax.f32 %v2004, 0.0
    %v2091 = vmax.f32 %v2006, 0.0
    %v2092 = vmax.f32 %v2009, 0.0
    %v2093 = vmax.f32 %v2011, 0.0
    %v2094 = vmax.f32 %v2014, 0.0
    %v2095 = vmax.f32 %v2016, 0.0
    %v2096 = vmax.f32 %v2019, 0.0
    %v2097 = vmax.f32 %v2021, 0.0
    %v2098 = vmax.f32 %v2024, 0.0
    %v2099 = vmax.f32 %v2026, 0.0
    %v2100 = vmax.f32 %v2029, 0.0
    %v2101 = vmax.f32 %v2031, 0.0
    %v2102 = vmax.f32 %v2034, 0.0
    %v2103 = vmax.f32 %v2036, 0.0
    %v2104 = vmax.f32 %v2039, 0.0
    %v2105 = vmax.f32 %v2041, 0.0
    %v2106 = vmax.f32 %v2044, 0.0
    %v2107 = vmax.f32 %v2046, 0.0
    %v2108 = vmax.f32 %v2049, 0.0
    %v2109 = vmax.f32 %v2051, 0.0
    %v2110 = vmax.f32 %v2054, 0.0
    %v2111 = vmax.f32 %v2056, 0.0
    %v2112 = vmax.f32 %v2059, 0.0
    %v2113 = vmax.f32 %v2061, 0.0
    %v2114 = vmax.f32 %v2064, 0.0
    %v2115 = vmax.f32 %v2066, 0.0
    %v2116 = vpack.c.bf16 %v2069, %v2068
    %v2117 = vpack.c.bf16 %v2071, %v2070
    %v2118 = vpack.c.bf16 %v2073, %v2072
    %v2119 = vpack.c.bf16 %v2075, %v2074
    %v2120 = vpack.c.bf16 %v2077, %v2076
    %v2121 = vpack.c.bf16 %v2079, %v2078
    %v2122 = vpack.c.bf16 %v2081, %v2080
    %v2123 = vpack.c.bf16 %v2083, %v2082
    %v2124 = vpack.c.bf16 %v2085, %v2084
    %v2125 = vpack.c.bf16 %v2087, %v2086
    %v2126 = vpack.c.bf16 %v2089, %v2088
    %v2127 = vpack.c.bf16 %v2091, %v2090
    %v2128 = vpack.c.bf16 %v2093, %v2092
    %v2129 = vpack.c.bf16 %v2095, %v2094
    %v2130 = vpack.c.bf16 %v2097, %v2096
    %v2131 = vpack.c.bf16 %v2099, %v2098
    %v2132 = vpack.c.bf16 %v2101, %v2100
    %v2133 = vpack.c.bf16 %v2103, %v2102
    %v2134 = vpack.c.bf16 %v2105, %v2104
    %v2135 = vpack.c.bf16 %v2107, %v2106
    %v2136 = vpack.c.bf16 %v2109, %v2108
    %v2137 = vpack.c.bf16 %v2111, %v2110
    %v2138 = vpack.c.bf16 %v2113, %v2112
    %v2139 = vpack.c.bf16 %v2115, %v2114
    %v2140 = vld [vmem:[#allocation10] sm:$0xf]
    %v2141 = vld [vmem:[#allocation10 + $0x4] sm:$0xf]
    %v2142 = vld [vmem:[#allocation10 + $0x8] sm:$0xf]
    %v2143 = vld [vmem:[#allocation10 + $0xc] sm:$0xf]
    %v2144 = vld [vmem:[#allocation10 + $0x10] sm:$0xf]
    %v2145 = vld [vmem:[#allocation10 + $0x14] sm:$0xf]
    %v2146 = vld [vmem:[#allocation10 + $0x18] sm:$0xf]
    %v2147 = vld [vmem:[#allocation10 + $0x1c] sm:$0xf]
    %v2148 = vld [vmem:[#allocation10 + $0x20] sm:$0xf]
    %v2149 = vld [vmem:[#allocation10 + $0x24] sm:$0xf]
    %v2150 = vld [vmem:[#allocation10 + $0x28] sm:$0xf]
    %v2151 = vld [vmem:[#allocation10 + $0x2c] sm:$0xf]
    %v2152 = vld [vmem:[#allocation10 + $0x30] sm:$0xf]
    %v2153 = vld [vmem:[#allocation10 + $0x34] sm:$0xf]
    %v2154 = vld [vmem:[#allocation10 + $0x38] sm:$0xf]
    %v2155 = vld [vmem:[#allocation10 + $0x3c] sm:$0xf]
    %v2172 = vunpack.c.l.b16 %v2140
    %v2173 = vunpack.c.l.b16 %v2141
    %v2174 = vunpack.c.l.b16 %v2142
    %v2175 = vunpack.c.l.b16 %v2143
    %v2176 = vunpack.c.l.b16 %v2144
    %v2177 = vunpack.c.l.b16 %v2145
    %v2178 = vunpack.c.l.b16 %v2146
    %v2179 = vunpack.c.l.b16 %v2147
    %v2180 = vunpack.c.l.b16 %v2148
    %v2181 = vunpack.c.l.b16 %v2149
    %v2182 = vunpack.c.l.b16 %v2150
    %v2183 = vunpack.c.l.b16 %v2151
    %v2184 = vunpack.c.l.b16 %v2152
    %v2185 = vunpack.c.l.b16 %v2153
    %v2186 = vunpack.c.l.b16 %v2154
    %v2187 = vunpack.c.l.b16 %v2155
    %v2188 = vpack.c.b16 %v2173, %v2172
    %v2189 = vpack.c.b16 %v2175, %v2174
    %v2190 = vpack.c.b16 %v2177, %v2176
    %v2191 = vpack.c.b16 %v2179, %v2178
    %v2192 = vpack.c.b16 %v2181, %v2180
    %v2193 = vpack.c.b16 %v2183, %v2182
    %v2194 = vpack.c.b16 %v2185, %v2184
    %v2195 = vpack.c.b16 %v2187, %v2186
    %2204 = vmatpush.bf16.msra.mxu0 %v2195
    %2205 = vmatpush.bf16.msra.mxu0 %v2194
    %2206 = vmatpush.bf16.msra.mxu0 %v2193
    %2207 = vmatpush.bf16.msra.mxu0 %v2192
    %2208 = vmatpush.bf16.msra.mxu0 %v2191
    %2209 = vmatpush.bf16.msra.mxu0 %v2190
    %2210 = vmatpush.bf16.msra.mxu0 %v2189
    %2211 = vmatpush.bf16.msra.mxu0 %v2188
    %2212 = vmatmul.bf16.gmra.mxu0 %v2116
    %v2213 = vpop.f32.mrf.mxu0
    %v2214 = vadd.f32 0.0, %v2213
    %v2215 = vpop.f32.mrf.mxu0
    %v2216 = vadd.f32 0.0, %v2215
    %2217 = vmatmul.bf16.gmra.mxu0 %v2117
    %v2218 = vpop.f32.mrf.mxu0
    %v2219 = vadd.f32 0.0, %v2218
    %v2220 = vpop.f32.mrf.mxu0
    %v2221 = vadd.f32 0.0, %v2220
    %2222 = vmatmul.bf16.gmra.mxu0 %v2118
    %v2223 = vpop.f32.mrf.mxu0
    %v2224 = vadd.f32 0.0, %v2223
    %v2225 = vpop.f32.mrf.mxu0
    %v2226 = vadd.f32 0.0, %v2225
    %2227 = vmatmul.bf16.gmra.mxu0 %v2119
    %v2228 = vpop.f32.mrf.mxu0
    %v2229 = vadd.f32 0.0, %v2228
    %v2230 = vpop.f32.mrf.mxu0
    %v2231 = vadd.f32 0.0, %v2230
    %2232 = vmatmul.bf16.gmra.mxu0 %v2120
    %v2233 = vpop.f32.mrf.mxu0
    %v2234 = vadd.f32 0.0, %v2233
    %v2235 = vpop.f32.mrf.mxu0
    %v2236 = vadd.f32 0.0, %v2235
    %2237 = vmatmul.bf16.gmra.mxu0 %v2121
    %v2238 = vpop.f32.mrf.mxu0
    %v2239 = vadd.f32 0.0, %v2238
    %v2240 = vpop.f32.mrf.mxu0
    %v2241 = vadd.f32 0.0, %v2240
    %2242 = vmatmul.bf16.gmra.mxu0 %v2122
    %v2243 = vpop.f32.mrf.mxu0
    %v2244 = vadd.f32 0.0, %v2243
    %v2245 = vpop.f32.mrf.mxu0
    %v2246 = vadd.f32 0.0, %v2245
    %2247 = vmatmul.bf16.gmra.mxu0 %v2123
    %v2248 = vpop.f32.mrf.mxu0
    %v2249 = vadd.f32 0.0, %v2248
    %v2250 = vpop.f32.mrf.mxu0
    %v2251 = vadd.f32 0.0, %v2250
    %2252 = vmatmul.bf16.gmra.mxu0 %v2124
    %v2253 = vpop.f32.mrf.mxu0
    %v2254 = vadd.f32 0.0, %v2253
    %v2255 = vpop.f32.mrf.mxu0
    %v2256 = vadd.f32 0.0, %v2255
    %2257 = vmatmul.bf16.gmra.mxu0 %v2125
    %v2258 = vpop.f32.mrf.mxu0
    %v2259 = vadd.f32 0.0, %v2258
    %v2260 = vpop.f32.mrf.mxu0
    %v2261 = vadd.f32 0.0, %v2260
    %2262 = vmatmul.bf16.gmra.mxu0 %v2126
    %v2263 = vpop.f32.mrf.mxu0
    %v2264 = vadd.f32 0.0, %v2263
    %v2265 = vpop.f32.mrf.mxu0
    %v2266 = vadd.f32 0.0, %v2265
    %2267 = vmatmul.bf16.gmra.mxu0 %v2127
    %v2268 = vpop.f32.mrf.mxu0
    %v2269 = vadd.f32 0.0, %v2268
    %v2270 = vpop.f32.mrf.mxu0
    %v2271 = vadd.f32 0.0, %v2270
    %2272 = vmatmul.bf16.gmra.mxu0 %v2128
    %v2273 = vpop.f32.mrf.mxu0
    %v2274 = vadd.f32 0.0, %v2273
    %v2275 = vpop.f32.mrf.mxu0
    %v2276 = vadd.f32 0.0, %v2275
    %2277 = vmatmul.bf16.gmra.mxu0 %v2129
    %v2278 = vpop.f32.mrf.mxu0
    %v2279 = vadd.f32 0.0, %v2278
    %v2280 = vpop.f32.mrf.mxu0
    %v2281 = vadd.f32 0.0, %v2280
    %2282 = vmatmul.bf16.gmra.mxu0 %v2130
    %v2283 = vpop.f32.mrf.mxu0
    %v2284 = vadd.f32 0.0, %v2283
    %v2285 = vpop.f32.mrf.mxu0
    %v2286 = vadd.f32 0.0, %v2285
    %2287 = vmatmul.bf16.gmra.mxu0 %v2131
    %v2288 = vpop.f32.mrf.mxu0
    %v2289 = vadd.f32 0.0, %v2288
    %v2290 = vpop.f32.mrf.mxu0
    %v2291 = vadd.f32 0.0, %v2290
    %2292 = vmatmul.bf16.gmra.mxu0 %v2132
    %v2293 = vpop.f32.mrf.mxu0
    %v2294 = vadd.f32 0.0, %v2293
    %v2295 = vpop.f32.mrf.mxu0
    %v2296 = vadd.f32 0.0, %v2295
    %2297 = vmatmul.bf16.gmra.mxu0 %v2133
    %v2298 = vpop.f32.mrf.mxu0
    %v2299 = vadd.f32 0.0, %v2298
    %v2300 = vpop.f32.mrf.mxu0
    %v2301 = vadd.f32 0.0, %v2300
    %2302 = vmatmul.bf16.gmra.mxu0 %v2134
    %v2303 = vpop.f32.mrf.mxu0
    %v2304 = vadd.f32 0.0, %v2303
    %v2305 = vpop.f32.mrf.mxu0
    %v2306 = vadd.f32 0.0, %v2305
    %2307 = vmatmul.bf16.gmra.mxu0 %v2135
    %v2308 = vpop.f32.mrf.mxu0
    %v2309 = vadd.f32 0.0, %v2308
    %v2310 = vpop.f32.mrf.mxu0
    %v2311 = vadd.f32 0.0, %v2310
    %2312 = vmatmul.bf16.gmra.mxu0 %v2136
    %v2313 = vpop.f32.mrf.mxu0
    %v2314 = vadd.f32 0.0, %v2313
    %v2315 = vpop.f32.mrf.mxu0
    %v2316 = vadd.f32 0.0, %v2315
    %2317 = vmatmul.bf16.gmra.mxu0 %v2137
    %v2318 = vpop.f32.mrf.mxu0
    %v2319 = vadd.f32 0.0, %v2318
    %v2320 = vpop.f32.mrf.mxu0
    %v2321 = vadd.f32 0.0, %v2320
    %2322 = vmatmul.bf16.gmra.mxu0 %v2138
    %v2323 = vpop.f32.mrf.mxu0
    %v2324 = vadd.f32 0.0, %v2323
    %v2325 = vpop.f32.mrf.mxu0
    %v2326 = vadd.f32 0.0, %v2325
    %2327 = vmatmul.bf16.gmra.mxu0 %v2139
    %v2328 = vpop.f32.mrf.mxu0
    %v2329 = vadd.f32 0.0, %v2328
    %v2330 = vpop.f32.mrf.mxu0
    %v2331 = vadd.f32 0.0, %v2330
    %2332 = vdwg.mxu0
    %v2333 = vpack.c.bf16 %v2216, %v2214
    %v2334 = vpack.c.bf16 %v2221, %v2219
    %v2335 = vpack.c.bf16 %v2226, %v2224
    %v2336 = vpack.c.bf16 %v2231, %v2229
    %v2337 = vpack.c.bf16 %v2236, %v2234
    %v2338 = vpack.c.bf16 %v2241, %v2239
    %v2339 = vpack.c.bf16 %v2246, %v2244
    %v2340 = vpack.c.bf16 %v2251, %v2249
    %v2341 = vpack.c.bf16 %v2256, %v2254
    %v2342 = vpack.c.bf16 %v2261, %v2259
    %v2343 = vpack.c.bf16 %v2266, %v2264
    %v2344 = vpack.c.bf16 %v2271, %v2269
    %v2345 = vpack.c.bf16 %v2276, %v2274
    %v2346 = vpack.c.bf16 %v2281, %v2279
    %v2347 = vpack.c.bf16 %v2286, %v2284
    %v2348 = vpack.c.bf16 %v2291, %v2289
    %v2349 = vpack.c.bf16 %v2296, %v2294
    %v2350 = vpack.c.bf16 %v2301, %v2299
    %v2351 = vpack.c.bf16 %v2306, %v2304
    %v2352 = vpack.c.bf16 %v2311, %v2309
    %v2353 = vpack.c.bf16 %v2316, %v2314
    %v2354 = vpack.c.bf16 %v2321, %v2319
    %v2355 = vpack.c.bf16 %v2326, %v2324
    %v2356 = vpack.c.bf16 %v2331, %v2329
    %v2357 = vld [vmem:[%s7] sm:$0x1]
    %v2359 = vperm.slane %v2357, 0
    %2361 = vmatpush.bf16.msra.mxu0 %v2340
    %2362 = vmatpush.bf16.msra.mxu0 %v2339
    %2363 = vmatpush.bf16.msra.mxu0 %v2338
    %2364 = vmatpush.bf16.msra.mxu0 %v2337
    %2365 = vmatpush.bf16.msra.mxu0 %v2336
    %2366 = vmatpush.bf16.msra.mxu0 %v2335
    %2367 = vmatpush.bf16.msra.mxu0 %v2334
    %2368 = vmatpush.bf16.msra.mxu0 %v2333
    %2369 = vmatmul.bf16.gmra.mxu0 %v857
    %v2370 = vpop.f32.mrf.mxu0
    %v2371 = vadd.f32 %v2359, %v2370
    %v2372 = vpop.f32.mrf.mxu0
    %v2373 = vadd.f32 %v2359, %v2372
    %2374 = vmatmul.bf16.gmra.mxu0 %v860
    %v2375 = vpop.f32.mrf.mxu0
    %v2376 = vadd.f32 %v2359, %v2375
    %v2377 = vpop.f32.mrf.mxu0
    %v2378 = vadd.f32 %v2359, %v2377
    %2379 = vmatmul.bf16.gmra.mxu0 %v863
    %v2380 = vpop.f32.mrf.mxu0
    %v2381 = vadd.f32 %v2359, %v2380
    %v2382 = vpop.f32.mrf.mxu0
    %v2383 = vadd.f32 %v2359, %v2382
    %2384 = vmatmul.bf16.gmra.mxu0 %v866
    %v2385 = vpop.f32.mrf.mxu0
    %v2386 = vadd.f32 %v2359, %v2385
    %v2387 = vpop.f32.mrf.mxu0
    %v2388 = vadd.f32 %v2359, %v2387
    %2389 = vmatmul.bf16.gmra.mxu0 %v869
    %v2390 = vpop.f32.mrf.mxu0
    %v2391 = vadd.f32 %v2359, %v2390
    %v2392 = vpop.f32.mrf.mxu0
    %v2393 = vadd.f32 %v2359, %v2392
    %2394 = vmatmul.bf16.gmra.mxu0 %v872
    %v2395 = vpop.f32.mrf.mxu0
    %v2396 = vadd.f32 %v2359, %v2395
    %v2397 = vpop.f32.mrf.mxu0
    %v2398 = vadd.f32 %v2359, %v2397
    %2399 = vmatmul.bf16.gmra.mxu0 %v875
    %v2400 = vpop.f32.mrf.mxu0
    %v2401 = vadd.f32 %v2359, %v2400
    %v2402 = vpop.f32.mrf.mxu0
    %v2403 = vadd.f32 %v2359, %v2402
    %2404 = vmatmul.bf16.gmra.mxu0 %v878
    %v2405 = vpop.f32.mrf.mxu0
    %v2406 = vadd.f32 %v2359, %v2405
    %v2407 = vpop.f32.mrf.mxu0
    %v2408 = vadd.f32 %v2359, %v2407
    %2409 = vmatmul.bf16.gmra.mxu0 %v881
    %v2410 = vpop.f32.mrf.mxu0
    %v2411 = vadd.f32 %v2359, %v2410
    %v2412 = vpop.f32.mrf.mxu0
    %v2413 = vadd.f32 %v2359, %v2412
    %2414 = vmatmul.bf16.gmra.mxu0 %v884
    %v2415 = vpop.f32.mrf.mxu0
    %v2416 = vadd.f32 %v2359, %v2415
    %v2417 = vpop.f32.mrf.mxu0
    %v2418 = vadd.f32 %v2359, %v2417
    %2419 = vmatmul.bf16.gmra.mxu0 %v887
    %v2420 = vpop.f32.mrf.mxu0
    %v2421 = vadd.f32 %v2359, %v2420
    %v2422 = vpop.f32.mrf.mxu0
    %v2423 = vadd.f32 %v2359, %v2422
    %2424 = vmatmul.bf16.gmra.mxu0 %v890
    %v2425 = vpop.f32.mrf.mxu0
    %v2426 = vadd.f32 %v2359, %v2425
    %v2427 = vpop.f32.mrf.mxu0
    %v2428 = vadd.f32 %v2359, %v2427
    %2429 = vmatmul.bf16.gmra.mxu0 %v893
    %v2430 = vpop.f32.mrf.mxu0
    %v2431 = vadd.f32 %v2359, %v2430
    %v2432 = vpop.f32.mrf.mxu0
    %v2433 = vadd.f32 %v2359, %v2432
    %2434 = vmatmul.bf16.gmra.mxu0 %v896
    %v2435 = vpop.f32.mrf.mxu0
    %v2436 = vadd.f32 %v2359, %v2435
    %v2437 = vpop.f32.mrf.mxu0
    %v2438 = vadd.f32 %v2359, %v2437
    %2439 = vmatmul.bf16.gmra.mxu0 %v899
    %v2440 = vpop.f32.mrf.mxu0
    %v2441 = vadd.f32 %v2359, %v2440
    %v2442 = vpop.f32.mrf.mxu0
    %v2443 = vadd.f32 %v2359, %v2442
    %2444 = vmatmul.bf16.gmra.mxu0 %v902
    %v2445 = vpop.f32.mrf.mxu0
    %v2446 = vadd.f32 %v2359, %v2445
    %v2447 = vpop.f32.mrf.mxu0
    %v2448 = vadd.f32 %v2359, %v2447
    %2449 = vmatmul.bf16.gmra.mxu0 %v905
    %v2450 = vpop.f32.mrf.mxu0
    %v2451 = vadd.f32 %v2359, %v2450
    %v2452 = vpop.f32.mrf.mxu0
    %v2453 = vadd.f32 %v2359, %v2452
    %2454 = vmatmul.bf16.gmra.mxu0 %v908
    %v2455 = vpop.f32.mrf.mxu0
    %v2456 = vadd.f32 %v2359, %v2455
    %v2457 = vpop.f32.mrf.mxu0
    %v2458 = vadd.f32 %v2359, %v2457
    %2459 = vmatmul.bf16.gmra.mxu0 %v911
    %v2460 = vpop.f32.mrf.mxu0
    %v2461 = vadd.f32 %v2359, %v2460
    %v2462 = vpop.f32.mrf.mxu0
    %v2463 = vadd.f32 %v2359, %v2462
    %2464 = vmatmul.bf16.gmra.mxu0 %v914
    %v2465 = vpop.f32.mrf.mxu0
    %v2466 = vadd.f32 %v2359, %v2465
    %v2467 = vpop.f32.mrf.mxu0
    %v2468 = vadd.f32 %v2359, %v2467
    %2469 = vmatmul.bf16.gmra.mxu0 %v917
    %v2470 = vpop.f32.mrf.mxu0
    %v2471 = vadd.f32 %v2359, %v2470
    %v2472 = vpop.f32.mrf.mxu0
    %v2473 = vadd.f32 %v2359, %v2472
    %2474 = vmatmul.bf16.gmra.mxu0 %v920
    %v2475 = vpop.f32.mrf.mxu0
    %v2476 = vadd.f32 %v2359, %v2475
    %v2477 = vpop.f32.mrf.mxu0
    %v2478 = vadd.f32 %v2359, %v2477
    %2479 = vmatmul.bf16.gmra.mxu0 %v923
    %v2480 = vpop.f32.mrf.mxu0
    %v2481 = vadd.f32 %v2359, %v2480
    %v2482 = vpop.f32.mrf.mxu0
    %v2483 = vadd.f32 %v2359, %v2482
    %2484 = vmatmul.bf16.gmra.mxu0 %v926
    %v2485 = vpop.f32.mrf.mxu0
    %v2486 = vadd.f32 %v2359, %v2485
    %v2487 = vpop.f32.mrf.mxu0
    %v2488 = vadd.f32 %v2359, %v2487
    %2489 = vdwg.mxu0
    %2490 = vmatpush.bf16.msra.mxu0 %v2348
    %2491 = vmatpush.bf16.msra.mxu0 %v2347
    %2492 = vmatpush.bf16.msra.mxu0 %v2346
    %2493 = vmatpush.bf16.msra.mxu0 %v2345
    %2494 = vmatpush.bf16.msra.mxu0 %v2344
    %2495 = vmatpush.bf16.msra.mxu0 %v2343
    %2496 = vmatpush.bf16.msra.mxu0 %v2342
    %2497 = vmatpush.bf16.msra.mxu0 %v2341
    %2498 = vmatmul.bf16.gmra.mxu0 %v858
    %v2499 = vpop.f32.mrf.mxu0
    %v2500 = vadd.f32 %v2371, %v2499
    %v2501 = vpop.f32.mrf.mxu0
    %v2502 = vadd.f32 %v2373, %v2501
    %2503 = vmatmul.bf16.gmra.mxu0 %v861
    %v2504 = vpop.f32.mrf.mxu0
    %v2505 = vadd.f32 %v2376, %v2504
    %v2506 = vpop.f32.mrf.mxu0
    %v2507 = vadd.f32 %v2378, %v2506
    %2508 = vmatmul.bf16.gmra.mxu0 %v864
    %v2509 = vpop.f32.mrf.mxu0
    %v2510 = vadd.f32 %v2381, %v2509
    %v2511 = vpop.f32.mrf.mxu0
    %v2512 = vadd.f32 %v2383, %v2511
    %2513 = vmatmul.bf16.gmra.mxu0 %v867
    %v2514 = vpop.f32.mrf.mxu0
    %v2515 = vadd.f32 %v2386, %v2514
    %v2516 = vpop.f32.mrf.mxu0
    %v2517 = vadd.f32 %v2388, %v2516
    %2518 = vmatmul.bf16.gmra.mxu0 %v870
    %v2519 = vpop.f32.mrf.mxu0
    %v2520 = vadd.f32 %v2391, %v2519
    %v2521 = vpop.f32.mrf.mxu0
    %v2522 = vadd.f32 %v2393, %v2521
    %2523 = vmatmul.bf16.gmra.mxu0 %v873
    %v2524 = vpop.f32.mrf.mxu0
    %v2525 = vadd.f32 %v2396, %v2524
    %v2526 = vpop.f32.mrf.mxu0
    %v2527 = vadd.f32 %v2398, %v2526
    %2528 = vmatmul.bf16.gmra.mxu0 %v876
    %v2529 = vpop.f32.mrf.mxu0
    %v2530 = vadd.f32 %v2401, %v2529
    %v2531 = vpop.f32.mrf.mxu0
    %v2532 = vadd.f32 %v2403, %v2531
    %2533 = vmatmul.bf16.gmra.mxu0 %v879
    %v2534 = vpop.f32.mrf.mxu0
    %v2535 = vadd.f32 %v2406, %v2534
    %v2536 = vpop.f32.mrf.mxu0
    %v2537 = vadd.f32 %v2408, %v2536
    %2538 = vmatmul.bf16.gmra.mxu0 %v882
    %v2539 = vpop.f32.mrf.mxu0
    %v2540 = vadd.f32 %v2411, %v2539
    %v2541 = vpop.f32.mrf.mxu0
    %v2542 = vadd.f32 %v2413, %v2541
    %2543 = vmatmul.bf16.gmra.mxu0 %v885
    %v2544 = vpop.f32.mrf.mxu0
    %v2545 = vadd.f32 %v2416, %v2544
    %v2546 = vpop.f32.mrf.mxu0
    %v2547 = vadd.f32 %v2418, %v2546
    %2548 = vmatmul.bf16.gmra.mxu0 %v888
    %v2549 = vpop.f32.mrf.mxu0
    %v2550 = vadd.f32 %v2421, %v2549
    %v2551 = vpop.f32.mrf.mxu0
    %v2552 = vadd.f32 %v2423, %v2551
    %2553 = vmatmul.bf16.gmra.mxu0 %v891
    %v2554 = vpop.f32.mrf.mxu0
    %v2555 = vadd.f32 %v2426, %v2554
    %v2556 = vpop.f32.mrf.mxu0
    %v2557 = vadd.f32 %v2428, %v2556
    %2558 = vmatmul.bf16.gmra.mxu0 %v894
    %v2559 = vpop.f32.mrf.mxu0
    %v2560 = vadd.f32 %v2431, %v2559
    %v2561 = vpop.f32.mrf.mxu0
    %v2562 = vadd.f32 %v2433, %v2561
    %2563 = vmatmul.bf16.gmra.mxu0 %v897
    %v2564 = vpop.f32.mrf.mxu0
    %v2565 = vadd.f32 %v2436, %v2564
    %v2566 = vpop.f32.mrf.mxu0
    %v2567 = vadd.f32 %v2438, %v2566
    %2568 = vmatmul.bf16.gmra.mxu0 %v900
    %v2569 = vpop.f32.mrf.mxu0
    %v2570 = vadd.f32 %v2441, %v2569
    %v2571 = vpop.f32.mrf.mxu0
    %v2572 = vadd.f32 %v2443, %v2571
    %2573 = vmatmul.bf16.gmra.mxu0 %v903
    %v2574 = vpop.f32.mrf.mxu0
    %v2575 = vadd.f32 %v2446, %v2574
    %v2576 = vpop.f32.mrf.mxu0
    %v2577 = vadd.f32 %v2448, %v2576
    %2578 = vmatmul.bf16.gmra.mxu0 %v906
    %v2579 = vpop.f32.mrf.mxu0
    %v2580 = vadd.f32 %v2451, %v2579
    %v2581 = vpop.f32.mrf.mxu0
    %v2582 = vadd.f32 %v2453, %v2581
    %2583 = vmatmul.bf16.gmra.mxu0 %v909
    %v2584 = vpop.f32.mrf.mxu0
    %v2585 = vadd.f32 %v2456, %v2584
    %v2586 = vpop.f32.mrf.mxu0
    %v2587 = vadd.f32 %v2458, %v2586
    %2588 = vmatmul.bf16.gmra.mxu0 %v912
    %v2589 = vpop.f32.mrf.mxu0
    %v2590 = vadd.f32 %v2461, %v2589
    %v2591 = vpop.f32.mrf.mxu0
    %v2592 = vadd.f32 %v2463, %v2591
    %2593 = vmatmul.bf16.gmra.mxu0 %v915
    %v2594 = vpop.f32.mrf.mxu0
    %v2595 = vadd.f32 %v2466, %v2594
    %v2596 = vpop.f32.mrf.mxu0
    %v2597 = vadd.f32 %v2468, %v2596
    %2598 = vmatmul.bf16.gmra.mxu0 %v918
    %v2599 = vpop.f32.mrf.mxu0
    %v2600 = vadd.f32 %v2471, %v2599
    %v2601 = vpop.f32.mrf.mxu0
    %v2602 = vadd.f32 %v2473, %v2601
    %2603 = vmatmul.bf16.gmra.mxu0 %v921
    %v2604 = vpop.f32.mrf.mxu0
    %v2605 = vadd.f32 %v2476, %v2604
    %v2606 = vpop.f32.mrf.mxu0
    %v2607 = vadd.f32 %v2478, %v2606
    %2608 = vmatmul.bf16.gmra.mxu0 %v924
    %v2609 = vpop.f32.mrf.mxu0
    %v2610 = vadd.f32 %v2481, %v2609
    %v2611 = vpop.f32.mrf.mxu0
    %v2612 = vadd.f32 %v2483, %v2611
    %2613 = vmatmul.bf16.gmra.mxu0 %v927
    %v2614 = vpop.f32.mrf.mxu0
    %v2615 = vadd.f32 %v2486, %v2614
    %v2616 = vpop.f32.mrf.mxu0
    %v2617 = vadd.f32 %v2488, %v2616
    %2618 = vdwg.mxu0
    %2619 = vmatpush.bf16.msra.mxu0 %v2356
    %2620 = vmatpush.bf16.msra.mxu0 %v2355
    %2621 = vmatpush.bf16.msra.mxu0 %v2354
    %2622 = vmatpush.bf16.msra.mxu0 %v2353
    %2623 = vmatpush.bf16.msra.mxu0 %v2352
    %2624 = vmatpush.bf16.msra.mxu0 %v2351
    %2625 = vmatpush.bf16.msra.mxu0 %v2350
    %2626 = vmatpush.bf16.msra.mxu0 %v2349
    %2627 = vmatmul.bf16.gmra.mxu0 %v859
    %v2628 = vpop.f32.mrf.mxu0
    %v2629 = vadd.f32 %v2500, %v2628
    %v2630 = vpop.f32.mrf.mxu0
    %v2631 = vadd.f32 %v2502, %v2630
    %2632 = vmatmul.bf16.gmra.mxu0 %v862
    %v2633 = vpop.f32.mrf.mxu0
    %v2634 = vadd.f32 %v2505, %v2633
    %v2635 = vpop.f32.mrf.mxu0
    %v2636 = vadd.f32 %v2507, %v2635
    %2637 = vmatmul.bf16.gmra.mxu0 %v865
    %v2638 = vpop.f32.mrf.mxu0
    %v2639 = vadd.f32 %v2510, %v2638
    %v2640 = vpop.f32.mrf.mxu0
    %v2641 = vadd.f32 %v2512, %v2640
    %2642 = vmatmul.bf16.gmra.mxu0 %v868
    %v2643 = vpop.f32.mrf.mxu0
    %v2644 = vadd.f32 %v2515, %v2643
    %v2645 = vpop.f32.mrf.mxu0
    %v2646 = vadd.f32 %v2517, %v2645
    %2647 = vmatmul.bf16.gmra.mxu0 %v871
    %v2648 = vpop.f32.mrf.mxu0
    %v2649 = vadd.f32 %v2520, %v2648
    %v2650 = vpop.f32.mrf.mxu0
    %v2651 = vadd.f32 %v2522, %v2650
    %2652 = vmatmul.bf16.gmra.mxu0 %v874
    %v2653 = vpop.f32.mrf.mxu0
    %v2654 = vadd.f32 %v2525, %v2653
    %v2655 = vpop.f32.mrf.mxu0
    %v2656 = vadd.f32 %v2527, %v2655
    %2657 = vmatmul.bf16.gmra.mxu0 %v877
    %v2658 = vpop.f32.mrf.mxu0
    %v2659 = vadd.f32 %v2530, %v2658
    %v2660 = vpop.f32.mrf.mxu0
    %v2661 = vadd.f32 %v2532, %v2660
    %2662 = vmatmul.bf16.gmra.mxu0 %v880
    %v2663 = vpop.f32.mrf.mxu0
    %v2664 = vadd.f32 %v2535, %v2663
    %v2665 = vpop.f32.mrf.mxu0
    %v2666 = vadd.f32 %v2537, %v2665
    %2667 = vmatmul.bf16.gmra.mxu0 %v883
    %v2668 = vpop.f32.mrf.mxu0
    %v2669 = vadd.f32 %v2540, %v2668
    %v2670 = vpop.f32.mrf.mxu0
    %v2671 = vadd.f32 %v2542, %v2670
    %2672 = vmatmul.bf16.gmra.mxu0 %v886
    %v2673 = vpop.f32.mrf.mxu0
    %v2674 = vadd.f32 %v2545, %v2673
    %v2675 = vpop.f32.mrf.mxu0
    %v2676 = vadd.f32 %v2547, %v2675
    %2677 = vmatmul.bf16.gmra.mxu0 %v889
    %v2678 = vpop.f32.mrf.mxu0
    %v2679 = vadd.f32 %v2550, %v2678
    %v2680 = vpop.f32.mrf.mxu0
    %v2681 = vadd.f32 %v2552, %v2680
    %2682 = vmatmul.bf16.gmra.mxu0 %v892
    %v2683 = vpop.f32.mrf.mxu0
    %v2684 = vadd.f32 %v2555, %v2683
    %v2685 = vpop.f32.mrf.mxu0
    %v2686 = vadd.f32 %v2557, %v2685
    %2687 = vmatmul.bf16.gmra.mxu0 %v895
    %v2688 = vpop.f32.mrf.mxu0
    %v2689 = vadd.f32 %v2560, %v2688
    %v2690 = vpop.f32.mrf.mxu0
    %v2691 = vadd.f32 %v2562, %v2690
    %2692 = vmatmul.bf16.gmra.mxu0 %v898
    %v2693 = vpop.f32.mrf.mxu0
    %v2694 = vadd.f32 %v2565, %v2693
    %v2695 = vpop.f32.mrf.mxu0
    %v2696 = vadd.f32 %v2567, %v2695
    %2697 = vmatmul.bf16.gmra.mxu0 %v901
    %v2698 = vpop.f32.mrf.mxu0
    %v2699 = vadd.f32 %v2570, %v2698
    %v2700 = vpop.f32.mrf.mxu0
    %v2701 = vadd.f32 %v2572, %v2700
    %2702 = vmatmul.bf16.gmra.mxu0 %v904
    %v2703 = vpop.f32.mrf.mxu0
    %v2704 = vadd.f32 %v2575, %v2703
    %v2705 = vpop.f32.mrf.mxu0
    %v2706 = vadd.f32 %v2577, %v2705
    %2707 = vmatmul.bf16.gmra.mxu0 %v907
    %v2708 = vpop.f32.mrf.mxu0
    %v2709 = vadd.f32 %v2580, %v2708
    %v2710 = vpop.f32.mrf.mxu0
    %v2711 = vadd.f32 %v2582, %v2710
    %2712 = vmatmul.bf16.gmra.mxu0 %v910
    %v2713 = vpop.f32.mrf.mxu0
    %v2714 = vadd.f32 %v2585, %v2713
    %v2715 = vpop.f32.mrf.mxu0
    %v2716 = vadd.f32 %v2587, %v2715
    %2717 = vmatmul.bf16.gmra.mxu0 %v913
    %v2718 = vpop.f32.mrf.mxu0
    %v2719 = vadd.f32 %v2590, %v2718
    %v2720 = vpop.f32.mrf.mxu0
    %v2721 = vadd.f32 %v2592, %v2720
    %2722 = vmatmul.bf16.gmra.mxu0 %v916
    %v2723 = vpop.f32.mrf.mxu0
    %v2724 = vadd.f32 %v2595, %v2723
    %v2725 = vpop.f32.mrf.mxu0
    %v2726 = vadd.f32 %v2597, %v2725
    %2727 = vmatmul.bf16.gmra.mxu0 %v919
    %v2728 = vpop.f32.mrf.mxu0
    %v2729 = vadd.f32 %v2600, %v2728
    %v2730 = vpop.f32.mrf.mxu0
    %v2731 = vadd.f32 %v2602, %v2730
    %2732 = vmatmul.bf16.gmra.mxu0 %v922
    %v2733 = vpop.f32.mrf.mxu0
    %v2734 = vadd.f32 %v2605, %v2733
    %v2735 = vpop.f32.mrf.mxu0
    %v2736 = vadd.f32 %v2607, %v2735
    %2737 = vmatmul.bf16.gmra.mxu0 %v925
    %v2738 = vpop.f32.mrf.mxu0
    %v2739 = vadd.f32 %v2610, %v2738
    %v2740 = vpop.f32.mrf.mxu0
    %v2741 = vadd.f32 %v2612, %v2740
    %2742 = vmatmul.bf16.gmra.mxu0 %v928
    %v2743 = vpop.f32.mrf.mxu0
    %v2744 = vadd.f32 %v2615, %v2743
    %v2745 = vpop.f32.mrf.mxu0
    %v2746 = vadd.f32 %v2617, %v2745
    %2747 = vdwg.mxu0
    %v2748 = vlaneseq
    %v2749 = vand.u32 %v2748, 127
    %vm2750 = vcmp.lt.s32.totalorder %v2749, 8
    %v2751 = vsel %vm2750, %v2629, -inf
    %v2752 = vsel %vm2750, %v2631, -inf
    %v2753 = vsel %vm2750, %v2634, -inf
    %v2754 = vsel %vm2750, %v2636, -inf
    %v2755 = vsel %vm2750, %v2639, -inf
    %v2756 = vsel %vm2750, %v2641, -inf
    %v2757 = vsel %vm2750, %v2644, -inf
    %v2758 = vsel %vm2750, %v2646, -inf
    %v2759 = vsel %vm2750, %v2649, -inf
    %v2760 = vsel %vm2750, %v2651, -inf
    %v2761 = vsel %vm2750, %v2654, -inf
    %v2762 = vsel %vm2750, %v2656, -inf
    %v2763 = vsel %vm2750, %v2659, -inf
    %v2764 = vsel %vm2750, %v2661, -inf
    %v2765 = vsel %vm2750, %v2664, -inf
    %v2766 = vsel %vm2750, %v2666, -inf
    %v2767 = vsel %vm2750, %v2669, -inf
    %v2768 = vsel %vm2750, %v2671, -inf
    %v2769 = vsel %vm2750, %v2674, -inf
    %v2770 = vsel %vm2750, %v2676, -inf
    %v2771 = vsel %vm2750, %v2679, -inf
    %v2772 = vsel %vm2750, %v2681, -inf
    %v2773 = vsel %vm2750, %v2684, -inf
    %v2774 = vsel %vm2750, %v2686, -inf
    %v2775 = vsel %vm2750, %v2689, -inf
    %v2776 = vsel %vm2750, %v2691, -inf
    %v2777 = vsel %vm2750, %v2694, -inf
    %v2778 = vsel %vm2750, %v2696, -inf
    %v2779 = vsel %vm2750, %v2699, -inf
    %v2780 = vsel %vm2750, %v2701, -inf
    %v2781 = vsel %vm2750, %v2704, -inf
    %v2782 = vsel %vm2750, %v2706, -inf
    %v2783 = vsel %vm2750, %v2709, -inf
    %v2784 = vsel %vm2750, %v2711, -inf
    %v2785 = vsel %vm2750, %v2714, -inf
    %v2786 = vsel %vm2750, %v2716, -inf
    %v2787 = vsel %vm2750, %v2719, -inf
    %v2788 = vsel %vm2750, %v2721, -inf
    %v2789 = vsel %vm2750, %v2724, -inf
    %v2790 = vsel %vm2750, %v2726, -inf
    %v2791 = vsel %vm2750, %v2729, -inf
    %v2792 = vsel %vm2750, %v2731, -inf
    %v2793 = vsel %vm2750, %v2734, -inf
    %v2794 = vsel %vm2750, %v2736, -inf
    %v2795 = vsel %vm2750, %v2739, -inf
    %v2796 = vsel %vm2750, %v2741, -inf
    %v2797 = vsel %vm2750, %v2744, -inf
    %v2798 = vsel %vm2750, %v2746, -inf
    %2799 = vmax.xlane.f32.xlu0 %v2751
    %v2800 = vpop.xlane.xlu0 %2799
    %2801 = vmax.xlane.f32.xlu0 %v2752
    %v2802 = vpop.xlane.xlu0 %2801
    %2803 = vmax.xlane.f32.xlu0 %v2753
    %v2804 = vpop.xlane.xlu0 %2803
    %2805 = vmax.xlane.f32.xlu0 %v2754
    %v2806 = vpop.xlane.xlu0 %2805
    %2807 = vmax.xlane.f32.xlu0 %v2755
    %v2808 = vpop.xlane.xlu0 %2807
    %2809 = vmax.xlane.f32.xlu0 %v2756
    %v2810 = vpop.xlane.xlu0 %2809
    %2811 = vmax.xlane.f32.xlu0 %v2757
    %v2812 = vpop.xlane.xlu0 %2811
    %2813 = vmax.xlane.f32.xlu0 %v2758
    %v2814 = vpop.xlane.xlu0 %2813
    %2815 = vmax.xlane.f32.xlu0 %v2759
    %v2816 = vpop.xlane.xlu0 %2815
    %2817 = vmax.xlane.f32.xlu0 %v2760
    %v2818 = vpop.xlane.xlu0 %2817
    %2819 = vmax.xlane.f32.xlu0 %v2761
    %v2820 = vpop.xlane.xlu0 %2819
    %2821 = vmax.xlane.f32.xlu0 %v2762
    %v2822 = vpop.xlane.xlu0 %2821
    %2823 = vmax.xlane.f32.xlu0 %v2763
    %v2824 = vpop.xlane.xlu0 %2823
    %2825 = vmax.xlane.f32.xlu0 %v2764
    %v2826 = vpop.xlane.xlu0 %2825
    %2827 = vmax.xlane.f32.xlu0 %v2765
    %v2828 = vpop.xlane.xlu0 %2827
    %2829 = vmax.xlane.f32.xlu0 %v2766
    %v2830 = vpop.xlane.xlu0 %2829
    %2831 = vmax.xlane.f32.xlu0 %v2767
    %v2832 = vpop.xlane.xlu0 %2831
    %2833 = vmax.xlane.f32.xlu0 %v2768
    %v2834 = vpop.xlane.xlu0 %2833
    %2835 = vmax.xlane.f32.xlu0 %v2769
    %v2836 = vpop.xlane.xlu0 %2835
    %2837 = vmax.xlane.f32.xlu0 %v2770
    %v2838 = vpop.xlane.xlu0 %2837
    %2839 = vmax.xlane.f32.xlu0 %v2771
    %v2840 = vpop.xlane.xlu0 %2839
    %2841 = vmax.xlane.f32.xlu0 %v2772
    %v2842 = vpop.xlane.xlu0 %2841
    %2843 = vmax.xlane.f32.xlu0 %v2773
    %v2844 = vpop.xlane.xlu0 %2843
    %2845 = vmax.xlane.f32.xlu0 %v2774
    %v2846 = vpop.xlane.xlu0 %2845
    %2847 = vmax.xlane.f32.xlu0 %v2775
    %v2848 = vpop.xlane.xlu0 %2847
    %2849 = vmax.xlane.f32.xlu0 %v2776
    %v2850 = vpop.xlane.xlu0 %2849
    %2851 = vmax.xlane.f32.xlu0 %v2777
    %v2852 = vpop.xlane.xlu0 %2851
    %2853 = vmax.xlane.f32.xlu0 %v2778
    %v2854 = vpop.xlane.xlu0 %2853
    %2855 = vmax.xlane.f32.xlu0 %v2779
    %v2856 = vpop.xlane.xlu0 %2855
    %2857 = vmax.xlane.f32.xlu0 %v2780
    %v2858 = vpop.xlane.xlu0 %2857
    %2859 = vmax.xlane.f32.xlu0 %v2781
    %v2860 = vpop.xlane.xlu0 %2859
    %2861 = vmax.xlane.f32.xlu0 %v2782
    %v2862 = vpop.xlane.xlu0 %2861
    %2863 = vmax.xlane.f32.xlu0 %v2783
    %v2864 = vpop.xlane.xlu0 %2863
    %2865 = vmax.xlane.f32.xlu0 %v2784
    %v2866 = vpop.xlane.xlu0 %2865
    %2867 = vmax.xlane.f32.xlu0 %v2785
    %v2868 = vpop.xlane.xlu0 %2867
    %2869 = vmax.xlane.f32.xlu0 %v2786
    %v2870 = vpop.xlane.xlu0 %2869
    %2871 = vmax.xlane.f32.xlu0 %v2787
    %v2872 = vpop.xlane.xlu0 %2871
    %2873 = vmax.xlane.f32.xlu0 %v2788
    %v2874 = vpop.xlane.xlu0 %2873
    %2875 = vmax.xlane.f32.xlu0 %v2789
    %v2876 = vpop.xlane.xlu0 %2875
    %2877 = vmax.xlane.f32.xlu0 %v2790
    %v2878 = vpop.xlane.xlu0 %2877
    %2879 = vmax.xlane.f32.xlu0 %v2791
    %v2880 = vpop.xlane.xlu0 %2879
    %2881 = vmax.xlane.f32.xlu0 %v2792
    %v2882 = vpop.xlane.xlu0 %2881
    %2883 = vmax.xlane.f32.xlu0 %v2793
    %v2884 = vpop.xlane.xlu0 %2883
    %2885 = vmax.xlane.f32.xlu0 %v2794
    %v2886 = vpop.xlane.xlu0 %2885
    %2887 = vmax.xlane.f32.xlu0 %v2795
    %v2888 = vpop.xlane.xlu0 %2887
    %2889 = vmax.xlane.f32.xlu0 %v2796
    %v2890 = vpop.xlane.xlu0 %2889
    %2891 = vmax.xlane.f32.xlu0 %v2797
    %v2892 = vpop.xlane.xlu0 %2891
    %2893 = vmax.xlane.f32.xlu0 %v2798
    %v2894 = vpop.xlane.xlu0 %2893
    %v2895 = vsub.f32 %v2751, %v2800
    %v2896 = vsub.f32 %v2752, %v2802
    %v2897 = vsub.f32 %v2753, %v2804
    %v2898 = vsub.f32 %v2754, %v2806
    %v2899 = vsub.f32 %v2755, %v2808
    %v2900 = vsub.f32 %v2756, %v2810
    %v2901 = vsub.f32 %v2757, %v2812
    %v2902 = vsub.f32 %v2758, %v2814
    %v2903 = vsub.f32 %v2759, %v2816
    %v2904 = vsub.f32 %v2760, %v2818
    %v2905 = vsub.f32 %v2761, %v2820
    %v2906 = vsub.f32 %v2762, %v2822
    %v2907 = vsub.f32 %v2763, %v2824
    %v2908 = vsub.f32 %v2764, %v2826
    %v2909 = vsub.f32 %v2765, %v2828
    %v2910 = vsub.f32 %v2766, %v2830
    %v2911 = vsub.f32 %v2767, %v2832
    %v2912 = vsub.f32 %v2768, %v2834
    %v2913 = vsub.f32 %v2769, %v2836
    %v2914 = vsub.f32 %v2770, %v2838
    %v2915 = vsub.f32 %v2771, %v2840
    %v2916 = vsub.f32 %v2772, %v2842
    %v2917 = vsub.f32 %v2773, %v2844
    %v2918 = vsub.f32 %v2774, %v2846
    %v2919 = vsub.f32 %v2775, %v2848
    %v2920 = vsub.f32 %v2776, %v2850
    %v2921 = vsub.f32 %v2777, %v2852
    %v2922 = vsub.f32 %v2778, %v2854
    %v2923 = vsub.f32 %v2779, %v2856
    %v2924 = vsub.f32 %v2780, %v2858
    %v2925 = vsub.f32 %v2781, %v2860
    %v2926 = vsub.f32 %v2782, %v2862
    %v2927 = vsub.f32 %v2783, %v2864
    %v2928 = vsub.f32 %v2784, %v2866
    %v2929 = vsub.f32 %v2785, %v2868
    %v2930 = vsub.f32 %v2786, %v2870
    %v2931 = vsub.f32 %v2787, %v2872
    %v2932 = vsub.f32 %v2788, %v2874
    %v2933 = vsub.f32 %v2789, %v2876
    %v2934 = vsub.f32 %v2790, %v2878
    %v2935 = vsub.f32 %v2791, %v2880
    %v2936 = vsub.f32 %v2792, %v2882
    %v2937 = vsub.f32 %v2793, %v2884
    %v2938 = vsub.f32 %v2794, %v2886
    %v2939 = vsub.f32 %v2795, %v2888
    %v2940 = vsub.f32 %v2796, %v2890
    %v2941 = vsub.f32 %v2797, %v2892
    %v2942 = vsub.f32 %v2798, %v2894
    %v2943 = vmul.f32 %v2895, 1.442695
    %v2944 = vpow.pop %v2943
    %v2945 = vmul.f32 %v2896, 1.442695
    %v2946 = vpow.pop %v2945
    %v2947 = vmul.f32 %v2897, 1.442695
    %v2948 = vpow.pop %v2947
    %v2949 = vmul.f32 %v2898, 1.442695
    %v2950 = vpow.pop %v2949
    %v2951 = vmul.f32 %v2899, 1.442695
    %v2952 = vpow.pop %v2951
    %v2953 = vmul.f32 %v2900, 1.442695
    %v2954 = vpow.pop %v2953
    %v2955 = vmul.f32 %v2901, 1.442695
    %v2956 = vpow.pop %v2955
    %v2957 = vmul.f32 %v2902, 1.442695
    %v2958 = vpow.pop %v2957
    %v2959 = vmul.f32 %v2903, 1.442695
    %v2960 = vpow.pop %v2959
    %v2961 = vmul.f32 %v2904, 1.442695
    %v2962 = vpow.pop %v2961
    %v2963 = vmul.f32 %v2905, 1.442695
    %v2964 = vpow.pop %v2963
    %v2965 = vmul.f32 %v2906, 1.442695
    %v2966 = vpow.pop %v2965
    %v2967 = vmul.f32 %v2907, 1.442695
    %v2968 = vpow.pop %v2967
    %v2969 = vmul.f32 %v2908, 1.442695
    %v2970 = vpow.pop %v2969
    %v2971 = vmul.f32 %v2909, 1.442695
    %v2972 = vpow.pop %v2971
    %v2973 = vmul.f32 %v2910, 1.442695
    %v2974 = vpow.pop %v2973
    %v2975 = vmul.f32 %v2911, 1.442695
    %v2976 = vpow.pop %v2975
    %v2977 = vmul.f32 %v2912, 1.442695
    %v2978 = vpow.pop %v2977
    %v2979 = vmul.f32 %v2913, 1.442695
    %v2980 = vpow.pop %v2979
    %v2981 = vmul.f32 %v2914, 1.442695
    %v2982 = vpow.pop %v2981
    %v2983 = vmul.f32 %v2915, 1.442695
    %v2984 = vpow.pop %v2983
    %v2985 = vmul.f32 %v2916, 1.442695
    %v2986 = vpow.pop %v2985
    %v2987 = vmul.f32 %v2917, 1.442695
    %v2988 = vpow.pop %v2987
    %v2989 = vmul.f32 %v2918, 1.442695
    %v2990 = vpow.pop %v2989
    %v2991 = vmul.f32 %v2919, 1.442695
    %v2992 = vpow.pop %v2991
    %v2993 = vmul.f32 %v2920, 1.442695
    %v2994 = vpow.pop %v2993
    %v2995 = vmul.f32 %v2921, 1.442695
    %v2996 = vpow.pop %v2995
    %v2997 = vmul.f32 %v2922, 1.442695
    %v2998 = vpow.pop %v2997
    %v2999 = vmul.f32 %v2923, 1.442695
    %v3000 = vpow.pop %v2999
    %v3001 = vmul.f32 %v2924, 1.442695
    %v3002 = vpow.pop %v3001
    %v3003 = vmul.f32 %v2925, 1.442695
    %v3004 = vpow.pop %v3003
    %v3005 = vmul.f32 %v2926, 1.442695
    %v3006 = vpow.pop %v3005
    %v3007 = vmul.f32 %v2927, 1.442695
    %v3008 = vpow.pop %v3007
    %v3009 = vmul.f32 %v2928, 1.442695
    %v3010 = vpow.pop %v3009
    %v3011 = vmul.f32 %v2929, 1.442695
    %v3012 = vpow.pop %v3011
    %v3013 = vmul.f32 %v2930, 1.442695
    %v3014 = vpow.pop %v3013
    %v3015 = vmul.f32 %v2931, 1.442695
    %v3016 = vpow.pop %v3015
    %v3017 = vmul.f32 %v2932, 1.442695
    %v3018 = vpow.pop %v3017
    %v3019 = vmul.f32 %v2933, 1.442695
    %v3020 = vpow.pop %v3019
    %v3021 = vmul.f32 %v2934, 1.442695
    %v3022 = vpow.pop %v3021
    %v3023 = vmul.f32 %v2935, 1.442695
    %v3024 = vpow.pop %v3023
    %v3025 = vmul.f32 %v2936, 1.442695
    %v3026 = vpow.pop %v3025
    %v3027 = vmul.f32 %v2937, 1.442695
    %v3028 = vpow.pop %v3027
    %v3029 = vmul.f32 %v2938, 1.442695
    %v3030 = vpow.pop %v3029
    %v3031 = vmul.f32 %v2939, 1.442695
    %v3032 = vpow.pop %v3031
    %v3033 = vmul.f32 %v2940, 1.442695
    %v3034 = vpow.pop %v3033
    %v3035 = vmul.f32 %v2941, 1.442695
    %v3036 = vpow.pop %v3035
    %v3037 = vmul.f32 %v2942, 1.442695
    %v3038 = vpow.pop %v3037
    %3039 = vadd.xlane.f32.xlu0 %v2944
    %v3040 = vpop.xlane.xlu0 %3039
    %3041 = vadd.xlane.f32.xlu0 %v2946
    %v3042 = vpop.xlane.xlu0 %3041
    %3043 = vadd.xlane.f32.xlu0 %v2948
    %v3044 = vpop.xlane.xlu0 %3043
    %3045 = vadd.xlane.f32.xlu0 %v2950
    %v3046 = vpop.xlane.xlu0 %3045
    %3047 = vadd.xlane.f32.xlu0 %v2952
    %v3048 = vpop.xlane.xlu0 %3047
    %3049 = vadd.xlane.f32.xlu0 %v2954
    %v3050 = vpop.xlane.xlu0 %3049
    %3051 = vadd.xlane.f32.xlu0 %v2956
    %v3052 = vpop.xlane.xlu0 %3051
    %3053 = vadd.xlane.f32.xlu0 %v2958
    %v3054 = vpop.xlane.xlu0 %3053
    %3055 = vadd.xlane.f32.xlu0 %v2960
    %v3056 = vpop.xlane.xlu0 %3055
    %3057 = vadd.xlane.f32.xlu0 %v2962
    %v3058 = vpop.xlane.xlu0 %3057
    %3059 = vadd.xlane.f32.xlu0 %v2964
    %v3060 = vpop.xlane.xlu0 %3059
    %3061 = vadd.xlane.f32.xlu0 %v2966
    %v3062 = vpop.xlane.xlu0 %3061
    %3063 = vadd.xlane.f32.xlu0 %v2968
    %v3064 = vpop.xlane.xlu0 %3063
    %3065 = vadd.xlane.f32.xlu0 %v2970
    %v3066 = vpop.xlane.xlu0 %3065
    %3067 = vadd.xlane.f32.xlu0 %v2972
    %v3068 = vpop.xlane.xlu0 %3067
    %3069 = vadd.xlane.f32.xlu0 %v2974
    %v3070 = vpop.xlane.xlu0 %3069
    %3071 = vadd.xlane.f32.xlu0 %v2976
    %v3072 = vpop.xlane.xlu0 %3071
    %3073 = vadd.xlane.f32.xlu0 %v2978
    %v3074 = vpop.xlane.xlu0 %3073
    %3075 = vadd.xlane.f32.xlu0 %v2980
    %v3076 = vpop.xlane.xlu0 %3075
    %3077 = vadd.xlane.f32.xlu0 %v2982
    %v3078 = vpop.xlane.xlu0 %3077
    %3079 = vadd.xlane.f32.xlu0 %v2984
    %v3080 = vpop.xlane.xlu0 %3079
    %3081 = vadd.xlane.f32.xlu0 %v2986
    %v3082 = vpop.xlane.xlu0 %3081
    %3083 = vadd.xlane.f32.xlu0 %v2988
    %v3084 = vpop.xlane.xlu0 %3083
    %3085 = vadd.xlane.f32.xlu0 %v2990
    %v3086 = vpop.xlane.xlu0 %3085
    %3087 = vadd.xlane.f32.xlu0 %v2992
    %v3088 = vpop.xlane.xlu0 %3087
    %3089 = vadd.xlane.f32.xlu0 %v2994
    %v3090 = vpop.xlane.xlu0 %3089
    %3091 = vadd.xlane.f32.xlu0 %v2996
    %v3092 = vpop.xlane.xlu0 %3091
    %3093 = vadd.xlane.f32.xlu0 %v2998
    %v3094 = vpop.xlane.xlu0 %3093
    %3095 = vadd.xlane.f32.xlu0 %v3000
    %v3096 = vpop.xlane.xlu0 %3095
    %3097 = vadd.xlane.f32.xlu0 %v3002
    %v3098 = vpop.xlane.xlu0 %3097
    %3099 = vadd.xlane.f32.xlu0 %v3004
    %v3100 = vpop.xlane.xlu0 %3099
    %3101 = vadd.xlane.f32.xlu0 %v3006
    %v3102 = vpop.xlane.xlu0 %3101
    %3103 = vadd.xlane.f32.xlu0 %v3008
    %v3104 = vpop.xlane.xlu0 %3103
    %3105 = vadd.xlane.f32.xlu0 %v3010
    %v3106 = vpop.xlane.xlu0 %3105
    %3107 = vadd.xlane.f32.xlu0 %v3012
    %v3108 = vpop.xlane.xlu0 %3107
    %3109 = vadd.xlane.f32.xlu0 %v3014
    %v3110 = vpop.xlane.xlu0 %3109
    %3111 = vadd.xlane.f32.xlu0 %v3016
    %v3112 = vpop.xlane.xlu0 %3111
    %3113 = vadd.xlane.f32.xlu0 %v3018
    %v3114 = vpop.xlane.xlu0 %3113
    %3115 = vadd.xlane.f32.xlu0 %v3020
    %v3116 = vpop.xlane.xlu0 %3115
    %3117 = vadd.xlane.f32.xlu0 %v3022
    %v3118 = vpop.xlane.xlu0 %3117
    %3119 = vadd.xlane.f32.xlu0 %v3024
    %v3120 = vpop.xlane.xlu0 %3119
    %3121 = vadd.xlane.f32.xlu0 %v3026
    %v3122 = vpop.xlane.xlu0 %3121
    %3123 = vadd.xlane.f32.xlu0 %v3028
    %v3124 = vpop.xlane.xlu0 %3123
    %3125 = vadd.xlane.f32.xlu0 %v3030
    %v3126 = vpop.xlane.xlu0 %3125
    %3127 = vadd.xlane.f32.xlu0 %v3032
    %v3128 = vpop.xlane.xlu0 %3127
    %3129 = vadd.xlane.f32.xlu0 %v3034
    %v3130 = vpop.xlane.xlu0 %3129
    %3131 = vadd.xlane.f32.xlu0 %v3036
    %v3132 = vpop.xlane.xlu0 %3131
    %3133 = vadd.xlane.f32.xlu0 %v3038
    %v3134 = vpop.xlane.xlu0 %3133
    %v3135 = vlog2.pop %v3040
    %v3136 = vmul.f32 %v3135, 0.6931472
    %v3137 = vlog2.pop %v3042
    %v3138 = vmul.f32 %v3137, 0.6931472
    %v3139 = vlog2.pop %v3044
    %v3140 = vmul.f32 %v3139, 0.6931472
    %v3141 = vlog2.pop %v3046
    %v3142 = vmul.f32 %v3141, 0.6931472
    %v3143 = vlog2.pop %v3048
    %v3144 = vmul.f32 %v3143, 0.6931472
    %v3145 = vlog2.pop %v3050
    %v3146 = vmul.f32 %v3145, 0.6931472
    %v3147 = vlog2.pop %v3052
    %v3148 = vmul.f32 %v3147, 0.6931472
    %v3149 = vlog2.pop %v3054
    %v3150 = vmul.f32 %v3149, 0.6931472
    %v3151 = vlog2.pop %v3056
    %v3152 = vmul.f32 %v3151, 0.6931472
    %v3153 = vlog2.pop %v3058
    %v3154 = vmul.f32 %v3153, 0.6931472
    %v3155 = vlog2.pop %v3060
    %v3156 = vmul.f32 %v3155, 0.6931472
    %v3157 = vlog2.pop %v3062
    %v3158 = vmul.f32 %v3157, 0.6931472
    %v3159 = vlog2.pop %v3064
    %v3160 = vmul.f32 %v3159, 0.6931472
    %v3161 = vlog2.pop %v3066
    %v3162 = vmul.f32 %v3161, 0.6931472
    %v3163 = vlog2.pop %v3068
    %v3164 = vmul.f32 %v3163, 0.6931472
    %v3165 = vlog2.pop %v3070
    %v3166 = vmul.f32 %v3165, 0.6931472
    %v3167 = vlog2.pop %v3072
    %v3168 = vmul.f32 %v3167, 0.6931472
    %v3169 = vlog2.pop %v3074
    %v3170 = vmul.f32 %v3169, 0.6931472
    %v3171 = vlog2.pop %v3076
    %v3172 = vmul.f32 %v3171, 0.6931472
    %v3173 = vlog2.pop %v3078
    %v3174 = vmul.f32 %v3173, 0.6931472
    %v3175 = vlog2.pop %v3080
    %v3176 = vmul.f32 %v3175, 0.6931472
    %v3177 = vlog2.pop %v3082
    %v3178 = vmul.f32 %v3177, 0.6931472
    %v3179 = vlog2.pop %v3084
    %v3180 = vmul.f32 %v3179, 0.6931472
    %v3181 = vlog2.pop %v3086
    %v3182 = vmul.f32 %v3181, 0.6931472
    %v3183 = vlog2.pop %v3088
    %v3184 = vmul.f32 %v3183, 0.6931472
    %v3185 = vlog2.pop %v3090
    %v3186 = vmul.f32 %v3185, 0.6931472
    %v3187 = vlog2.pop %v3092
    %v3188 = vmul.f32 %v3187, 0.6931472
    %v3189 = vlog2.pop %v3094
    %v3190 = vmul.f32 %v3189, 0.6931472
    %v3191 = vlog2.pop %v3096
    %v3192 = vmul.f32 %v3191, 0.6931472
    %v3193 = vlog2.pop %v3098
    %v3194 = vmul.f32 %v3193, 0.6931472
    %v3195 = vlog2.pop %v3100
    %v3196 = vmul.f32 %v3195, 0.6931472
    %v3197 = vlog2.pop %v3102
    %v3198 = vmul.f32 %v3197, 0.6931472
    %v3199 = vlog2.pop %v3104
    %v3200 = vmul.f32 %v3199, 0.6931472
    %v3201 = vlog2.pop %v3106
    %v3202 = vmul.f32 %v3201, 0.6931472
    %v3203 = vlog2.pop %v3108
    %v3204 = vmul.f32 %v3203, 0.6931472
    %v3205 = vlog2.pop %v3110
    %v3206 = vmul.f32 %v3205, 0.6931472
    %v3207 = vlog2.pop %v3112
    %v3208 = vmul.f32 %v3207, 0.6931472
    %v3209 = vlog2.pop %v3114
    %v3210 = vmul.f32 %v3209, 0.6931472
    %v3211 = vlog2.pop %v3116
    %v3212 = vmul.f32 %v3211, 0.6931472
    %v3213 = vlog2.pop %v3118
    %v3214 = vmul.f32 %v3213, 0.6931472
    %v3215 = vlog2.pop %v3120
    %v3216 = vmul.f32 %v3215, 0.6931472
    %v3217 = vlog2.pop %v3122
    %v3218 = vmul.f32 %v3217, 0.6931472
    %v3219 = vlog2.pop %v3124
    %v3220 = vmul.f32 %v3219, 0.6931472
    %v3221 = vlog2.pop %v3126
    %v3222 = vmul.f32 %v3221, 0.6931472
    %v3223 = vlog2.pop %v3128
    %v3224 = vmul.f32 %v3223, 0.6931472
    %v3225 = vlog2.pop %v3130
    %v3226 = vmul.f32 %v3225, 0.6931472
    %v3227 = vlog2.pop %v3132
    %v3228 = vmul.f32 %v3227, 0.6931472
    %v3229 = vlog2.pop %v3134
    %v3230 = vmul.f32 %v3229, 0.6931472
    %v3231 = vsub.f32 %v2895, %v3136
    %v3232 = vsub.f32 %v2896, %v3138
    %v3233 = vsub.f32 %v2897, %v3140
    %v3234 = vsub.f32 %v2898, %v3142
    %v3235 = vsub.f32 %v2899, %v3144
    %v3236 = vsub.f32 %v2900, %v3146
    %v3237 = vsub.f32 %v2901, %v3148
    %v3238 = vsub.f32 %v2902, %v3150
    %v3239 = vsub.f32 %v2903, %v3152
    %v3240 = vsub.f32 %v2904, %v3154
    %v3241 = vsub.f32 %v2905, %v3156
    %v3242 = vsub.f32 %v2906, %v3158
    %v3243 = vsub.f32 %v2907, %v3160
    %v3244 = vsub.f32 %v2908, %v3162
    %v3245 = vsub.f32 %v2909, %v3164
    %v3246 = vsub.f32 %v2910, %v3166
    %v3247 = vsub.f32 %v2911, %v3168
    %v3248 = vsub.f32 %v2912, %v3170
    %v3249 = vsub.f32 %v2913, %v3172
    %v3250 = vsub.f32 %v2914, %v3174
    %v3251 = vsub.f32 %v2915, %v3176
    %v3252 = vsub.f32 %v2916, %v3178
    %v3253 = vsub.f32 %v2917, %v3180
    %v3254 = vsub.f32 %v2918, %v3182
    %v3255 = vsub.f32 %v2919, %v3184
    %v3256 = vsub.f32 %v2920, %v3186
    %v3257 = vsub.f32 %v2921, %v3188
    %v3258 = vsub.f32 %v2922, %v3190
    %v3259 = vsub.f32 %v2923, %v3192
    %v3260 = vsub.f32 %v2924, %v3194
    %v3261 = vsub.f32 %v2925, %v3196
    %v3262 = vsub.f32 %v2926, %v3198
    %v3263 = vsub.f32 %v2927, %v3200
    %v3264 = vsub.f32 %v2928, %v3202
    %v3265 = vsub.f32 %v2929, %v3204
    %v3266 = vsub.f32 %v2930, %v3206
    %v3267 = vsub.f32 %v2931, %v3208
    %v3268 = vsub.f32 %v2932, %v3210
    %v3269 = vsub.f32 %v2933, %v3212
    %v3270 = vsub.f32 %v2934, %v3214
    %v3271 = vsub.f32 %v2935, %v3216
    %v3272 = vsub.f32 %v2936, %v3218
    %v3273 = vsub.f32 %v2937, %v3220
    %v3274 = vsub.f32 %v2938, %v3222
    %v3275 = vsub.f32 %v2939, %v3224
    %v3276 = vsub.f32 %v2940, %v3226
    %v3277 = vsub.f32 %v2941, %v3228
    %v3278 = vsub.f32 %v2942, %v3230
    %3279 = vst [vmem:[#allocation11] sm:$0xff] %v3231
    %3280 = vst [vmem:[#allocation11 + $0x8] sm:$0xff] %v3232
    %3281 = vst [vmem:[#allocation11 + $0x10] sm:$0xff] %v3233
    %3282 = vst [vmem:[#allocation11 + $0x18] sm:$0xff] %v3234
    %3283 = vst [vmem:[#allocation11 + $0x20] sm:$0xff] %v3235
    %3284 = vst [vmem:[#allocation11 + $0x28] sm:$0xff] %v3236
    %3285 = vst [vmem:[#allocation11 + $0x30] sm:$0xff] %v3237
    %3286 = vst [vmem:[#allocation11 + $0x38] sm:$0xff] %v3238
    %3287 = vst [vmem:[#allocation11 + $0x40] sm:$0xff] %v3239
    %3288 = vst [vmem:[#allocation11 + $0x48] sm:$0xff] %v3240
    %3289 = vst [vmem:[#allocation11 + $0x50] sm:$0xff] %v3241
    %3290 = vst [vmem:[#allocation11 + $0x58] sm:$0xff] %v3242
    %3291 = vst [vmem:[#allocation11 + $0x60] sm:$0xff] %v3243
    %3292 = vst [vmem:[#allocation11 + $0x68] sm:$0xff] %v3244
    %3293 = vst [vmem:[#allocation11 + $0x70] sm:$0xff] %v3245
    %3294 = vst [vmem:[#allocation11 + $0x78] sm:$0xff] %v3246
    %3295 = vst [vmem:[#allocation11 + $0x80] sm:$0xff] %v3247
    %3296 = vst [vmem:[#allocation11 + $0x88] sm:$0xff] %v3248
    %3297 = vst [vmem:[#allocation11 + $0x90] sm:$0xff] %v3249
    %3298 = vst [vmem:[#allocation11 + $0x98] sm:$0xff] %v3250
    %3299 = vst [vmem:[#allocation11 + $0xa0] sm:$0xff] %v3251
    %3300 = vst [vmem:[#allocation11 + $0xa8] sm:$0xff] %v3252
    %3301 = vst [vmem:[#allocation11 + $0xb0] sm:$0xff] %v3253
    %3302 = vst [vmem:[#allocation11 + $0xb8] sm:$0xff] %v3254
    %3303 = vst [vmem:[#allocation11 + $0xc0] sm:$0xff] %v3255
    %3304 = vst [vmem:[#allocation11 + $0xc8] sm:$0xff] %v3256
    %3305 = vst [vmem:[#allocation11 + $0xd0] sm:$0xff] %v3257
    %3306 = vst [vmem:[#allocation11 + $0xd8] sm:$0xff] %v3258
    %3307 = vst [vmem:[#allocation11 + $0xe0] sm:$0xff] %v3259
    %3308 = vst [vmem:[#allocation11 + $0xe8] sm:$0xff] %v3260
    %3309 = vst [vmem:[#allocation11 + $0xf0] sm:$0xff] %v3261
    %3310 = vst [vmem:[#allocation11 + $0xf8] sm:$0xff] %v3262
    %3311 = vst [vmem:[#allocation11 + $0x100] sm:$0xff] %v3263
    %3312 = vst [vmem:[#allocation11 + $0x108] sm:$0xff] %v3264
    %3313 = vst [vmem:[#allocation11 + $0x110] sm:$0xff] %v3265
    %3314 = vst [vmem:[#allocation11 + $0x118] sm:$0xff] %v3266
    %3315 = vst [vmem:[#allocation11 + $0x120] sm:$0xff] %v3267
    %3316 = vst [vmem:[#allocation11 + $0x128] sm:$0xff] %v3268
    %3317 = vst [vmem:[#allocation11 + $0x130] sm:$0xff] %v3269
    %3318 = vst [vmem:[#allocation11 + $0x138] sm:$0xff] %v3270
    %3319 = vst [vmem:[#allocation11 + $0x140] sm:$0xff] %v3271
    %3320 = vst [vmem:[#allocation11 + $0x148] sm:$0xff] %v3272
    %3321 = vst [vmem:[#allocation11 + $0x150] sm:$0xff] %v3273
    %3322 = vst [vmem:[#allocation11 + $0x158] sm:$0xff] %v3274
    %3323 = vst [vmem:[#allocation11 + $0x160] sm:$0xff] %v3275
    %3324 = vst [vmem:[#allocation11 + $0x168] sm:$0xff] %v3276
    %3325 = vst [vmem:[#allocation11 + $0x170] sm:$0xff] %v3277
    %3326 = vst [vmem:[#allocation11 + $0x178] sm:$0xff] %v3278
    // Predicated region
    $region54: #{tpu_custom_call.1} parent=1 // pred_check
      _
    $region55: #{tpu_custom_call.1} parent=1 // pred_check_branch
      %3328 = sbr.rel (0) target = $region57
    $region56: #{tpu_custom_call.1} parent=1 // pred_region
      %3330 = vsyncadd [#allocation4], 0
      %s3331 = sshll.u32 [#allocation11], 4
      %s3332 = int_to_ptr.vmem [resolvable:$true] %s3331
      %s3333 = sshll.u32 %s8, 4
      %s3334 = int_to_ptr.hbm [resolvable:$true] %s3333
      %3339 = dma.vmem_to_hbm [thread:$0]  %s3332, 6144, %s3334, [#allocation4], 128, 128, 8
    $region57: #{tpu_custom_call.1} parent=1 // pred_fallthru
      _
    // Predicated region
    $region58: #{tpu_custom_call.1} parent=1 // pred_check
      _
    $region59: #{tpu_custom_call.1} parent=1 // pred_check_branch
      %3341 = sbr.rel (0) target = $region61
    $region60: #{tpu_custom_call.1} parent=1 // pred_region
      %3343 = dma.done [#allocation4], 6144
    $region61: #{tpu_custom_call.1} parent=1 // pred_fallthru
      _
    %3344 = vsyncpa [#allocation3], 1
    %3345 = vsyncpa [#allocation6], 1
    %3346 = vsyncpa [#allocation9], 1
    %3347 = vsyncpa [#allocation4], 1

</llo_original>
